<compile_context>
chip_gen: v7x
topology: tpu7x:2x2x1
jax: 0.10.0
libtpu: 0.0.40
codegen_flags: <defaults>
</compile_context>

<pallas_src>
import functools

import jax
import jax.numpy as jnp
from jax.experimental import pallas as pl
from jax.experimental.pallas import tpu as pltpu

_LANE = 128     # vreg lane width
_SUBLANE = 8    # vreg sublane count (f32)


def _round_up(x, m):
    return ((x + m - 1) // m) * m


# ----------------------------------------------------------------------------
# Fused Pallas kernel: all LSTM layers + Linear head, single invocation.
# ----------------------------------------------------------------------------
def _lstm_classifier_kernel(*refs, num_layers, T, Bp, Hp, C):
    """refs = [x, (w_ih, w_hh, b) * num_layers, fc_w, fc_b, out, seq_scratch].

    x      : (T*Bp, Fp)   time-major, row index = t*Bp + b
    w_ih   : (Fp|Hp, 4*Hp)   gate g occupies columns [g*Hp, g*Hp + H)
    w_hh   : (Hp, 4*Hp)
    b      : (1, 4*Hp)       b_ih + b_hh, f32
    fc_w   : (Hp, C)
    fc_b   : (1, C)
    out    : (T*Bp, C)
    scratch: (T*Bp, Hp) f32  inter-layer sequence buffer (stays in VMEM)
    """
    x_ref = refs[0]
    layer_refs = refs[1:1 + 3 * num_layers]
    fc_w_ref = refs[1 + 3 * num_layers]
    fc_b_ref = refs[2 + 3 * num_layers]
    out_ref = refs[3 + 3 * num_layers]
    seq_scr = refs[4 + 3 * num_layers]

    seq = x_ref[...]                                       # (T*Bp, Fp)

    for layer in range(num_layers):
        w_ih = layer_refs[3 * layer][...]                  # (Fp|Hp, 4*Hp)
        w_hh = layer_refs[3 * layer + 1][...]              # (Hp, 4*Hp)
        bias = layer_refs[3 * layer + 2][...]              # (1, 4*Hp), f32
        wd = w_ih.dtype

        # Hoisted input projection: one matmul for all T time steps.
        xproj = jnp.dot(seq.astype(wd), w_ih,
                        preferred_element_type=jnp.float32) + bias   # (T*Bp, 4*Hp)

        h = jnp.zeros((Bp, Hp), jnp.float32)
        c = jnp.zeros((Bp, Hp), jnp.float32)

        # Statically unrolled recurrence: one (Bp, Hp) @ (Hp, 4*Hp) matmul +
        # lane-aligned gate math per step.  All slices are static & aligned.
        for t in range(T):
            gates = xproj[t * Bp:(t + 1) * Bp, :] + jnp.dot(
                h.astype(wd), w_hh, preferred_element_type=jnp.float32)  # (Bp, 4*Hp)

            i_g = jax.nn.sigmoid(gates[:, 0 * Hp:1 * Hp])
            f_g = jax.nn.sigmoid(gates[:, 1 * Hp:2 * Hp])
            g_g = jnp.tanh(gates[:, 2 * Hp:3 * Hp])
            o_g = jax.nn.sigmoid(gates[:, 3 * Hp:4 * Hp])

            c = f_g * c + i_g * g_g
            h = o_g * jnp.tanh(c)

            seq_scr[t * Bp:(t + 1) * Bp, :] = h            # aligned (Bp, Hp) store

        seq = seq_scr[...]                                 # (T*Bp, Hp), next layer in

    # Fused classifier head over all (t, b) rows at once.
    logits = jnp.dot(seq.astype(fc_w_ref.dtype), fc_w_ref[...],
                     preferred_element_type=jnp.float32) + fc_b_ref[...]
    out_ref[...] = logits                                  # single write-back


# ----------------------------------------------------------------------------
# Parameter / input layout preparation (tiny, one-time, all zero padding).
# ----------------------------------------------------------------------------
def _pack_gate_cols(w_t, H, Hp):
    """(rows, 4H) -> (rows, 4Hp); gate g's H real cols land at [g*Hp, g*Hp+H)."""
    rows = w_t.shape[0]
    out = jnp.zeros((rows, 4 * Hp), jnp.float32)
    for g in range(4):
        out = out.at[:, g * Hp:g * Hp + H].set(w_t[:, g * H:(g + 1) * H])
    return out


def _pad_rows(w, rows_p):
    rows = w.shape[0]
    if rows == rows_p:
        return w
    return jnp.zeros((rows_p,) + w.shape[1:], w.dtype).at[:rows].set(w)


def lstm_w_classifier_forward(x_bt, params, *, matmul_dtype=jnp.float32):
    """x_bt: (B, T, input_size) batch-first (like PyTorch). Returns (B, T, C).

    matmul_dtype=jnp.bfloat16 feeds the MXU with bf16 weights/activations
    (f32 accumulation, f32 gate math) - recommended for v6e/v7x at large H.
    """
    x_bt = jnp.asarray(x_bt, jnp.float32)
    B, T, F_in = x_bt.shape
    layers = params["lstm"]
    num_layers = len(layers)
    H = layers[0]["w_hh"].shape[1]          # torch w_hh: (4H, H)
    C = params["fc_w"].shape[0]

    Hp = _round_up(H, _LANE)                # lane-aligned gates / hidden state
    Fp = _round_up(F_in, _LANE)             # lane-aligned contraction dim
    Bp = _round_up(B, _SUBLANE)             # sublane-aligned batch rows
    wd = matmul_dtype

    inputs = []
    # batch-first -> time-major rows (row = t*Bp + b), zero-padded batch/feature.
    x_tm = jnp.transpose(x_bt, (1, 0, 2))                       # (T, B, F)
    x_p = jnp.zeros((T, Bp, Fp), jnp.float32).at[:, :B, :F_in].set(x_tm)
    inputs.append(x_p.reshape(T * Bp, Fp).astype(wd))

    for idx, lyr in enumerate(layers):
        w_ih_t = jnp.asarray(lyr["w_ih"], jnp.float32).T        # (F_l, 4H)
        w_hh_t = jnp.asarray(lyr["w_hh"], jnp.float32).T        # (H, 4H)
        bias = (jnp.asarray(lyr["b_ih"], jnp.float32)
                + jnp.asarray(lyr["b_hh"], jnp.float32)).reshape(1, 4 * H)
        rows_p = Fp if idx == 0 else Hp
        inputs.append(_pad_rows(_pack_gate_cols(w_ih_t, H, Hp), rows_p).astype(wd))
        inputs.append(_pad_rows(_pack_gate_cols(w_hh_t, H, Hp), Hp).astype(wd))
        inputs.append(_pack_gate_cols(bias, H, Hp))             # bias stays f32

    fc_w_t = jnp.asarray(params["fc_w"], jnp.float32).T         # (H, C)
    inputs.append(_pad_rows(fc_w_t, Hp).astype(wd))
    inputs.append(jnp.asarray(params["fc_b"], jnp.float32).reshape(1, C))

    kernel = functools.partial(_lstm_classifier_kernel,
                               num_layers=num_layers, T=T, Bp=Bp, Hp=Hp, C=C)

    logits2d = pl.pallas_call(
        kernel,
        out_shape=jax.ShapeDtypeStruct((T * Bp, C), jnp.float32),
        scratch_shapes=[pltpu.VMEM((T * Bp, Hp), jnp.float32)],
    )(*inputs)

    # (T*Bp, C) -> drop batch padding -> (B, T, C)
    return logits2d.reshape(T, Bp, C)[:, :B, :].transpose(1, 0, 2)


# ----------------------------------------------------------------------------
# Deterministic parameter init (PyTorch nn.LSTM / nn.Linear shapes).
# ----------------------------------------------------------------------------
def init_params(key, input_size, hidden_size, num_layers, num_classes):
    H = hidden_size
    bound = 1.0 / jnp.sqrt(jnp.float32(H))
    layers = []
    for layer_idx in range(num_layers):
        in_sz = input_size if layer_idx == 0 else H
        key, k1, k2, k3, k4 = jax.random.split(key, 5)
        layers.append({
            "w_ih": jax.random.uniform(k1, (4 * H, in_sz), jnp.float32, -bound, bound),
            "w_hh": jax.random.uniform(k2, (4 * H, H), jnp.float32, -bound, bound),
            "b_ih": jax.random.uniform(k3, (4 * H,), jnp.float32, -bound, bound),
            "b_hh": jax.random.uniform(k4, (4 * H,), jnp.float32, -bound, bound),
        })
    key, kw, kb = jax.random.split(key, 3)
    fc_w = jax.random.uniform(kw, (num_classes, H), jnp.float32, -bound, bound)
    fc_b = jax.random.uniform(kb, (num_classes,), jnp.float32, -bound, bound)
    return {"lstm": layers, "fc_w": fc_w, "fc_b": fc_b}


# ----------------------------------------------------------------------------
if __name__ == "__main__":
    # Shapes consistent with the module's forward:
    #   x: (batch=2, seq=8, input_size=16) -> logits: (2, 8, num_classes=5)
    batch, seq, input_size = 2, 8, 16
    hidden_size, num_layers, num_classes = 32, 2, 5

    key = jax.random.PRNGKey(0)
    key, kx = jax.random.split(key)
    x = jax.random.normal(kx, (batch, seq, input_size), jnp.float32)
    params = init_params(key, input_size, hidden_size, num_layers, num_classes)

    fwd = jax.jit(lstm_w_classifier_forward)
    logits = jax.block_until_ready(fwd(x, params))

    assert logits.shape == (batch, seq, num_classes), logits.shape
    assert logits.dtype == jnp.float32
    assert bool(jnp.all(jnp.isfinite(logits)))
    print("KERNEL_OK")
</pallas_src>

<mosaic_0001>
module attributes {stable_mosaic.version = 11 : i64} {
  func.func @_lstm_classifier_kernel(%arg0: memref<64x128xf32, #tpu.memory_space<vmem>>, %arg1: memref<128x512xf32, #tpu.memory_space<vmem>>, %arg2: memref<128x512xf32, #tpu.memory_space<vmem>>, %arg3: memref<1x512xf32, #tpu.memory_space<vmem>>, %arg4: memref<128x512xf32, #tpu.memory_space<vmem>>, %arg5: memref<128x512xf32, #tpu.memory_space<vmem>>, %arg6: memref<1x512xf32, #tpu.memory_space<vmem>>, %arg7: memref<128x5xf32, #tpu.memory_space<vmem>>, %arg8: memref<1x5xf32, #tpu.memory_space<vmem>>, %arg9: memref<64x5xf32, #tpu.memory_space<vmem>>, %arg10: memref<64x128xf32, #tpu.memory_space<vmem>>) attributes {dimension_semantics = [], scalar_prefetch = 0 : i64, scratch_operands = 1 : i64, tpu.core_type = #tpu.core_type<tc>} {
    %c0 = arith.constant 0 : index
    %c0_0 = arith.constant 0 : index
    %0 = vector.load %arg0[%c0, %c0_0] : memref<64x128xf32, #tpu.memory_space<vmem>>, vector<64x128xf32>
    %c0_1 = arith.constant 0 : index
    %c0_2 = arith.constant 0 : index
    %1 = vector.load %arg1[%c0_1, %c0_2] : memref<128x512xf32, #tpu.memory_space<vmem>>, vector<128x512xf32>
    %c0_3 = arith.constant 0 : index
    %c0_4 = arith.constant 0 : index
    %2 = vector.load %arg2[%c0_3, %c0_4] : memref<128x512xf32, #tpu.memory_space<vmem>>, vector<128x512xf32>
    %c0_5 = arith.constant 0 : index
    %c0_6 = arith.constant 0 : index
    %3 = vector.load %arg3[%c0_5, %c0_6] : memref<1x512xf32, #tpu.memory_space<vmem>>, vector<1x512xf32>
    %cst = arith.constant dense<0.000000e+00> : vector<64x512xf32>
    %4 = tpu.matmul %0, %1, %cst {dimension_numbers = #tpu.dot_dimension_numbers<[1], [0], [0], [1], [0, 0, 1, 1], [], []>} : vector<64x128xf32>, vector<128x512xf32>, vector<64x512xf32> -> vector<64x512xf32>
    %5 = vector.broadcast %3 : vector<1x512xf32> to vector<64x512xf32>
    %6 = arith.addf %4, %5 : vector<64x512xf32>
    %cst_7 = arith.constant 0.000000e+00 : f32
    %7 = vector.broadcast %cst_7 : f32 to vector<8x128xf32>
    %cst_8 = arith.constant 0.000000e+00 : f32
    %8 = vector.broadcast %cst_8 : f32 to vector<8x128xf32>
    %9 = vector.extract_strided_slice %6 {offsets = [0, 0], sizes = [8, 512], strides = [1, 1]} : vector<64x512xf32> to vector<8x512xf32>
    %cst_9 = arith.constant dense<0.000000e+00> : vector<8x512xf32>
    %10 = tpu.matmul %7, %2, %cst_9 {dimension_numbers = #tpu.dot_dimension_numbers<[1], [0], [0], [1], [0, 0, 1, 1], [], []>} : vector<8x128xf32>, vector<128x512xf32>, vector<8x512xf32> -> vector<8x512xf32>
    %11 = arith.addf %9, %10 : vector<8x512xf32>
    %12 = vector.extract_strided_slice %11 {offsets = [0, 0], sizes = [8, 128], strides = [1, 1]} : vector<8x512xf32> to vector<8x128xf32>
    %13 = arith.negf %12 : vector<8x128xf32>
    %14 = math.exp %13 : vector<8x128xf32>
    %cst_10 = arith.constant 1.000000e+00 : f32
    %15 = vector.broadcast %cst_10 : f32 to vector<8x128xf32>
    %16 = arith.addf %15, %14 : vector<8x128xf32>
    %17 = arith.divf %15, %16 : vector<8x128xf32>
    %18 = vector.extract_strided_slice %11 {offsets = [0, 128], sizes = [8, 128], strides = [1, 1]} : vector<8x512xf32> to vector<8x128xf32>
    %19 = arith.negf %18 : vector<8x128xf32>
    %20 = math.exp %19 : vector<8x128xf32>
    %cst_11 = arith.constant 1.000000e+00 : f32
    %21 = vector.broadcast %cst_11 : f32 to vector<8x128xf32>
    %22 = arith.addf %21, %20 : vector<8x128xf32>
    %23 = arith.divf %21, %22 : vector<8x128xf32>
    %24 = vector.extract_strided_slice %11 {offsets = [0, 256], sizes = [8, 128], strides = [1, 1]} : vector<8x512xf32> to vector<8x128xf32>
    %25 = math.tanh %24 : vector<8x128xf32>
    %26 = vector.extract_strided_slice %11 {offsets = [0, 384], sizes = [8, 128], strides = [1, 1]} : vector<8x512xf32> to vector<8x128xf32>
    %27 = arith.negf %26 : vector<8x128xf32>
    %28 = math.exp %27 : vector<8x128xf32>
    %cst_12 = arith.constant 1.000000e+00 : f32
    %29 = vector.broadcast %cst_12 : f32 to vector<8x128xf32>
    %30 = arith.addf %29, %28 : vector<8x128xf32>
    %31 = arith.divf %29, %30 : vector<8x128xf32>
    %32 = arith.mulf %23, %8 : vector<8x128xf32>
    %33 = arith.mulf %17, %25 : vector<8x128xf32>
    %34 = arith.addf %32, %33 : vector<8x128xf32>
    %35 = math.tanh %34 : vector<8x128xf32>
    %36 = arith.mulf %31, %35 : vector<8x128xf32>
    %c0_13 = arith.constant 0 : index
    %c0_14 = arith.constant 0 : index
    %37 = vector.load %arg10[%c0_13, %c0_14] : memref<64x128xf32, #tpu.memory_space<vmem>>, vector<8x128xf32>
    tpu.vector_store %arg10[%c0_13, %c0_14], %36 {strides = array<i32>} : memref<64x128xf32, #tpu.memory_space<vmem>>, vector<8x128xf32>,
    %38 = vector.extract_strided_slice %6 {offsets = [8, 0], sizes = [8, 512], strides = [1, 1]} : vector<64x512xf32> to vector<8x512xf32>
    %cst_15 = arith.constant dense<0.000000e+00> : vector<8x512xf32>
    %39 = tpu.matmul %36, %2, %cst_15 {dimension_numbers = #tpu.dot_dimension_numbers<[1], [0], [0], [1], [0, 0, 1, 1], [], []>} : vector<8x128xf32>, vector<128x512xf32>, vector<8x512xf32> -> vector<8x512xf32>
    %40 = arith.addf %38, %39 : vector<8x512xf32>
    %41 = vector.extract_strided_slice %40 {offsets = [0, 0], sizes = [8, 128], strides = [1, 1]} : vector<8x512xf32> to vector<8x128xf32>
    %42 = arith.negf %41 : vector<8x128xf32>
    %43 = math.exp %42 : vector<8x128xf32>
    %cst_16 = arith.constant 1.000000e+00 : f32
    %44 = vector.broadcast %cst_16 : f32 to vector<8x128xf32>
    %45 = arith.addf %44, %43 : vector<8x128xf32>
    %46 = arith.divf %44, %45 : vector<8x128xf32>
    %47 = vector.extract_strided_slice %40 {offsets = [0, 128], sizes = [8, 128], strides = [1, 1]} : vector<8x512xf32> to vector<8x128xf32>
    %48 = arith.negf %47 : vector<8x128xf32>
    %49 = math.exp %48 : vector<8x128xf32>
    %cst_17 = arith.constant 1.000000e+00 : f32
    %50 = vector.broadcast %cst_17 : f32 to vector<8x128xf32>
    %51 = arith.addf %50, %49 : vector<8x128xf32>
    %52 = arith.divf %50, %51 : vector<8x128xf32>
    %53 = vector.extract_strided_slice %40 {offsets = [0, 256], sizes = [8, 128], strides = [1, 1]} : vector<8x512xf32> to vector<8x128xf32>
    %54 = math.tanh %53 : vector<8x128xf32>
    %55 = vector.extract_strided_slice %40 {offsets = [0, 384], sizes = [8, 128], strides = [1, 1]} : vector<8x512xf32> to vector<8x128xf32>
    %56 = arith.negf %55 : vector<8x128xf32>
    %57 = math.exp %56 : vector<8x128xf32>
    %cst_18 = arith.constant 1.000000e+00 : f32
    %58 = vector.broadcast %cst_18 : f32 to vector<8x128xf32>
    %59 = arith.addf %58, %57 : vector<8x128xf32>
    %60 = arith.divf %58, %59 : vector<8x128xf32>
    %61 = arith.mulf %52, %34 : vector<8x128xf32>
    %62 = arith.mulf %46, %54 : vector<8x128xf32>
    %63 = arith.addf %61, %62 : vector<8x128xf32>
    %64 = math.tanh %63 : vector<8x128xf32>
    %65 = arith.mulf %60, %64 : vector<8x128xf32>
    %c8 = arith.constant 8 : index
    %c0_19 = arith.constant 0 : index
    %66 = vector.load %arg10[%c8, %c0_19] : memref<64x128xf32, #tpu.memory_space<vmem>>, vector<8x128xf32>
    tpu.vector_store %arg10[%c8, %c0_19], %65 {strides = array<i32>} : memref<64x128xf32, #tpu.memory_space<vmem>>, vector<8x128xf32>,
    %67 = vector.extract_strided_slice %6 {offsets = [16, 0], sizes = [8, 512], strides = [1, 1]} : vector<64x512xf32> to vector<8x512xf32>
    %cst_20 = arith.constant dense<0.000000e+00> : vector<8x512xf32>
    %68 = tpu.matmul %65, %2, %cst_20 {dimension_numbers = #tpu.dot_dimension_numbers<[1], [0], [0], [1], [0, 0, 1, 1], [], []>} : vector<8x128xf32>, vector<128x512xf32>, vector<8x512xf32> -> vector<8x512xf32>
    %69 = arith.addf %67, %68 : vector<8x512xf32>
    %70 = vector.extract_strided_slice %69 {offsets = [0, 0], sizes = [8, 128], strides = [1, 1]} : vector<8x512xf32> to vector<8x128xf32>
    %71 = arith.negf %70 : vector<8x128xf32>
    %72 = math.exp %71 : vector<8x128xf32>
    %cst_21 = arith.constant 1.000000e+00 : f32
    %73 = vector.broadcast %cst_21 : f32 to vector<8x128xf32>
    %74 = arith.addf %73, %72 : vector<8x128xf32>
    %75 = arith.divf %73, %74 : vector<8x128xf32>
    %76 = vector.extract_strided_slice %69 {offsets = [0, 128], sizes = [8, 128], strides = [1, 1]} : vector<8x512xf32> to vector<8x128xf32>
    %77 = arith.negf %76 : vector<8x128xf32>
    %78 = math.exp %77 : vector<8x128xf32>
    %cst_22 = arith.constant 1.000000e+00 : f32
    %79 = vector.broadcast %cst_22 : f32 to vector<8x128xf32>
    %80 = arith.addf %79, %78 : vector<8x128xf32>
    %81 = arith.divf %79, %80 : vector<8x128xf32>
    %82 = vector.extract_strided_slice %69 {offsets = [0, 256], sizes = [8, 128], strides = [1, 1]} : vector<8x512xf32> to vector<8x128xf32>
    %83 = math.tanh %82 : vector<8x128xf32>
    %84 = vector.extract_strided_slice %69 {offsets = [0, 384], sizes = [8, 128], strides = [1, 1]} : vector<8x512xf32> to vector<8x128xf32>
    %85 = arith.negf %84 : vector<8x128xf32>
    %86 = math.exp %85 : vector<8x128xf32>
    %cst_23 = arith.constant 1.000000e+00 : f32
    %87 = vector.broadcast %cst_23 : f32 to vector<8x128xf32>
    %88 = arith.addf %87, %86 : vector<8x128xf32>
    %89 = arith.divf %87, %88 : vector<8x128xf32>
    %90 = arith.mulf %81, %63 : vector<8x128xf32>
    %91 = arith.mulf %75, %83 : vector<8x128xf32>
    %92 = arith.addf %90, %91 : vector<8x128xf32>
    %93 = math.tanh %92 : vector<8x128xf32>
    %94 = arith.mulf %89, %93 : vector<8x128xf32>
    %c16 = arith.constant 16 : index
    %c0_24 = arith.constant 0 : index
    %95 = vector.load %arg10[%c16, %c0_24] : memref<64x128xf32, #tpu.memory_space<vmem>>, vector<8x128xf32>
    tpu.vector_store %arg10[%c16, %c0_24], %94 {strides = array<i32>} : memref<64x128xf32, #tpu.memory_space<vmem>>, vector<8x128xf32>,
    %96 = vector.extract_strided_slice %6 {offsets = [24, 0], sizes = [8, 512], strides = [1, 1]} : vector<64x512xf32> to vector<8x512xf32>
    %cst_25 = arith.constant dense<0.000000e+00> : vector<8x512xf32>
    %97 = tpu.matmul %94, %2, %cst_25 {dimension_numbers = #tpu.dot_dimension_numbers<[1], [0], [0], [1], [0, 0, 1, 1], [], []>} : vector<8x128xf32>, vector<128x512xf32>, vector<8x512xf32> -> vector<8x512xf32>
    %98 = arith.addf %96, %97 : vector<8x512xf32>
    %99 = vector.extract_strided_slice %98 {offsets = [0, 0], sizes = [8, 128], strides = [1, 1]} : vector<8x512xf32> to vector<8x128xf32>
    %100 = arith.negf %99 : vector<8x128xf32>
    %101 = math.exp %100 : vector<8x128xf32>
    %cst_26 = arith.constant 1.000000e+00 : f32
    %102 = vector.broadcast %cst_26 : f32 to vector<8x128xf32>
    %103 = arith.addf %102, %101 : vector<8x128xf32>
    %104 = arith.divf %102, %103 : vector<8x128xf32>
    %105 = vector.extract_strided_slice %98 {offsets = [0, 128], sizes = [8, 128], strides = [1, 1]} : vector<8x512xf32> to vector<8x128xf32>
    %106 = arith.negf %105 : vector<8x128xf32>
    %107 = math.exp %106 : vector<8x128xf32>
    %cst_27 = arith.constant 1.000000e+00 : f32
    %108 = vector.broadcast %cst_27 : f32 to vector<8x128xf32>
    %109 = arith.addf %108, %107 : vector<8x128xf32>
    %110 = arith.divf %108, %109 : vector<8x128xf32>
    %111 = vector.extract_strided_slice %98 {offsets = [0, 256], sizes = [8, 128], strides = [1, 1]} : vector<8x512xf32> to vector<8x128xf32>
    %112 = math.tanh %111 : vector<8x128xf32>
    %113 = vector.extract_strided_slice %98 {offsets = [0, 384], sizes = [8, 128], strides = [1, 1]} : vector<8x512xf32> to vector<8x128xf32>
    %114 = arith.negf %113 : vector<8x128xf32>
    %115 = math.exp %114 : vector<8x128xf32>
    %cst_28 = arith.constant 1.000000e+00 : f32
    %116 = vector.broadcast %cst_28 : f32 to vector<8x128xf32>
    %117 = arith.addf %116, %115 : vector<8x128xf32>
    %118 = arith.divf %116, %117 : vector<8x128xf32>
    %119 = arith.mulf %110, %92 : vector<8x128xf32>
    %120 = arith.mulf %104, %112 : vector<8x128xf32>
    %121 = arith.addf %119, %120 : vector<8x128xf32>
    %122 = math.tanh %121 : vector<8x128xf32>
    %123 = arith.mulf %118, %122 : vector<8x128xf32>
    %c24 = arith.constant 24 : index
    %c0_29 = arith.constant 0 : index
    %124 = vector.load %arg10[%c24, %c0_29] : memref<64x128xf32, #tpu.memory_space<vmem>>, vector<8x128xf32>
    tpu.vector_store %arg10[%c24, %c0_29], %123 {strides = array<i32>} : memref<64x128xf32, #tpu.memory_space<vmem>>, vector<8x128xf32>,
    %125 = vector.extract_strided_slice %6 {offsets = [32, 0], sizes = [8, 512], strides = [1, 1]} : vector<64x512xf32> to vector<8x512xf32>
    %cst_30 = arith.constant dense<0.000000e+00> : vector<8x512xf32>
    %126 = tpu.matmul %123, %2, %cst_30 {dimension_numbers = #tpu.dot_dimension_numbers<[1], [0], [0], [1], [0, 0, 1, 1], [], []>} : vector<8x128xf32>, vector<128x512xf32>, vector<8x512xf32> -> vector<8x512xf32>
    %127 = arith.addf %125, %126 : vector<8x512xf32>
    %128 = vector.extract_strided_slice %127 {offsets = [0, 0], sizes = [8, 128], strides = [1, 1]} : vector<8x512xf32> to vector<8x128xf32>
    %129 = arith.negf %128 : vector<8x128xf32>
    %130 = math.exp %129 : vector<8x128xf32>
    %cst_31 = arith.constant 1.000000e+00 : f32
    %131 = vector.broadcast %cst_31 : f32 to vector<8x128xf32>
    %132 = arith.addf %131, %130 : vector<8x128xf32>
    %133 = arith.divf %131, %132 : vector<8x128xf32>
    %134 = vector.extract_strided_slice %127 {offsets = [0, 128], sizes = [8, 128], strides = [1, 1]} : vector<8x512xf32> to vector<8x128xf32>
    %135 = arith.negf %134 : vector<8x128xf32>
    %136 = math.exp %135 : vector<8x128xf32>
    %cst_32 = arith.constant 1.000000e+00 : f32
    %137 = vector.broadcast %cst_32 : f32 to vector<8x128xf32>
    %138 = arith.addf %137, %136 : vector<8x128xf32>
    %139 = arith.divf %137, %138 : vector<8x128xf32>
    %140 = vector.extract_strided_slice %127 {offsets = [0, 256], sizes = [8, 128], strides = [1, 1]} : vector<8x512xf32> to vector<8x128xf32>
    %141 = math.tanh %140 : vector<8x128xf32>
    %142 = vector.extract_strided_slice %127 {offsets = [0, 384], sizes = [8, 128], strides = [1, 1]} : vector<8x512xf32> to vector<8x128xf32>
    %143 = arith.negf %142 : vector<8x128xf32>
    %144 = math.exp %143 : vector<8x128xf32>
    %cst_33 = arith.constant 1.000000e+00 : f32
    %145 = vector.broadcast %cst_33 : f32 to vector<8x128xf32>
    %146 = arith.addf %145, %144 : vector<8x128xf32>
    %147 = arith.divf %145, %146 : vector<8x128xf32>
    %148 = arith.mulf %139, %121 : vector<8x128xf32>
    %149 = arith.mulf %133, %141 : vector<8x128xf32>
    %150 = arith.addf %148, %149 : vector<8x128xf32>
    %151 = math.tanh %150 : vector<8x128xf32>
    %152 = arith.mulf %147, %151 : vector<8x128xf32>
    %c32 = arith.constant 32 : index
    %c0_34 = arith.constant 0 : index
    %153 = vector.load %arg10[%c32, %c0_34] : memref<64x128xf32, #tpu.memory_space<vmem>>, vector<8x128xf32>
    tpu.vector_store %arg10[%c32, %c0_34], %152 {strides = array<i32>} : memref<64x128xf32, #tpu.memory_space<vmem>>, vector<8x128xf32>,
    %154 = vector.extract_strided_slice %6 {offsets = [40, 0], sizes = [8, 512], strides = [1, 1]} : vector<64x512xf32> to vector<8x512xf32>
    %cst_35 = arith.constant dense<0.000000e+00> : vector<8x512xf32>
    %155 = tpu.matmul %152, %2, %cst_35 {dimension_numbers = #tpu.dot_dimension_numbers<[1], [0], [0], [1], [0, 0, 1, 1], [], []>} : vector<8x128xf32>, vector<128x512xf32>, vector<8x512xf32> -> vector<8x512xf32>
    %156 = arith.addf %154, %155 : vector<8x512xf32>
    %157 = vector.extract_strided_slice %156 {offsets = [0, 0], sizes = [8, 128], strides = [1, 1]} : vector<8x512xf32> to vector<8x128xf32>
    %158 = arith.negf %157 : vector<8x128xf32>
    %159 = math.exp %158 : vector<8x128xf32>
    %cst_36 = arith.constant 1.000000e+00 : f32
    %160 = vector.broadcast %cst_36 : f32 to vector<8x128xf32>
    %161 = arith.addf %160, %159 : vector<8x128xf32>
    %162 = arith.divf %160, %161 : vector<8x128xf32>
    %163 = vector.extract_strided_slice %156 {offsets = [0, 128], sizes = [8, 128], strides = [1, 1]} : vector<8x512xf32> to vector<8x128xf32>
    %164 = arith.negf %163 : vector<8x128xf32>
    %165 = math.exp %164 : vector<8x128xf32>
    %cst_37 = arith.constant 1.000000e+00 : f32
    %166 = vector.broadcast %cst_37 : f32 to vector<8x128xf32>
    %167 = arith.addf %166, %165 : vector<8x128xf32>
    %168 = arith.divf %166, %167 : vector<8x128xf32>
    %169 = vector.extract_strided_slice %156 {offsets = [0, 256], sizes = [8, 128], strides = [1, 1]} : vector<8x512xf32> to vector<8x128xf32>
    %170 = math.tanh %169 : vector<8x128xf32>
    %171 = vector.extract_strided_slice %156 {offsets = [0, 384], sizes = [8, 128], strides = [1, 1]} : vector<8x512xf32> to vector<8x128xf32>
    %172 = arith.negf %171 : vector<8x128xf32>
    %173 = math.exp %172 : vector<8x128xf32>
    %cst_38 = arith.constant 1.000000e+00 : f32
    %174 = vector.broadcast %cst_38 : f32 to vector<8x128xf32>
    %175 = arith.addf %174, %173 : vector<8x128xf32>
    %176 = arith.divf %174, %175 : vector<8x128xf32>
    %177 = arith.mulf %168, %150 : vector<8x128xf32>
    %178 = arith.mulf %162, %170 : vector<8x128xf32>
    %179 = arith.addf %177, %178 : vector<8x128xf32>
    %180 = math.tanh %179 : vector<8x128xf32>
    %181 = arith.mulf %176, %180 : vector<8x128xf32>
    %c40 = arith.constant 40 : index
    %c0_39 = arith.constant 0 : index
    %182 = vector.load %arg10[%c40, %c0_39] : memref<64x128xf32, #tpu.memory_space<vmem>>, vector<8x128xf32>
    tpu.vector_store %arg10[%c40, %c0_39], %181 {strides = array<i32>} : memref<64x128xf32, #tpu.memory_space<vmem>>, vector<8x128xf32>,
    %183 = vector.extract_strided_slice %6 {offsets = [48, 0], sizes = [8, 512], strides = [1, 1]} : vector<64x512xf32> to vector<8x512xf32>
    %cst_40 = arith.constant dense<0.000000e+00> : vector<8x512xf32>
    %184 = tpu.matmul %181, %2, %cst_40 {dimension_numbers = #tpu.dot_dimension_numbers<[1], [0], [0], [1], [0, 0, 1, 1], [], []>} : vector<8x128xf32>, vector<128x512xf32>, vector<8x512xf32> -> vector<8x512xf32>
    %185 = arith.addf %183, %184 : vector<8x512xf32>
    %186 = vector.extract_strided_slice %185 {offsets = [0, 0], sizes = [8, 128], strides = [1, 1]} : vector<8x512xf32> to vector<8x128xf32>
    %187 = arith.negf %186 : vector<8x128xf32>
    %188 = math.exp %187 : vector<8x128xf32>
    %cst_41 = arith.constant 1.000000e+00 : f32
    %189 = vector.broadcast %cst_41 : f32 to vector<8x128xf32>
    %190 = arith.addf %189, %188 : vector<8x128xf32>
    %191 = arith.divf %189, %190 : vector<8x128xf32>
    %192 = vector.extract_strided_slice %185 {offsets = [0, 128], sizes = [8, 128], strides = [1, 1]} : vector<8x512xf32> to vector<8x128xf32>
    %193 = arith.negf %192 : vector<8x128xf32>
    %194 = math.exp %193 : vector<8x128xf32>
    %cst_42 = arith.constant 1.000000e+00 : f32
    %195 = vector.broadcast %cst_42 : f32 to vector<8x128xf32>
    %196 = arith.addf %195, %194 : vector<8x128xf32>
    %197 = arith.divf %195, %196 : vector<8x128xf32>
    %198 = vector.extract_strided_slice %185 {offsets = [0, 256], sizes = [8, 128], strides = [1, 1]} : vector<8x512xf32> to vector<8x128xf32>
    %199 = math.tanh %198 : vector<8x128xf32>
    %200 = vector.extract_strided_slice %185 {offsets = [0, 384], sizes = [8, 128], strides = [1, 1]} : vector<8x512xf32> to vector<8x128xf32>
    %201 = arith.negf %200 : vector<8x128xf32>
    %202 = math.exp %201 : vector<8x128xf32>
    %cst_43 = arith.constant 1.000000e+00 : f32
    %203 = vector.broadcast %cst_43 : f32 to vector<8x128xf32>
    %204 = arith.addf %203, %202 : vector<8x128xf32>
    %205 = arith.divf %203, %204 : vector<8x128xf32>
    %206 = arith.mulf %197, %179 : vector<8x128xf32>
    %207 = arith.mulf %191, %199 : vector<8x128xf32>
    %208 = arith.addf %206, %207 : vector<8x128xf32>
    %209 = math.tanh %208 : vector<8x128xf32>
    %210 = arith.mulf %205, %209 : vector<8x128xf32>
    %c48 = arith.constant 48 : index
    %c0_44 = arith.constant 0 : index
    %211 = vector.load %arg10[%c48, %c0_44] : memref<64x128xf32, #tpu.memory_space<vmem>>, vector<8x128xf32>
    tpu.vector_store %arg10[%c48, %c0_44], %210 {strides = array<i32>} : memref<64x128xf32, #tpu.memory_space<vmem>>, vector<8x128xf32>,
    %212 = vector.extract_strided_slice %6 {offsets = [56, 0], sizes = [8, 512], strides = [1, 1]} : vector<64x512xf32> to vector<8x512xf32>
    %cst_45 = arith.constant dense<0.000000e+00> : vector<8x512xf32>
    %213 = tpu.matmul %210, %2, %cst_45 {dimension_numbers = #tpu.dot_dimension_numbers<[1], [0], [0], [1], [0, 0, 1, 1], [], []>} : vector<8x128xf32>, vector<128x512xf32>, vector<8x512xf32> -> vector<8x512xf32>
    %214 = arith.addf %212, %213 : vector<8x512xf32>
    %215 = vector.extract_strided_slice %214 {offsets = [0, 0], sizes = [8, 128], strides = [1, 1]} : vector<8x512xf32> to vector<8x128xf32>
    %216 = arith.negf %215 : vector<8x128xf32>
    %217 = math.exp %216 : vector<8x128xf32>
    %cst_46 = arith.constant 1.000000e+00 : f32
    %218 = vector.broadcast %cst_46 : f32 to vector<8x128xf32>
    %219 = arith.addf %218, %217 : vector<8x128xf32>
    %220 = arith.divf %218, %219 : vector<8x128xf32>
    %221 = vector.extract_strided_slice %214 {offsets = [0, 128], sizes = [8, 128], strides = [1, 1]} : vector<8x512xf32> to vector<8x128xf32>
    %222 = arith.negf %221 : vector<8x128xf32>
    %223 = math.exp %222 : vector<8x128xf32>
    %cst_47 = arith.constant 1.000000e+00 : f32
    %224 = vector.broadcast %cst_47 : f32 to vector<8x128xf32>
    %225 = arith.addf %224, %223 : vector<8x128xf32>
    %226 = arith.divf %224, %225 : vector<8x128xf32>
    %227 = vector.extract_strided_slice %214 {offsets = [0, 256], sizes = [8, 128], strides = [1, 1]} : vector<8x512xf32> to vector<8x128xf32>
    %228 = math.tanh %227 : vector<8x128xf32>
    %229 = vector.extract_strided_slice %214 {offsets = [0, 384], sizes = [8, 128], strides = [1, 1]} : vector<8x512xf32> to vector<8x128xf32>
    %230 = arith.negf %229 : vector<8x128xf32>
    %231 = math.exp %230 : vector<8x128xf32>
    %cst_48 = arith.constant 1.000000e+00 : f32
    %232 = vector.broadcast %cst_48 : f32 to vector<8x128xf32>
    %233 = arith.addf %232, %231 : vector<8x128xf32>
    %234 = arith.divf %232, %233 : vector<8x128xf32>
    %235 = arith.mulf %226, %208 : vector<8x128xf32>
    %236 = arith.mulf %220, %228 : vector<8x128xf32>
    %237 = arith.addf %235, %236 : vector<8x128xf32>
    %238 = math.tanh %237 : vector<8x128xf32>
    %239 = arith.mulf %234, %238 : vector<8x128xf32>
    %c56 = arith.constant 56 : index
    %c0_49 = arith.constant 0 : index
    %240 = vector.load %arg10[%c56, %c0_49] : memref<64x128xf32, #tpu.memory_space<vmem>>, vector<8x128xf32>
    tpu.vector_store %arg10[%c56, %c0_49], %239 {strides = array<i32>} : memref<64x128xf32, #tpu.memory_space<vmem>>, vector<8x128xf32>,
    %c0_50 = arith.constant 0 : index
    %c0_51 = arith.constant 0 : index
    %241 = vector.load %arg10[%c0_50, %c0_51] : memref<64x128xf32, #tpu.memory_space<vmem>>, vector<64x128xf32>
    %c0_52 = arith.constant 0 : index
    %c0_53 = arith.constant 0 : index
    %242 = vector.load %arg4[%c0_52, %c0_53] : memref<128x512xf32, #tpu.memory_space<vmem>>, vector<128x512xf32>
    %c0_54 = arith.constant 0 : index
    %c0_55 = arith.constant 0 : index
    %243 = vector.load %arg5[%c0_54, %c0_55] : memref<128x512xf32, #tpu.memory_space<vmem>>, vector<128x512xf32>
    %c0_56 = arith.constant 0 : index
    %c0_57 = arith.constant 0 : index
    %244 = vector.load %arg6[%c0_56, %c0_57] : memref<1x512xf32, #tpu.memory_space<vmem>>, vector<1x512xf32>
    %cst_58 = arith.constant dense<0.000000e+00> : vector<64x512xf32>
    %245 = tpu.matmul %241, %242, %cst_58 {dimension_numbers = #tpu.dot_dimension_numbers<[1], [0], [0], [1], [0, 0, 1, 1], [], []>} : vector<64x128xf32>, vector<128x512xf32>, vector<64x512xf32> -> vector<64x512xf32>
    %246 = vector.broadcast %244 : vector<1x512xf32> to vector<64x512xf32>
    %247 = arith.addf %245, %246 : vector<64x512xf32>
    %cst_59 = arith.constant 0.000000e+00 : f32
    %248 = vector.broadcast %cst_59 : f32 to vector<8x128xf32>
    %cst_60 = arith.constant 0.000000e+00 : f32
    %249 = vector.broadcast %cst_60 : f32 to vector<8x128xf32>
    %250 = vector.extract_strided_slice %247 {offsets = [0, 0], sizes = [8, 512], strides = [1, 1]} : vector<64x512xf32> to vector<8x512xf32>
    %cst_61 = arith.constant dense<0.000000e+00> : vector<8x512xf32>
    %251 = tpu.matmul %248, %243, %cst_61 {dimension_numbers = #tpu.dot_dimension_numbers<[1], [0], [0], [1], [0, 0, 1, 1], [], []>} : vector<8x128xf32>, vector<128x512xf32>, vector<8x512xf32> -> vector<8x512xf32>
    %252 = arith.addf %250, %251 : vector<8x512xf32>
    %253 = vector.extract_strided_slice %252 {offsets = [0, 0], sizes = [8, 128], strides = [1, 1]} : vector<8x512xf32> to vector<8x128xf32>
    %254 = arith.negf %253 : vector<8x128xf32>
    %255 = math.exp %254 : vector<8x128xf32>
    %cst_62 = arith.constant 1.000000e+00 : f32
    %256 = vector.broadcast %cst_62 : f32 to vector<8x128xf32>
    %257 = arith.addf %256, %255 : vector<8x128xf32>
    %258 = arith.divf %256, %257 : vector<8x128xf32>
    %259 = vector.extract_strided_slice %252 {offsets = [0, 128], sizes = [8, 128], strides = [1, 1]} : vector<8x512xf32> to vector<8x128xf32>
    %260 = arith.negf %259 : vector<8x128xf32>
    %261 = math.exp %260 : vector<8x128xf32>
    %cst_63 = arith.constant 1.000000e+00 : f32
    %262 = vector.broadcast %cst_63 : f32 to vector<8x128xf32>
    %263 = arith.addf %262, %261 : vector<8x128xf32>
    %264 = arith.divf %262, %263 : vector<8x128xf32>
    %265 = vector.extract_strided_slice %252 {offsets = [0, 256], sizes = [8, 128], strides = [1, 1]} : vector<8x512xf32> to vector<8x128xf32>
    %266 = math.tanh %265 : vector<8x128xf32>
    %267 = vector.extract_strided_slice %252 {offsets = [0, 384], sizes = [8, 128], strides = [1, 1]} : vector<8x512xf32> to vector<8x128xf32>
    %268 = arith.negf %267 : vector<8x128xf32>
    %269 = math.exp %268 : vector<8x128xf32>
    %cst_64 = arith.constant 1.000000e+00 : f32
    %270 = vector.broadcast %cst_64 : f32 to vector<8x128xf32>
    %271 = arith.addf %270, %269 : vector<8x128xf32>
    %272 = arith.divf %270, %271 : vector<8x128xf32>
    %273 = arith.mulf %264, %249 : vector<8x128xf32>
    %274 = arith.mulf %258, %266 : vector<8x128xf32>
    %275 = arith.addf %273, %274 : vector<8x128xf32>
    %276 = math.tanh %275 : vector<8x128xf32>
    %277 = arith.mulf %272, %276 : vector<8x128xf32>
    %c0_65 = arith.constant 0 : index
    %c0_66 = arith.constant 0 : index
    %278 = vector.load %arg10[%c0_65, %c0_66] : memref<64x128xf32, #tpu.memory_space<vmem>>, vector<8x128xf32>
    tpu.vector_store %arg10[%c0_65, %c0_66], %277 {strides = array<i32>} : memref<64x128xf32, #tpu.memory_space<vmem>>, vector<8x128xf32>,
    %279 = vector.extract_strided_slice %247 {offsets = [8, 0], sizes = [8, 512], strides = [1, 1]} : vector<64x512xf32> to vector<8x512xf32>
    %cst_67 = arith.constant dense<0.000000e+00> : vector<8x512xf32>
    %280 = tpu.matmul %277, %243, %cst_67 {dimension_numbers = #tpu.dot_dimension_numbers<[1], [0], [0], [1], [0, 0, 1, 1], [], []>} : vector<8x128xf32>, vector<128x512xf32>, vector<8x512xf32> -> vector<8x512xf32>
    %281 = arith.addf %279, %280 : vector<8x512xf32>
    %282 = vector.extract_strided_slice %281 {offsets = [0, 0], sizes = [8, 128], strides = [1, 1]} : vector<8x512xf32> to vector<8x128xf32>
    %283 = arith.negf %282 : vector<8x128xf32>
    %284 = math.exp %283 : vector<8x128xf32>
    %cst_68 = arith.constant 1.000000e+00 : f32
    %285 = vector.broadcast %cst_68 : f32 to vector<8x128xf32>
    %286 = arith.addf %285, %284 : vector<8x128xf32>
    %287 = arith.divf %285, %286 : vector<8x128xf32>
    %288 = vector.extract_strided_slice %281 {offsets = [0, 128], sizes = [8, 128], strides = [1, 1]} : vector<8x512xf32> to vector<8x128xf32>
    %289 = arith.negf %288 : vector<8x128xf32>
    %290 = math.exp %289 : vector<8x128xf32>
    %cst_69 = arith.constant 1.000000e+00 : f32
    %291 = vector.broadcast %cst_69 : f32 to vector<8x128xf32>
    %292 = arith.addf %291, %290 : vector<8x128xf32>
    %293 = arith.divf %291, %292 : vector<8x128xf32>
    %294 = vector.extract_strided_slice %281 {offsets = [0, 256], sizes = [8, 128], strides = [1, 1]} : vector<8x512xf32> to vector<8x128xf32>
    %295 = math.tanh %294 : vector<8x128xf32>
    %296 = vector.extract_strided_slice %281 {offsets = [0, 384], sizes = [8, 128], strides = [1, 1]} : vector<8x512xf32> to vector<8x128xf32>
    %297 = arith.negf %296 : vector<8x128xf32>
    %298 = math.exp %297 : vector<8x128xf32>
    %cst_70 = arith.constant 1.000000e+00 : f32
    %299 = vector.broadcast %cst_70 : f32 to vector<8x128xf32>
    %300 = arith.addf %299, %298 : vector<8x128xf32>
    %301 = arith.divf %299, %300 : vector<8x128xf32>
    %302 = arith.mulf %293, %275 : vector<8x128xf32>
    %303 = arith.mulf %287, %295 : vector<8x128xf32>
    %304 = arith.addf %302, %303 : vector<8x128xf32>
    %305 = math.tanh %304 : vector<8x128xf32>
    %306 = arith.mulf %301, %305 : vector<8x128xf32>
    %c8_71 = arith.constant 8 : index
    %c0_72 = arith.constant 0 : index
    %307 = vector.load %arg10[%c8_71, %c0_72] : memref<64x128xf32, #tpu.memory_space<vmem>>, vector<8x128xf32>
    tpu.vector_store %arg10[%c8_71, %c0_72], %306 {strides = array<i32>} : memref<64x128xf32, #tpu.memory_space<vmem>>, vector<8x128xf32>,
    %308 = vector.extract_strided_slice %247 {offsets = [16, 0], sizes = [8, 512], strides = [1, 1]} : vector<64x512xf32> to vector<8x512xf32>
    %cst_73 = arith.constant dense<0.000000e+00> : vector<8x512xf32>
    %309 = tpu.matmul %306, %243, %cst_73 {dimension_numbers = #tpu.dot_dimension_numbers<[1], [0], [0], [1], [0, 0, 1, 1], [], []>} : vector<8x128xf32>, vector<128x512xf32>, vector<8x512xf32> -> vector<8x512xf32>
    %310 = arith.addf %308, %309 : vector<8x512xf32>
    %311 = vector.extract_strided_slice %310 {offsets = [0, 0], sizes = [8, 128], strides = [1, 1]} : vector<8x512xf32> to vector<8x128xf32>
    %312 = arith.negf %311 : vector<8x128xf32>
    %313 = math.exp %312 : vector<8x128xf32>
    %cst_74 = arith.constant 1.000000e+00 : f32
    %314 = vector.broadcast %cst_74 : f32 to vector<8x128xf32>
    %315 = arith.addf %314, %313 : vector<8x128xf32>
    %316 = arith.divf %314, %315 : vector<8x128xf32>
    %317 = vector.extract_strided_slice %310 {offsets = [0, 128], sizes = [8, 128], strides = [1, 1]} : vector<8x512xf32> to vector<8x128xf32>
    %318 = arith.negf %317 : vector<8x128xf32>
    %319 = math.exp %318 : vector<8x128xf32>
    %cst_75 = arith.constant 1.000000e+00 : f32
    %320 = vector.broadcast %cst_75 : f32 to vector<8x128xf32>
    %321 = arith.addf %320, %319 : vector<8x128xf32>
    %322 = arith.divf %320, %321 : vector<8x128xf32>
    %323 = vector.extract_strided_slice %310 {offsets = [0, 256], sizes = [8, 128], strides = [1, 1]} : vector<8x512xf32> to vector<8x128xf32>
    %324 = math.tanh %323 : vector<8x128xf32>
    %325 = vector.extract_strided_slice %310 {offsets = [0, 384], sizes = [8, 128], strides = [1, 1]} : vector<8x512xf32> to vector<8x128xf32>
    %326 = arith.negf %325 : vector<8x128xf32>
    %327 = math.exp %326 : vector<8x128xf32>
    %cst_76 = arith.constant 1.000000e+00 : f32
    %328 = vector.broadcast %cst_76 : f32 to vector<8x128xf32>
    %329 = arith.addf %328, %327 : vector<8x128xf32>
    %330 = arith.divf %328, %329 : vector<8x128xf32>
    %331 = arith.mulf %322, %304 : vector<8x128xf32>
    %332 = arith.mulf %316, %324 : vector<8x128xf32>
    %333 = arith.addf %331, %332 : vector<8x128xf32>
    %334 = math.tanh %333 : vector<8x128xf32>
    %335 = arith.mulf %330, %334 : vector<8x128xf32>
    %c16_77 = arith.constant 16 : index
    %c0_78 = arith.constant 0 : index
    %336 = vector.load %arg10[%c16_77, %c0_78] : memref<64x128xf32, #tpu.memory_space<vmem>>, vector<8x128xf32>
    tpu.vector_store %arg10[%c16_77, %c0_78], %335 {strides = array<i32>} : memref<64x128xf32, #tpu.memory_space<vmem>>, vector<8x128xf32>,
    %337 = vector.extract_strided_slice %247 {offsets = [24, 0], sizes = [8, 512], strides = [1, 1]} : vector<64x512xf32> to vector<8x512xf32>
    %cst_79 = arith.constant dense<0.000000e+00> : vector<8x512xf32>
    %338 = tpu.matmul %335, %243, %cst_79 {dimension_numbers = #tpu.dot_dimension_numbers<[1], [0], [0], [1], [0, 0, 1, 1], [], []>} : vector<8x128xf32>, vector<128x512xf32>, vector<8x512xf32> -> vector<8x512xf32>
    %339 = arith.addf %337, %338 : vector<8x512xf32>
    %340 = vector.extract_strided_slice %339 {offsets = [0, 0], sizes = [8, 128], strides = [1, 1]} : vector<8x512xf32> to vector<8x128xf32>
    %341 = arith.negf %340 : vector<8x128xf32>
    %342 = math.exp %341 : vector<8x128xf32>
    %cst_80 = arith.constant 1.000000e+00 : f32
    %343 = vector.broadcast %cst_80 : f32 to vector<8x128xf32>
    %344 = arith.addf %343, %342 : vector<8x128xf32>
    %345 = arith.divf %343, %344 : vector<8x128xf32>
    %346 = vector.extract_strided_slice %339 {offsets = [0, 128], sizes = [8, 128], strides = [1, 1]} : vector<8x512xf32> to vector<8x128xf32>
    %347 = arith.negf %346 : vector<8x128xf32>
    %348 = math.exp %347 : vector<8x128xf32>
    %cst_81 = arith.constant 1.000000e+00 : f32
    %349 = vector.broadcast %cst_81 : f32 to vector<8x128xf32>
    %350 = arith.addf %349, %348 : vector<8x128xf32>
    %351 = arith.divf %349, %350 : vector<8x128xf32>
    %352 = vector.extract_strided_slice %339 {offsets = [0, 256], sizes = [8, 128], strides = [1, 1]} : vector<8x512xf32> to vector<8x128xf32>
    %353 = math.tanh %352 : vector<8x128xf32>
    %354 = vector.extract_strided_slice %339 {offsets = [0, 384], sizes = [8, 128], strides = [1, 1]} : vector<8x512xf32> to vector<8x128xf32>
    %355 = arith.negf %354 : vector<8x128xf32>
    %356 = math.exp %355 : vector<8x128xf32>
    %cst_82 = arith.constant 1.000000e+00 : f32
    %357 = vector.broadcast %cst_82 : f32 to vector<8x128xf32>
    %358 = arith.addf %357, %356 : vector<8x128xf32>
    %359 = arith.divf %357, %358 : vector<8x128xf32>
    %360 = arith.mulf %351, %333 : vector<8x128xf32>
    %361 = arith.mulf %345, %353 : vector<8x128xf32>
    %362 = arith.addf %360, %361 : vector<8x128xf32>
    %363 = math.tanh %362 : vector<8x128xf32>
    %364 = arith.mulf %359, %363 : vector<8x128xf32>
    %c24_83 = arith.constant 24 : index
    %c0_84 = arith.constant 0 : index
    %365 = vector.load %arg10[%c24_83, %c0_84] : memref<64x128xf32, #tpu.memory_space<vmem>>, vector<8x128xf32>
    tpu.vector_store %arg10[%c24_83, %c0_84], %364 {strides = array<i32>} : memref<64x128xf32, #tpu.memory_space<vmem>>, vector<8x128xf32>,
    %366 = vector.extract_strided_slice %247 {offsets = [32, 0], sizes = [8, 512], strides = [1, 1]} : vector<64x512xf32> to vector<8x512xf32>
    %cst_85 = arith.constant dense<0.000000e+00> : vector<8x512xf32>
    %367 = tpu.matmul %364, %243, %cst_85 {dimension_numbers = #tpu.dot_dimension_numbers<[1], [0], [0], [1], [0, 0, 1, 1], [], []>} : vector<8x128xf32>, vector<128x512xf32>, vector<8x512xf32> -> vector<8x512xf32>
    %368 = arith.addf %366, %367 : vector<8x512xf32>
    %369 = vector.extract_strided_slice %368 {offsets = [0, 0], sizes = [8, 128], strides = [1, 1]} : vector<8x512xf32> to vector<8x128xf32>
    %370 = arith.negf %369 : vector<8x128xf32>
    %371 = math.exp %370 : vector<8x128xf32>
    %cst_86 = arith.constant 1.000000e+00 : f32
    %372 = vector.broadcast %cst_86 : f32 to vector<8x128xf32>
    %373 = arith.addf %372, %371 : vector<8x128xf32>
    %374 = arith.divf %372, %373 : vector<8x128xf32>
    %375 = vector.extract_strided_slice %368 {offsets = [0, 128], sizes = [8, 128], strides = [1, 1]} : vector<8x512xf32> to vector<8x128xf32>
    %376 = arith.negf %375 : vector<8x128xf32>
    %377 = math.exp %376 : vector<8x128xf32>
    %cst_87 = arith.constant 1.000000e+00 : f32
    %378 = vector.broadcast %cst_87 : f32 to vector<8x128xf32>
    %379 = arith.addf %378, %377 : vector<8x128xf32>
    %380 = arith.divf %378, %379 : vector<8x128xf32>
    %381 = vector.extract_strided_slice %368 {offsets = [0, 256], sizes = [8, 128], strides = [1, 1]} : vector<8x512xf32> to vector<8x128xf32>
    %382 = math.tanh %381 : vector<8x128xf32>
    %383 = vector.extract_strided_slice %368 {offsets = [0, 384], sizes = [8, 128], strides = [1, 1]} : vector<8x512xf32> to vector<8x128xf32>
    %384 = arith.negf %383 : vector<8x128xf32>
    %385 = math.exp %384 : vector<8x128xf32>
    %cst_88 = arith.constant 1.000000e+00 : f32
    %386 = vector.broadcast %cst_88 : f32 to vector<8x128xf32>
    %387 = arith.addf %386, %385 : vector<8x128xf32>
    %388 = arith.divf %386, %387 : vector<8x128xf32>
    %389 = arith.mulf %380, %362 : vector<8x128xf32>
    %390 = arith.mulf %374, %382 : vector<8x128xf32>
    %391 = arith.addf %389, %390 : vector<8x128xf32>
    %392 = math.tanh %391 : vector<8x128xf32>
    %393 = arith.mulf %388, %392 : vector<8x128xf32>
    %c32_89 = arith.constant 32 : index
    %c0_90 = arith.constant 0 : index
    %394 = vector.load %arg10[%c32_89, %c0_90] : memref<64x128xf32, #tpu.memory_space<vmem>>, vector<8x128xf32>
    tpu.vector_store %arg10[%c32_89, %c0_90], %393 {strides = array<i32>} : memref<64x128xf32, #tpu.memory_space<vmem>>, vector<8x128xf32>,
    %395 = vector.extract_strided_slice %247 {offsets = [40, 0], sizes = [8, 512], strides = [1, 1]} : vector<64x512xf32> to vector<8x512xf32>
    %cst_91 = arith.constant dense<0.000000e+00> : vector<8x512xf32>
    %396 = tpu.matmul %393, %243, %cst_91 {dimension_numbers = #tpu.dot_dimension_numbers<[1], [0], [0], [1], [0, 0, 1, 1], [], []>} : vector<8x128xf32>, vector<128x512xf32>, vector<8x512xf32> -> vector<8x512xf32>
    %397 = arith.addf %395, %396 : vector<8x512xf32>
    %398 = vector.extract_strided_slice %397 {offsets = [0, 0], sizes = [8, 128], strides = [1, 1]} : vector<8x512xf32> to vector<8x128xf32>
    %399 = arith.negf %398 : vector<8x128xf32>
    %400 = math.exp %399 : vector<8x128xf32>
    %cst_92 = arith.constant 1.000000e+00 : f32
    %401 = vector.broadcast %cst_92 : f32 to vector<8x128xf32>
    %402 = arith.addf %401, %400 : vector<8x128xf32>
    %403 = arith.divf %401, %402 : vector<8x128xf32>
    %404 = vector.extract_strided_slice %397 {offsets = [0, 128], sizes = [8, 128], strides = [1, 1]} : vector<8x512xf32> to vector<8x128xf32>
    %405 = arith.negf %404 : vector<8x128xf32>
    %406 = math.exp %405 : vector<8x128xf32>
    %cst_93 = arith.constant 1.000000e+00 : f32
    %407 = vector.broadcast %cst_93 : f32 to vector<8x128xf32>
    %408 = arith.addf %407, %406 : vector<8x128xf32>
    %409 = arith.divf %407, %408 : vector<8x128xf32>
    %410 = vector.extract_strided_slice %397 {offsets = [0, 256], sizes = [8, 128], strides = [1, 1]} : vector<8x512xf32> to vector<8x128xf32>
    %411 = math.tanh %410 : vector<8x128xf32>
    %412 = vector.extract_strided_slice %397 {offsets = [0, 384], sizes = [8, 128], strides = [1, 1]} : vector<8x512xf32> to vector<8x128xf32>
    %413 = arith.negf %412 : vector<8x128xf32>
    %414 = math.exp %413 : vector<8x128xf32>
    %cst_94 = arith.constant 1.000000e+00 : f32
    %415 = vector.broadcast %cst_94 : f32 to vector<8x128xf32>
    %416 = arith.addf %415, %414 : vector<8x128xf32>
    %417 = arith.divf %415, %416 : vector<8x128xf32>
    %418 = arith.mulf %409, %391 : vector<8x128xf32>
    %419 = arith.mulf %403, %411 : vector<8x128xf32>
    %420 = arith.addf %418, %419 : vector<8x128xf32>
    %421 = math.tanh %420 : vector<8x128xf32>
    %422 = arith.mulf %417, %421 : vector<8x128xf32>
    %c40_95 = arith.constant 40 : index
    %c0_96 = arith.constant 0 : index
    %423 = vector.load %arg10[%c40_95, %c0_96] : memref<64x128xf32, #tpu.memory_space<vmem>>, vector<8x128xf32>
    tpu.vector_store %arg10[%c40_95, %c0_96], %422 {strides = array<i32>} : memref<64x128xf32, #tpu.memory_space<vmem>>, vector<8x128xf32>,
    %424 = vector.extract_strided_slice %247 {offsets = [48, 0], sizes = [8, 512], strides = [1, 1]} : vector<64x512xf32> to vector<8x512xf32>
    %cst_97 = arith.constant dense<0.000000e+00> : vector<8x512xf32>
    %425 = tpu.matmul %422, %243, %cst_97 {dimension_numbers = #tpu.dot_dimension_numbers<[1], [0], [0], [1], [0, 0, 1, 1], [], []>} : vector<8x128xf32>, vector<128x512xf32>, vector<8x512xf32> -> vector<8x512xf32>
    %426 = arith.addf %424, %425 : vector<8x512xf32>
    %427 = vector.extract_strided_slice %426 {offsets = [0, 0], sizes = [8, 128], strides = [1, 1]} : vector<8x512xf32> to vector<8x128xf32>
    %428 = arith.negf %427 : vector<8x128xf32>
    %429 = math.exp %428 : vector<8x128xf32>
    %cst_98 = arith.constant 1.000000e+00 : f32
    %430 = vector.broadcast %cst_98 : f32 to vector<8x128xf32>
    %431 = arith.addf %430, %429 : vector<8x128xf32>
    %432 = arith.divf %430, %431 : vector<8x128xf32>
    %433 = vector.extract_strided_slice %426 {offsets = [0, 128], sizes = [8, 128], strides = [1, 1]} : vector<8x512xf32> to vector<8x128xf32>
    %434 = arith.negf %433 : vector<8x128xf32>
    %435 = math.exp %434 : vector<8x128xf32>
    %cst_99 = arith.constant 1.000000e+00 : f32
    %436 = vector.broadcast %cst_99 : f32 to vector<8x128xf32>
    %437 = arith.addf %436, %435 : vector<8x128xf32>
    %438 = arith.divf %436, %437 : vector<8x128xf32>
    %439 = vector.extract_strided_slice %426 {offsets = [0, 256], sizes = [8, 128], strides = [1, 1]} : vector<8x512xf32> to vector<8x128xf32>
    %440 = math.tanh %439 : vector<8x128xf32>
    %441 = vector.extract_strided_slice %426 {offsets = [0, 384], sizes = [8, 128], strides = [1, 1]} : vector<8x512xf32> to vector<8x128xf32>
    %442 = arith.negf %441 : vector<8x128xf32>
    %443 = math.exp %442 : vector<8x128xf32>
    %cst_100 = arith.constant 1.000000e+00 : f32
    %444 = vector.broadcast %cst_100 : f32 to vector<8x128xf32>
    %445 = arith.addf %444, %443 : vector<8x128xf32>
    %446 = arith.divf %444, %445 : vector<8x128xf32>
    %447 = arith.mulf %438, %420 : vector<8x128xf32>
    %448 = arith.mulf %432, %440 : vector<8x128xf32>
    %449 = arith.addf %447, %448 : vector<8x128xf32>
    %450 = math.tanh %449 : vector<8x128xf32>
    %451 = arith.mulf %446, %450 : vector<8x128xf32>
    %c48_101 = arith.constant 48 : index
    %c0_102 = arith.constant 0 : index
    %452 = vector.load %arg10[%c48_101, %c0_102] : memref<64x128xf32, #tpu.memory_space<vmem>>, vector<8x128xf32>
    tpu.vector_store %arg10[%c48_101, %c0_102], %451 {strides = array<i32>} : memref<64x128xf32, #tpu.memory_space<vmem>>, vector<8x128xf32>,
    %453 = vector.extract_strided_slice %247 {offsets = [56, 0], sizes = [8, 512], strides = [1, 1]} : vector<64x512xf32> to vector<8x512xf32>
    %cst_103 = arith.constant dense<0.000000e+00> : vector<8x512xf32>
    %454 = tpu.matmul %451, %243, %cst_103 {dimension_numbers = #tpu.dot_dimension_numbers<[1], [0], [0], [1], [0, 0, 1, 1], [], []>} : vector<8x128xf32>, vector<128x512xf32>, vector<8x512xf32> -> vector<8x512xf32>
    %455 = arith.addf %453, %454 : vector<8x512xf32>
    %456 = vector.extract_strided_slice %455 {offsets = [0, 0], sizes = [8, 128], strides = [1, 1]} : vector<8x512xf32> to vector<8x128xf32>
    %457 = arith.negf %456 : vector<8x128xf32>
    %458 = math.exp %457 : vector<8x128xf32>
    %cst_104 = arith.constant 1.000000e+00 : f32
    %459 = vector.broadcast %cst_104 : f32 to vector<8x128xf32>
    %460 = arith.addf %459, %458 : vector<8x128xf32>
    %461 = arith.divf %459, %460 : vector<8x128xf32>
    %462 = vector.extract_strided_slice %455 {offsets = [0, 128], sizes = [8, 128], strides = [1, 1]} : vector<8x512xf32> to vector<8x128xf32>
    %463 = arith.negf %462 : vector<8x128xf32>
    %464 = math.exp %463 : vector<8x128xf32>
    %cst_105 = arith.constant 1.000000e+00 : f32
    %465 = vector.broadcast %cst_105 : f32 to vector<8x128xf32>
    %466 = arith.addf %465, %464 : vector<8x128xf32>
    %467 = arith.divf %465, %466 : vector<8x128xf32>
    %468 = vector.extract_strided_slice %455 {offsets = [0, 256], sizes = [8, 128], strides = [1, 1]} : vector<8x512xf32> to vector<8x128xf32>
    %469 = math.tanh %468 : vector<8x128xf32>
    %470 = vector.extract_strided_slice %455 {offsets = [0, 384], sizes = [8, 128], strides = [1, 1]} : vector<8x512xf32> to vector<8x128xf32>
    %471 = arith.negf %470 : vector<8x128xf32>
    %472 = math.exp %471 : vector<8x128xf32>
    %cst_106 = arith.constant 1.000000e+00 : f32
    %473 = vector.broadcast %cst_106 : f32 to vector<8x128xf32>
    %474 = arith.addf %473, %472 : vector<8x128xf32>
    %475 = arith.divf %473, %474 : vector<8x128xf32>
    %476 = arith.mulf %467, %449 : vector<8x128xf32>
    %477 = arith.mulf %461, %469 : vector<8x128xf32>
    %478 = arith.addf %476, %477 : vector<8x128xf32>
    %479 = math.tanh %478 : vector<8x128xf32>
    %480 = arith.mulf %475, %479 : vector<8x128xf32>
    %c56_107 = arith.constant 56 : index
    %c0_108 = arith.constant 0 : index
    %481 = vector.load %arg10[%c56_107, %c0_108] : memref<64x128xf32, #tpu.memory_space<vmem>>, vector<8x128xf32>
    tpu.vector_store %arg10[%c56_107, %c0_108], %480 {strides = array<i32>} : memref<64x128xf32, #tpu.memory_space<vmem>>, vector<8x128xf32>,
    %c0_109 = arith.constant 0 : index
    %c0_110 = arith.constant 0 : index
    %482 = vector.load %arg10[%c0_109, %c0_110] : memref<64x128xf32, #tpu.memory_space<vmem>>, vector<64x128xf32>
    %c0_111 = arith.constant 0 : index
    %c0_112 = arith.constant 0 : index
    %483 = vector.load %arg7[%c0_111, %c0_112] : memref<128x5xf32, #tpu.memory_space<vmem>>, vector<128x5xf32>
    %cst_113 = arith.constant dense<0.000000e+00> : vector<64x5xf32>
    %484 = tpu.matmul %482, %483, %cst_113 {dimension_numbers = #tpu.dot_dimension_numbers<[1], [0], [0], [1], [0, 0, 1, 1], [], []>} : vector<64x128xf32>, vector<128x5xf32>, vector<64x5xf32> -> vector<64x5xf32>
    %c0_114 = arith.constant 0 : index
    %c0_115 = arith.constant 0 : index
    %485 = vector.load %arg8[%c0_114, %c0_115] : memref<1x5xf32, #tpu.memory_space<vmem>>, vector<1x5xf32>
    %486 = vector.broadcast %485 : vector<1x5xf32> to vector<64x5xf32>
    %487 = arith.addf %484, %486 : vector<64x5xf32>
    %c0_116 = arith.constant 0 : index
    %c0_117 = arith.constant 0 : index
    %488 = vector.load %arg9[%c0_116, %c0_117] : memref<64x5xf32, #tpu.memory_space<vmem>>, vector<64x5xf32>
    tpu.vector_store %arg9[%c0_116, %c0_117], %487 {strides = array<i32>} : memref<64x5xf32, #tpu.memory_space<vmem>>, vector<64x5xf32>,
    return
  }
}

</mosaic_0001>

<llo_original>
// kernel: lstm_w_classifier_forward.1
$region0: #{lstm_w_classifier_forward.1}
  #allocation0 [shape = 'u32[]', space=smem, size = 0x4, offset = 0x4, fixed_abs, tag = 'smem constant byte address 0x4 - core index']
  #allocation1 [shape = 'u32[144,128]{1,0:T(1,128)}', space=vmem, size = 0x12000, scoped, tag = 'internal scratch']
  #allocation2 [shape = 'f32[64,128]{1,0:T(8,128)}', space=vmem, size = 0x8000, scoped, tag = 'scratch operand']
  %s0 = inlined_call_operand.vmem [shape: f32[64,128], index: 0, kind: input, shape index: {}]
  %s1 = inlined_call_operand.vmem [shape: f32[128,512], index: 1, kind: input, shape index: {}]
  %s2 = inlined_call_operand.vmem [shape: f32[128,512], index: 2, kind: input, shape index: {}]
  %s3 = inlined_call_operand.vmem [shape: f32[1,512], index: 3, kind: input, shape index: {}]
  %s4 = inlined_call_operand.vmem [shape: f32[128,512], index: 4, kind: input, shape index: {}]
  %s5 = inlined_call_operand.vmem [shape: f32[128,512], index: 5, kind: input, shape index: {}]
  %s6 = inlined_call_operand.vmem [shape: f32[1,512], index: 6, kind: input, shape index: {}]
  %s7 = inlined_call_operand.vmem [shape: f32[128,5], index: 7, kind: input, shape index: {}]
  %s8 = inlined_call_operand.vmem [shape: f32[1,5], index: 8, kind: input, shape index: {}]
  %s9 = inlined_call_operand.vmem [shape: f32[64,5], index: 9, kind: output, shape index: {}]
  %s10 = sld [smem:[#allocation0]]
  $region46: #{lstm_w_classifier_forward.1} parent=0
    _
  %s12 = ssub.s32 1, %s10
  %s13 = scalar_select 0, %s12, %s10
  // Predicated region
  $region2: #{lstm_w_classifier_forward.1} parent=0 // pred_check
    _
  $region3: #{lstm_w_classifier_forward.1} parent=0 // pred_check_branch
    %15 = sbr.rel (0) target = $region5
  $region4: #{lstm_w_classifier_forward.1} parent=0 // pred_region
    _
  $region5: #{lstm_w_classifier_forward.1} parent=0 // pred_fallthru
    _
  // Predicated region
  $region6: #{lstm_w_classifier_forward.1} parent=0 // pred_check
    _
  $region7: #{lstm_w_classifier_forward.1} parent=0 // pred_check_branch
    %17 = sbr.rel (0) target = $region9
  $region8: #{lstm_w_classifier_forward.1} parent=0 // pred_region
    _
  $region9: #{lstm_w_classifier_forward.1} parent=0 // pred_fallthru
    _
  // Predicated region
  $region10: #{lstm_w_classifier_forward.1} parent=0 // pred_check
    _
  $region11: #{lstm_w_classifier_forward.1} parent=0 // pred_check_branch
    %19 = sbr.rel (0) target = $region13
  $region12: #{lstm_w_classifier_forward.1} parent=0 // pred_region
    _
  $region13: #{lstm_w_classifier_forward.1} parent=0 // pred_fallthru
    _
  // Predicated region
  $region14: #{lstm_w_classifier_forward.1} parent=0 // pred_check
    _
  $region15: #{lstm_w_classifier_forward.1} parent=0 // pred_check_branch
    %21 = sbr.rel (0) target = $region17
  $region16: #{lstm_w_classifier_forward.1} parent=0 // pred_region
    _
  $region17: #{lstm_w_classifier_forward.1} parent=0 // pred_fallthru
    _
  // Predicated region
  $region18: #{lstm_w_classifier_forward.1} parent=0 // pred_check
    _
  $region19: #{lstm_w_classifier_forward.1} parent=0 // pred_check_branch
    %23 = sbr.rel (0) target = $region21
  $region20: #{lstm_w_classifier_forward.1} parent=0 // pred_region
    _
  $region21: #{lstm_w_classifier_forward.1} parent=0 // pred_fallthru
    _
  // Predicated region
  $region22: #{lstm_w_classifier_forward.1} parent=0 // pred_check
    _
  $region23: #{lstm_w_classifier_forward.1} parent=0 // pred_check_branch
    %25 = sbr.rel (0) target = $region25
  $region24: #{lstm_w_classifier_forward.1} parent=0 // pred_region
    _
  $region25: #{lstm_w_classifier_forward.1} parent=0 // pred_fallthru
    _
  // Predicated region
  $region26: #{lstm_w_classifier_forward.1} parent=0 // pred_check
    _
  $region27: #{lstm_w_classifier_forward.1} parent=0 // pred_check_branch
    %27 = sbr.rel (0) target = $region29
  $region28: #{lstm_w_classifier_forward.1} parent=0 // pred_region
    _
  $region29: #{lstm_w_classifier_forward.1} parent=0 // pred_fallthru
    _
  // Predicated region
  $region30: #{lstm_w_classifier_forward.1} parent=0 // pred_check
    _
  $region31: #{lstm_w_classifier_forward.1} parent=0 // pred_check_branch
    %29 = sbr.rel (0) target = $region33
  $region32: #{lstm_w_classifier_forward.1} parent=0 // pred_region
    _
  $region33: #{lstm_w_classifier_forward.1} parent=0 // pred_fallthru
    _
  // Predicated region
  $region34: #{lstm_w_classifier_forward.1} parent=0 // pred_check
    _
  $region35: #{lstm_w_classifier_forward.1} parent=0 // pred_check_branch
    %31 = sbr.rel (0) target = $region37
  $region36: #{lstm_w_classifier_forward.1} parent=0 // pred_region
    _
  $region37: #{lstm_w_classifier_forward.1} parent=0 // pred_fallthru
    _
  %v32 = vld [vmem:[%s0] sm:$0xff]
  %v33 = vld [vmem:[%s0 + $0x8] sm:$0xff]
  %v34 = vld [vmem:[%s0 + $0x10] sm:$0xff]
  %v35 = vld [vmem:[%s0 + $0x18] sm:$0xff]
  %v36 = vld [vmem:[%s0 + $0x20] sm:$0xff]
  %v37 = vld [vmem:[%s0 + $0x28] sm:$0xff]
  %v38 = vld [vmem:[%s0 + $0x30] sm:$0xff]
  %v39 = vld [vmem:[%s0 + $0x38] sm:$0xff]
  %v40 = vld [vmem:[%s1] sm:$0xff]
  %v41 = vld [vmem:[%s1 + $0x8] sm:$0xff]
  %v42 = vld [vmem:[%s1 + $0x10] sm:$0xff]
  %v43 = vld [vmem:[%s1 + $0x18] sm:$0xff]
  %v44 = vld [vmem:[%s1 + $0x20] sm:$0xff]
  %v45 = vld [vmem:[%s1 + $0x28] sm:$0xff]
  %v46 = vld [vmem:[%s1 + $0x30] sm:$0xff]
  %v47 = vld [vmem:[%s1 + $0x38] sm:$0xff]
  %v48 = vld [vmem:[%s1 + $0x40] sm:$0xff]
  %v49 = vld [vmem:[%s1 + $0x48] sm:$0xff]
  %v50 = vld [vmem:[%s1 + $0x50] sm:$0xff]
  %v51 = vld [vmem:[%s1 + $0x58] sm:$0xff]
  %v52 = vld [vmem:[%s1 + $0x60] sm:$0xff]
  %v53 = vld [vmem:[%s1 + $0x68] sm:$0xff]
  %v54 = vld [vmem:[%s1 + $0x70] sm:$0xff]
  %v55 = vld [vmem:[%s1 + $0x78] sm:$0xff]
  %v56 = vld [vmem:[%s1 + $0x80] sm:$0xff]
  %v57 = vld [vmem:[%s1 + $0x88] sm:$0xff]
  %v58 = vld [vmem:[%s1 + $0x90] sm:$0xff]
  %v59 = vld [vmem:[%s1 + $0x98] sm:$0xff]
  %v60 = vld [vmem:[%s1 + $0xa0] sm:$0xff]
  %v61 = vld [vmem:[%s1 + $0xa8] sm:$0xff]
  %v62 = vld [vmem:[%s1 + $0xb0] sm:$0xff]
  %v63 = vld [vmem:[%s1 + $0xb8] sm:$0xff]
  %v64 = vld [vmem:[%s1 + $0xc0] sm:$0xff]
  %v65 = vld [vmem:[%s1 + $0xc8] sm:$0xff]
  %v66 = vld [vmem:[%s1 + $0xd0] sm:$0xff]
  %v67 = vld [vmem:[%s1 + $0xd8] sm:$0xff]
  %v68 = vld [vmem:[%s1 + $0xe0] sm:$0xff]
  %v69 = vld [vmem:[%s1 + $0xe8] sm:$0xff]
  %v70 = vld [vmem:[%s1 + $0xf0] sm:$0xff]
  %v71 = vld [vmem:[%s1 + $0xf8] sm:$0xff]
  %v72 = vld [vmem:[%s1 + $0x100] sm:$0xff]
  %v73 = vld [vmem:[%s1 + $0x108] sm:$0xff]
  %v74 = vld [vmem:[%s1 + $0x110] sm:$0xff]
  %v75 = vld [vmem:[%s1 + $0x118] sm:$0xff]
  %v76 = vld [vmem:[%s1 + $0x120] sm:$0xff]
  %v77 = vld [vmem:[%s1 + $0x128] sm:$0xff]
  %v78 = vld [vmem:[%s1 + $0x130] sm:$0xff]
  %v79 = vld [vmem:[%s1 + $0x138] sm:$0xff]
  %v80 = vld [vmem:[%s1 + $0x140] sm:$0xff]
  %v81 = vld [vmem:[%s1 + $0x148] sm:$0xff]
  %v82 = vld [vmem:[%s1 + $0x150] sm:$0xff]
  %v83 = vld [vmem:[%s1 + $0x158] sm:$0xff]
  %v84 = vld [vmem:[%s1 + $0x160] sm:$0xff]
  %v85 = vld [vmem:[%s1 + $0x168] sm:$0xff]
  %v86 = vld [vmem:[%s1 + $0x170] sm:$0xff]
  %v87 = vld [vmem:[%s1 + $0x178] sm:$0xff]
  %v88 = vld [vmem:[%s1 + $0x180] sm:$0xff]
  %v89 = vld [vmem:[%s1 + $0x188] sm:$0xff]
  %v90 = vld [vmem:[%s1 + $0x190] sm:$0xff]
  %v91 = vld [vmem:[%s1 + $0x198] sm:$0xff]
  %v92 = vld [vmem:[%s1 + $0x1a0] sm:$0xff]
  %v93 = vld [vmem:[%s1 + $0x1a8] sm:$0xff]
  %v94 = vld [vmem:[%s1 + $0x1b0] sm:$0xff]
  %v95 = vld [vmem:[%s1 + $0x1b8] sm:$0xff]
  %v96 = vld [vmem:[%s1 + $0x1c0] sm:$0xff]
  %v97 = vld [vmem:[%s1 + $0x1c8] sm:$0xff]
  %v98 = vld [vmem:[%s1 + $0x1d0] sm:$0xff]
  %v99 = vld [vmem:[%s1 + $0x1d8] sm:$0xff]
  %v100 = vld [vmem:[%s1 + $0x1e0] sm:$0xff]
  %v101 = vld [vmem:[%s1 + $0x1e8] sm:$0xff]
  %v102 = vld [vmem:[%s1 + $0x1f0] sm:$0xff]
  %v103 = vld [vmem:[%s1 + $0x1f8] sm:$0xff]
  %v104 = vld [vmem:[%s2] sm:$0xff]
  %v105 = vld [vmem:[%s2 + $0x8] sm:$0xff]
  %v106 = vld [vmem:[%s2 + $0x10] sm:$0xff]
  %v107 = vld [vmem:[%s2 + $0x18] sm:$0xff]
  %v108 = vld [vmem:[%s2 + $0x20] sm:$0xff]
  %v109 = vld [vmem:[%s2 + $0x28] sm:$0xff]
  %v110 = vld [vmem:[%s2 + $0x30] sm:$0xff]
  %v111 = vld [vmem:[%s2 + $0x38] sm:$0xff]
  %v112 = vld [vmem:[%s2 + $0x40] sm:$0xff]
  %v113 = vld [vmem:[%s2 + $0x48] sm:$0xff]
  %v114 = vld [vmem:[%s2 + $0x50] sm:$0xff]
  %v115 = vld [vmem:[%s2 + $0x58] sm:$0xff]
  %v116 = vld [vmem:[%s2 + $0x60] sm:$0xff]
  %v117 = vld [vmem:[%s2 + $0x68] sm:$0xff]
  %v118 = vld [vmem:[%s2 + $0x70] sm:$0xff]
  %v119 = vld [vmem:[%s2 + $0x78] sm:$0xff]
  %v120 = vld [vmem:[%s2 + $0x80] sm:$0xff]
  %v121 = vld [vmem:[%s2 + $0x88] sm:$0xff]
  %v122 = vld [vmem:[%s2 + $0x90] sm:$0xff]
  %v123 = vld [vmem:[%s2 + $0x98] sm:$0xff]
  %v124 = vld [vmem:[%s2 + $0xa0] sm:$0xff]
  %v125 = vld [vmem:[%s2 + $0xa8] sm:$0xff]
  %v126 = vld [vmem:[%s2 + $0xb0] sm:$0xff]
  %v127 = vld [vmem:[%s2 + $0xb8] sm:$0xff]
  %v128 = vld [vmem:[%s2 + $0xc0] sm:$0xff]
  %v129 = vld [vmem:[%s2 + $0xc8] sm:$0xff]
  %v130 = vld [vmem:[%s2 + $0xd0] sm:$0xff]
  %v131 = vld [vmem:[%s2 + $0xd8] sm:$0xff]
  %v132 = vld [vmem:[%s2 + $0xe0] sm:$0xff]
  %v133 = vld [vmem:[%s2 + $0xe8] sm:$0xff]
  %v134 = vld [vmem:[%s2 + $0xf0] sm:$0xff]
  %v135 = vld [vmem:[%s2 + $0xf8] sm:$0xff]
  %v136 = vld [vmem:[%s2 + $0x100] sm:$0xff]
  %v137 = vld [vmem:[%s2 + $0x108] sm:$0xff]
  %v138 = vld [vmem:[%s2 + $0x110] sm:$0xff]
  %v139 = vld [vmem:[%s2 + $0x118] sm:$0xff]
  %v140 = vld [vmem:[%s2 + $0x120] sm:$0xff]
  %v141 = vld [vmem:[%s2 + $0x128] sm:$0xff]
  %v142 = vld [vmem:[%s2 + $0x130] sm:$0xff]
  %v143 = vld [vmem:[%s2 + $0x138] sm:$0xff]
  %v144 = vld [vmem:[%s2 + $0x140] sm:$0xff]
  %v145 = vld [vmem:[%s2 + $0x148] sm:$0xff]
  %v146 = vld [vmem:[%s2 + $0x150] sm:$0xff]
  %v147 = vld [vmem:[%s2 + $0x158] sm:$0xff]
  %v148 = vld [vmem:[%s2 + $0x160] sm:$0xff]
  %v149 = vld [vmem:[%s2 + $0x168] sm:$0xff]
  %v150 = vld [vmem:[%s2 + $0x170] sm:$0xff]
  %v151 = vld [vmem:[%s2 + $0x178] sm:$0xff]
  %v152 = vld [vmem:[%s2 + $0x180] sm:$0xff]
  %v153 = vld [vmem:[%s2 + $0x188] sm:$0xff]
  %v154 = vld [vmem:[%s2 + $0x190] sm:$0xff]
  %v155 = vld [vmem:[%s2 + $0x198] sm:$0xff]
  %v156 = vld [vmem:[%s2 + $0x1a0] sm:$0xff]
  %v157 = vld [vmem:[%s2 + $0x1a8] sm:$0xff]
  %v158 = vld [vmem:[%s2 + $0x1b0] sm:$0xff]
  %v159 = vld [vmem:[%s2 + $0x1b8] sm:$0xff]
  %v160 = vld [vmem:[%s2 + $0x1c0] sm:$0xff]
  %v161 = vld [vmem:[%s2 + $0x1c8] sm:$0xff]
  %v162 = vld [vmem:[%s2 + $0x1d0] sm:$0xff]
  %v163 = vld [vmem:[%s2 + $0x1d8] sm:$0xff]
  %v164 = vld [vmem:[%s2 + $0x1e0] sm:$0xff]
  %v165 = vld [vmem:[%s2 + $0x1e8] sm:$0xff]
  %v166 = vld [vmem:[%s2 + $0x1f0] sm:$0xff]
  %v167 = vld [vmem:[%s2 + $0x1f8] sm:$0xff]
  %v168 = vld [vmem:[%s3] sm:$0xf]
  %v170 = vlaneseq
  %v171 = vshrl.u32 %v170, 7
  %v172 = vsub.s32 0, %v171
  %v173 = vrot.slane %v168, %v172
  %v174 = vlaneseq
  %v175 = vshrl.u32 %v174, 7
  %v176 = vsub.s32 1, %v175
  %v177 = vrot.slane %v168, %v176
  %v178 = vlaneseq
  %v179 = vshrl.u32 %v178, 7
  %v180 = vsub.s32 2, %v179
  %v181 = vrot.slane %v168, %v180
  %v182 = vlaneseq
  %v183 = vshrl.u32 %v182, 7
  %v184 = vsub.s32 3, %v183
  %v185 = vrot.slane %v168, %v184
  %190 = vmatprep.subr.mxu0 %v41
  %191 = vmatpush1.msra.mxu0 %v40
  %192 = vmatprep.subr.mxu0 %v45
  %193 = vmatpush1.msra.mxu0 %v44
  %194 = vmatprep.subr.mxu0 %v49
  %195 = vmatpush1.msra.mxu0 %v48
  %196 = vmatprep.subr.mxu0 %v53
  %197 = vmatpush1.msra.mxu0 %v52
  %198 = vmatprep.subr.mxu0 %v57
  %199 = vmatpush1.msra.mxu0 %v56
  %200 = vmatprep.subr.mxu0 %v61
  %201 = vmatpush1.msra.mxu0 %v60
  %202 = vmatprep.subr.mxu0 %v65
  %203 = vmatpush1.msra.mxu0 %v64
  %204 = vmatprep.subr.mxu0 %v69
  %205 = vmatpush1.msra.mxu0 %v68
  %206 = vmatprep.subr.mxu0 %v73
  %207 = vmatpush1.msra.mxu0 %v72
  %208 = vmatprep.subr.mxu0 %v77
  %209 = vmatpush1.msra.mxu0 %v76
  %210 = vmatprep.subr.mxu0 %v81
  %211 = vmatpush1.msra.mxu0 %v80
  %212 = vmatprep.subr.mxu0 %v85
  %213 = vmatpush1.msra.mxu0 %v84
  %214 = vmatprep.subr.mxu0 %v89
  %215 = vmatpush1.msra.mxu0 %v88
  %216 = vmatprep.subr.mxu0 %v93
  %217 = vmatpush1.msra.mxu0 %v92
  %218 = vmatprep.subr.mxu0 %v97
  %219 = vmatpush1.msra.mxu0 %v96
  %220 = vmatprep.subr.mxu0 %v101
  %221 = vmatpush1.msra.mxu0 %v100
  %222 = vmatprep.subr.mxu0 0.0
  %223 = vmatpush1.msra.mxu0 0.0
  %224 = vmatprep.subr.mxu0 0.0
  %225 = vmatpush1.msra.mxu0 0.0
  %226 = vmatprep.subr.mxu0 0.0
  %227 = vmatpush1.msra.mxu0 0.0
  %228 = vmatprep.subr.mxu0 0.0
  %229 = vmatpush1.msra.mxu0 0.0
  %230 = vmatprep.subr.mxu0 0.0
  %231 = vmatpush1.msra.mxu0 0.0
  %232 = vmatprep.subr.mxu0 0.0
  %233 = vmatpush1.msra.mxu0 0.0
  %234 = vmatprep.subr.mxu0 0.0
  %235 = vmatpush1.msra.mxu0 0.0
  %236 = vmatprep.subr.mxu0 0.0
  %237 = vmatpush1.msra.mxu0 0.0
  %238 = vmatprep.subr.mxu0 0.0
  %239 = vmatpush1.msra.mxu0 0.0
  %240 = vmatprep.subr.mxu0 0.0
  %241 = vmatpush1.msra.mxu0 0.0
  %242 = vmatprep.subr.mxu0 0.0
  %243 = vmatpush1.msra.mxu0 0.0
  %244 = vmatprep.subr.mxu0 0.0
  %245 = vmatpush1.msra.mxu0 0.0
  %246 = vmatprep.subr.mxu0 0.0
  %247 = vmatpush1.msra.mxu0 0.0
  %248 = vmatprep.subr.mxu0 0.0
  %249 = vmatpush1.msra.mxu0 0.0
  %250 = vmatprep.subr.mxu0 0.0
  %251 = vmatpush1.msra.mxu0 0.0
  %252 = vmatprep.subr.mxu0 0.0
  %253 = vmatpush1.msra.mxu0 0.0
  %254 = vmatprep.mubr.f32.mxu0 0.0
  %255 = vmatmul.mubr.f32.gmra.mrb[0].mxu0 %v32
  %v256 = vpop.f32.mrb[0].mxu0
  %v257 = vadd.f32 %v173, %v256
  %v258 = vpop.f32.mrb[0].mxu0
  %v259 = vadd.f32 %v177, %v258
  %260 = vmatprep.mubr.f32.mxu0 0.0
  %261 = vmatmul.mubr.f32.gmra.mrb[0].mxu0 %v33
  %v262 = vpop.f32.mrb[0].mxu0
  %v263 = vadd.f32 %v173, %v262
  %v264 = vpop.f32.mrb[0].mxu0
  %v265 = vadd.f32 %v177, %v264
  %266 = vmatprep.mubr.f32.mxu0 0.0
  %267 = vmatmul.mubr.f32.gmra.mrb[0].mxu0 %v34
  %v268 = vpop.f32.mrb[0].mxu0
  %v269 = vadd.f32 %v173, %v268
  %v270 = vpop.f32.mrb[0].mxu0
  %v271 = vadd.f32 %v177, %v270
  %272 = vmatprep.mubr.f32.mxu0 0.0
  %273 = vmatmul.mubr.f32.gmra.mrb[0].mxu0 %v35
  %v274 = vpop.f32.mrb[0].mxu0
  %v275 = vadd.f32 %v173, %v274
  %v276 = vpop.f32.mrb[0].mxu0
  %v277 = vadd.f32 %v177, %v276
  %278 = vmatprep.mubr.f32.mxu0 0.0
  %279 = vmatmul.mubr.f32.gmra.mrb[0].mxu0 %v36
  %v280 = vpop.f32.mrb[0].mxu0
  %v281 = vadd.f32 %v173, %v280
  %v282 = vpop.f32.mrb[0].mxu0
  %v283 = vadd.f32 %v177, %v282
  %284 = vmatprep.mubr.f32.mxu0 0.0
  %285 = vmatmul.mubr.f32.gmra.mrb[0].mxu0 %v37
  %v286 = vpop.f32.mrb[0].mxu0
  %v287 = vadd.f32 %v173, %v286
  %v288 = vpop.f32.mrb[0].mxu0
  %v289 = vadd.f32 %v177, %v288
  %290 = vmatprep.mubr.f32.mxu0 0.0
  %291 = vmatmul.mubr.f32.gmra.mrb[0].mxu0 %v38
  %v292 = vpop.f32.mrb[0].mxu0
  %v293 = vadd.f32 %v173, %v292
  %v294 = vpop.f32.mrb[0].mxu0
  %v295 = vadd.f32 %v177, %v294
  %296 = vmatprep.mubr.f32.mxu0 0.0
  %297 = vmatmul.mubr.f32.gmra.mrb[0].mxu0 %v39
  %v298 = vpop.f32.mrb[0].mxu0
  %v299 = vadd.f32 %v173, %v298
  %v300 = vpop.f32.mrb[0].mxu0
  %v301 = vadd.f32 %v177, %v300
  %302 = vdwg.mxu0
  %303 = vmatprep.subr.mxu0 %v43
  %304 = vmatpush1.msra.mxu0 %v42
  %305 = vmatprep.subr.mxu0 %v47
  %306 = vmatpush1.msra.mxu0 %v46
  %307 = vmatprep.subr.mxu0 %v51
  %308 = vmatpush1.msra.mxu0 %v50
  %309 = vmatprep.subr.mxu0 %v55
  %310 = vmatpush1.msra.mxu0 %v54
  %311 = vmatprep.subr.mxu0 %v59
  %312 = vmatpush1.msra.mxu0 %v58
  %313 = vmatprep.subr.mxu0 %v63
  %314 = vmatpush1.msra.mxu0 %v62
  %315 = vmatprep.subr.mxu0 %v67
  %316 = vmatpush1.msra.mxu0 %v66
  %317 = vmatprep.subr.mxu0 %v71
  %318 = vmatpush1.msra.mxu0 %v70
  %319 = vmatprep.subr.mxu0 %v75
  %320 = vmatpush1.msra.mxu0 %v74
  %321 = vmatprep.subr.mxu0 %v79
  %322 = vmatpush1.msra.mxu0 %v78
  %323 = vmatprep.subr.mxu0 %v83
  %324 = vmatpush1.msra.mxu0 %v82
  %325 = vmatprep.subr.mxu0 %v87
  %326 = vmatpush1.msra.mxu0 %v86
  %327 = vmatprep.subr.mxu0 %v91
  %328 = vmatpush1.msra.mxu0 %v90
  %329 = vmatprep.subr.mxu0 %v95
  %330 = vmatpush1.msra.mxu0 %v94
  %331 = vmatprep.subr.mxu0 %v99
  %332 = vmatpush1.msra.mxu0 %v98
  %333 = vmatprep.subr.mxu0 %v103
  %334 = vmatpush1.msra.mxu0 %v102
  %335 = vmatprep.subr.mxu0 0.0
  %336 = vmatpush1.msra.mxu0 0.0
  %337 = vmatprep.subr.mxu0 0.0
  %338 = vmatpush1.msra.mxu0 0.0
  %339 = vmatprep.subr.mxu0 0.0
  %340 = vmatpush1.msra.mxu0 0.0
  %341 = vmatprep.subr.mxu0 0.0
  %342 = vmatpush1.msra.mxu0 0.0
  %343 = vmatprep.subr.mxu0 0.0
  %344 = vmatpush1.msra.mxu0 0.0
  %345 = vmatprep.subr.mxu0 0.0
  %346 = vmatpush1.msra.mxu0 0.0
  %347 = vmatprep.subr.mxu0 0.0
  %348 = vmatpush1.msra.mxu0 0.0
  %349 = vmatprep.subr.mxu0 0.0
  %350 = vmatpush1.msra.mxu0 0.0
  %351 = vmatprep.subr.mxu0 0.0
  %352 = vmatpush1.msra.mxu0 0.0
  %353 = vmatprep.subr.mxu0 0.0
  %354 = vmatpush1.msra.mxu0 0.0
  %355 = vmatprep.subr.mxu0 0.0
  %356 = vmatpush1.msra.mxu0 0.0
  %357 = vmatprep.subr.mxu0 0.0
  %358 = vmatpush1.msra.mxu0 0.0
  %359 = vmatprep.subr.mxu0 0.0
  %360 = vmatpush1.msra.mxu0 0.0
  %361 = vmatprep.subr.mxu0 0.0
  %362 = vmatpush1.msra.mxu0 0.0
  %363 = vmatprep.subr.mxu0 0.0
  %364 = vmatpush1.msra.mxu0 0.0
  %365 = vmatprep.subr.mxu0 0.0
  %366 = vmatpush1.msra.mxu0 0.0
  %367 = vmatprep.mubr.f32.mxu0 0.0
  %368 = vmatmul.mubr.f32.gmra.mrb[0].mxu0 %v32
  %v369 = vpop.f32.mrb[0].mxu0
  %v370 = vadd.f32 %v181, %v369
  %v371 = vpop.f32.mrb[0].mxu0
  %v372 = vadd.f32 %v185, %v371
  %373 = vmatprep.mubr.f32.mxu0 0.0
  %374 = vmatmul.mubr.f32.gmra.mrb[0].mxu0 %v33
  %v375 = vpop.f32.mrb[0].mxu0
  %v376 = vadd.f32 %v181, %v375
  %v377 = vpop.f32.mrb[0].mxu0
  %v378 = vadd.f32 %v185, %v377
  %379 = vmatprep.mubr.f32.mxu0 0.0
  %380 = vmatmul.mubr.f32.gmra.mrb[0].mxu0 %v34
  %v381 = vpop.f32.mrb[0].mxu0
  %v382 = vadd.f32 %v181, %v381
  %v383 = vpop.f32.mrb[0].mxu0
  %v384 = vadd.f32 %v185, %v383
  %385 = vmatprep.mubr.f32.mxu0 0.0
  %386 = vmatmul.mubr.f32.gmra.mrb[0].mxu0 %v35
  %v387 = vpop.f32.mrb[0].mxu0
  %v388 = vadd.f32 %v181, %v387
  %v389 = vpop.f32.mrb[0].mxu0
  %v390 = vadd.f32 %v185, %v389
  %391 = vmatprep.mubr.f32.mxu0 0.0
  %392 = vmatmul.mubr.f32.gmra.mrb[0].mxu0 %v36
  %v393 = vpop.f32.mrb[0].mxu0
  %v394 = vadd.f32 %v181, %v393
  %v395 = vpop.f32.mrb[0].mxu0
  %v396 = vadd.f32 %v185, %v395
  %397 = vmatprep.mubr.f32.mxu0 0.0
  %398 = vmatmul.mubr.f32.gmra.mrb[0].mxu0 %v37
  %v399 = vpop.f32.mrb[0].mxu0
  %v400 = vadd.f32 %v181, %v399
  %v401 = vpop.f32.mrb[0].mxu0
  %v402 = vadd.f32 %v185, %v401
  %403 = vmatprep.mubr.f32.mxu0 0.0
  %404 = vmatmul.mubr.f32.gmra.mrb[0].mxu0 %v38
  %v405 = vpop.f32.mrb[0].mxu0
  %v406 = vadd.f32 %v181, %v405
  %v407 = vpop.f32.mrb[0].mxu0
  %v408 = vadd.f32 %v185, %v407
  %409 = vmatprep.mubr.f32.mxu0 0.0
  %410 = vmatmul.mubr.f32.gmra.mrb[0].mxu0 %v39
  %v411 = vpop.f32.mrb[0].mxu0
  %v412 = vadd.f32 %v181, %v411
  %v413 = vpop.f32.mrb[0].mxu0
  %v414 = vadd.f32 %v185, %v413
  %415 = vdwg.mxu0
  %416 = vmatprep.subr.mxu0 %v105
  %417 = vmatpush1.msra.mxu0 %v104
  %418 = vmatprep.subr.mxu0 %v109
  %419 = vmatpush1.msra.mxu0 %v108
  %420 = vmatprep.subr.mxu0 %v113
  %421 = vmatpush1.msra.mxu0 %v112
  %422 = vmatprep.subr.mxu0 %v117
  %423 = vmatpush1.msra.mxu0 %v116
  %424 = vmatprep.subr.mxu0 %v121
  %425 = vmatpush1.msra.mxu0 %v120
  %426 = vmatprep.subr.mxu0 %v125
  %427 = vmatpush1.msra.mxu0 %v124
  %428 = vmatprep.subr.mxu0 %v129
  %429 = vmatpush1.msra.mxu0 %v128
  %430 = vmatprep.subr.mxu0 %v133
  %431 = vmatpush1.msra.mxu0 %v132
  %432 = vmatprep.subr.mxu0 %v137
  %433 = vmatpush1.msra.mxu0 %v136
  %434 = vmatprep.subr.mxu0 %v141
  %435 = vmatpush1.msra.mxu0 %v140
  %436 = vmatprep.subr.mxu0 %v145
  %437 = vmatpush1.msra.mxu0 %v144
  %438 = vmatprep.subr.mxu0 %v149
  %439 = vmatpush1.msra.mxu0 %v148
  %440 = vmatprep.subr.mxu0 %v153
  %441 = vmatpush1.msra.mxu0 %v152
  %442 = vmatprep.subr.mxu0 %v157
  %443 = vmatpush1.msra.mxu0 %v156
  %444 = vmatprep.subr.mxu0 %v161
  %445 = vmatpush1.msra.mxu0 %v160
  %446 = vmatprep.subr.mxu0 %v165
  %447 = vmatpush1.msra.mxu0 %v164
  %448 = vmatprep.subr.mxu0 0.0
  %449 = vmatpush1.msra.mxu0 0.0
  %450 = vmatprep.subr.mxu0 0.0
  %451 = vmatpush1.msra.mxu0 0.0
  %452 = vmatprep.subr.mxu0 0.0
  %453 = vmatpush1.msra.mxu0 0.0
  %454 = vmatprep.subr.mxu0 0.0
  %455 = vmatpush1.msra.mxu0 0.0
  %456 = vmatprep.subr.mxu0 0.0
  %457 = vmatpush1.msra.mxu0 0.0
  %458 = vmatprep.subr.mxu0 0.0
  %459 = vmatpush1.msra.mxu0 0.0
  %460 = vmatprep.subr.mxu0 0.0
  %461 = vmatpush1.msra.mxu0 0.0
  %462 = vmatprep.subr.mxu0 0.0
  %463 = vmatpush1.msra.mxu0 0.0
  %464 = vmatprep.subr.mxu0 0.0
  %465 = vmatpush1.msra.mxu0 0.0
  %466 = vmatprep.subr.mxu0 0.0
  %467 = vmatpush1.msra.mxu0 0.0
  %468 = vmatprep.subr.mxu0 0.0
  %469 = vmatpush1.msra.mxu0 0.0
  %470 = vmatprep.subr.mxu0 0.0
  %471 = vmatpush1.msra.mxu0 0.0
  %472 = vmatprep.subr.mxu0 0.0
  %473 = vmatpush1.msra.mxu0 0.0
  %474 = vmatprep.subr.mxu0 0.0
  %475 = vmatpush1.msra.mxu0 0.0
  %476 = vmatprep.subr.mxu0 0.0
  %477 = vmatpush1.msra.mxu0 0.0
  %478 = vmatprep.subr.mxu0 0.0
  %479 = vmatpush1.msra.mxu0 0.0
  %480 = vmatprep.mubr.f32.mxu0 0.0
  %481 = vmatmul.mubr.f32.gmra.mrb[0].mxu0 0.0
  %v482 = vpop.f32.mrb[0].mxu0
  %v483 = vadd.f32 0.0, %v482
  %v484 = vpop.f32.mrb[0].mxu0
  %v485 = vadd.f32 0.0, %v484
  %486 = vdwg.mxu0
  %487 = vmatprep.subr.mxu0 %v107
  %488 = vmatpush1.msra.mxu0 %v106
  %489 = vmatprep.subr.mxu0 %v111
  %490 = vmatpush1.msra.mxu0 %v110
  %491 = vmatprep.subr.mxu0 %v115
  %492 = vmatpush1.msra.mxu0 %v114
  %493 = vmatprep.subr.mxu0 %v119
  %494 = vmatpush1.msra.mxu0 %v118
  %495 = vmatprep.subr.mxu0 %v123
  %496 = vmatpush1.msra.mxu0 %v122
  %497 = vmatprep.subr.mxu0 %v127
  %498 = vmatpush1.msra.mxu0 %v126
  %499 = vmatprep.subr.mxu0 %v131
  %500 = vmatpush1.msra.mxu0 %v130
  %501 = vmatprep.subr.mxu0 %v135
  %502 = vmatpush1.msra.mxu0 %v134
  %503 = vmatprep.subr.mxu0 %v139
  %504 = vmatpush1.msra.mxu0 %v138
  %505 = vmatprep.subr.mxu0 %v143
  %506 = vmatpush1.msra.mxu0 %v142
  %507 = vmatprep.subr.mxu0 %v147
  %508 = vmatpush1.msra.mxu0 %v146
  %509 = vmatprep.subr.mxu0 %v151
  %510 = vmatpush1.msra.mxu0 %v150
  %511 = vmatprep.subr.mxu0 %v155
  %512 = vmatpush1.msra.mxu0 %v154
  %513 = vmatprep.subr.mxu0 %v159
  %514 = vmatpush1.msra.mxu0 %v158
  %515 = vmatprep.subr.mxu0 %v163
  %516 = vmatpush1.msra.mxu0 %v162
  %517 = vmatprep.subr.mxu0 %v167
  %518 = vmatpush1.msra.mxu0 %v166
  %519 = vmatprep.subr.mxu0 0.0
  %520 = vmatpush1.msra.mxu0 0.0
  %521 = vmatprep.subr.mxu0 0.0
  %522 = vmatpush1.msra.mxu0 0.0
  %523 = vmatprep.subr.mxu0 0.0
  %524 = vmatpush1.msra.mxu0 0.0
  %525 = vmatprep.subr.mxu0 0.0
  %526 = vmatpush1.msra.mxu0 0.0
  %527 = vmatprep.subr.mxu0 0.0
  %528 = vmatpush1.msra.mxu0 0.0
  %529 = vmatprep.subr.mxu0 0.0
  %530 = vmatpush1.msra.mxu0 0.0
  %531 = vmatprep.subr.mxu0 0.0
  %532 = vmatpush1.msra.mxu0 0.0
  %533 = vmatprep.subr.mxu0 0.0
  %534 = vmatpush1.msra.mxu0 0.0
  %535 = vmatprep.subr.mxu0 0.0
  %536 = vmatpush1.msra.mxu0 0.0
  %537 = vmatprep.subr.mxu0 0.0
  %538 = vmatpush1.msra.mxu0 0.0
  %539 = vmatprep.subr.mxu0 0.0
  %540 = vmatpush1.msra.mxu0 0.0
  %541 = vmatprep.subr.mxu0 0.0
  %542 = vmatpush1.msra.mxu0 0.0
  %543 = vmatprep.subr.mxu0 0.0
  %544 = vmatpush1.msra.mxu0 0.0
  %545 = vmatprep.subr.mxu0 0.0
  %546 = vmatpush1.msra.mxu0 0.0
  %547 = vmatprep.subr.mxu0 0.0
  %548 = vmatpush1.msra.mxu0 0.0
  %549 = vmatprep.subr.mxu0 0.0
  %550 = vmatpush1.msra.mxu0 0.0
  %551 = vmatprep.mubr.f32.mxu0 0.0
  %552 = vmatmul.mubr.f32.gmra.mrb[0].mxu0 0.0
  %v553 = vpop.f32.mrb[0].mxu0
  %v554 = vadd.f32 0.0, %v553
  %v555 = vpop.f32.mrb[0].mxu0
  %v556 = vadd.f32 0.0, %v555
  %557 = vdwg.mxu0
  %v558 = vadd.f32 %v257, %v483
  %v559 = vadd.f32 %v259, %v485
  %v560 = vadd.f32 %v370, %v554
  %v561 = vadd.f32 %v372, %v556
  %v562 = vxor.u32 %v558, 2147483648
  %v563 = vmul.f32 %v562, 1.442695
  %v564 = vpow.pop %v563
  %v565 = vadd.f32 %v564, 1.0
  %v566 = vrcp.pop %v565
  %v567 = vmul.f32 1.0, %v566
  %v568 = vxor.u32 %v559, 2147483648
  %v569 = vmul.f32 %v568, 1.442695
  %v570 = vpow.pop %v569
  %v571 = vadd.f32 %v570, 1.0
  %v572 = vrcp.pop %v571
  %v573 = vmul.f32 1.0, %v572
  %v574 = vtanh.pop %v560
  %v575 = vxor.u32 %v561, 2147483648
  %v576 = vmul.f32 %v575, 1.442695
  %v577 = vpow.pop %v576
  %v578 = vadd.f32 %v577, 1.0
  %v579 = vrcp.pop %v578
  %v580 = vmul.f32 1.0, %v579
  %v581 = vmul.f32 %v573, 0.0
  %v582 = vmul.f32 %v567, %v574
  %v583 = vadd.f32 %v581, %v582
  %v584 = vtanh.pop %v583
  %v585 = vmul.f32 %v580, %v584
  %586 = vst [vmem:[#allocation2] sm:$0xff] %v585
  %587 = vmatprep.subr.mxu0 %v105
  %588 = vmatpush1.msra.mxu0 %v104
  %589 = vmatprep.subr.mxu0 %v109
  %590 = vmatpush1.msra.mxu0 %v108
  %591 = vmatprep.subr.mxu0 %v113
  %592 = vmatpush1.msra.mxu0 %v112
  %593 = vmatprep.subr.mxu0 %v117
  %594 = vmatpush1.msra.mxu0 %v116
  %595 = vmatprep.subr.mxu0 %v121
  %596 = vmatpush1.msra.mxu0 %v120
  %597 = vmatprep.subr.mxu0 %v125
  %598 = vmatpush1.msra.mxu0 %v124
  %599 = vmatprep.subr.mxu0 %v129
  %600 = vmatpush1.msra.mxu0 %v128
  %601 = vmatprep.subr.mxu0 %v133
  %602 = vmatpush1.msra.mxu0 %v132
  %603 = vmatprep.subr.mxu0 %v137
  %604 = vmatpush1.msra.mxu0 %v136
  %605 = vmatprep.subr.mxu0 %v141
  %606 = vmatpush1.msra.mxu0 %v140
  %607 = vmatprep.subr.mxu0 %v145
  %608 = vmatpush1.msra.mxu0 %v144
  %609 = vmatprep.subr.mxu0 %v149
  %610 = vmatpush1.msra.mxu0 %v148
  %611 = vmatprep.subr.mxu0 %v153
  %612 = vmatpush1.msra.mxu0 %v152
  %613 = vmatprep.subr.mxu0 %v157
  %614 = vmatpush1.msra.mxu0 %v156
  %615 = vmatprep.subr.mxu0 %v161
  %616 = vmatpush1.msra.mxu0 %v160
  %617 = vmatprep.subr.mxu0 %v165
  %618 = vmatpush1.msra.mxu0 %v164
  %619 = vmatprep.subr.mxu0 0.0
  %620 = vmatpush1.msra.mxu0 0.0
  %621 = vmatprep.subr.mxu0 0.0
  %622 = vmatpush1.msra.mxu0 0.0
  %623 = vmatprep.subr.mxu0 0.0
  %624 = vmatpush1.msra.mxu0 0.0
  %625 = vmatprep.subr.mxu0 0.0
  %626 = vmatpush1.msra.mxu0 0.0
  %627 = vmatprep.subr.mxu0 0.0
  %628 = vmatpush1.msra.mxu0 0.0
  %629 = vmatprep.subr.mxu0 0.0
  %630 = vmatpush1.msra.mxu0 0.0
  %631 = vmatprep.subr.mxu0 0.0
  %632 = vmatpush1.msra.mxu0 0.0
  %633 = vmatprep.subr.mxu0 0.0
  %634 = vmatpush1.msra.mxu0 0.0
  %635 = vmatprep.subr.mxu0 0.0
  %636 = vmatpush1.msra.mxu0 0.0
  %637 = vmatprep.subr.mxu0 0.0
  %638 = vmatpush1.msra.mxu0 0.0
  %639 = vmatprep.subr.mxu0 0.0
  %640 = vmatpush1.msra.mxu0 0.0
  %641 = vmatprep.subr.mxu0 0.0
  %642 = vmatpush1.msra.mxu0 0.0
  %643 = vmatprep.subr.mxu0 0.0
  %644 = vmatpush1.msra.mxu0 0.0
  %645 = vmatprep.subr.mxu0 0.0
  %646 = vmatpush1.msra.mxu0 0.0
  %647 = vmatprep.subr.mxu0 0.0
  %648 = vmatpush1.msra.mxu0 0.0
  %649 = vmatprep.subr.mxu0 0.0
  %650 = vmatpush1.msra.mxu0 0.0
  %651 = vmatprep.mubr.f32.mxu0 0.0
  %652 = vmatmul.mubr.f32.gmra.mrb[0].mxu0 %v585
  %v653 = vpop.f32.mrb[0].mxu0
  %v654 = vadd.f32 0.0, %v653
  %v655 = vpop.f32.mrb[0].mxu0
  %v656 = vadd.f32 0.0, %v655
  %657 = vdwg.mxu0
  %658 = vmatprep.subr.mxu0 %v107
  %659 = vmatpush1.msra.mxu0 %v106
  %660 = vmatprep.subr.mxu0 %v111
  %661 = vmatpush1.msra.mxu0 %v110
  %662 = vmatprep.subr.mxu0 %v115
  %663 = vmatpush1.msra.mxu0 %v114
  %664 = vmatprep.subr.mxu0 %v119
  %665 = vmatpush1.msra.mxu0 %v118
  %666 = vmatprep.subr.mxu0 %v123
  %667 = vmatpush1.msra.mxu0 %v122
  %668 = vmatprep.subr.mxu0 %v127
  %669 = vmatpush1.msra.mxu0 %v126
  %670 = vmatprep.subr.mxu0 %v131
  %671 = vmatpush1.msra.mxu0 %v130
  %672 = vmatprep.subr.mxu0 %v135
  %673 = vmatpush1.msra.mxu0 %v134
  %674 = vmatprep.subr.mxu0 %v139
  %675 = vmatpush1.msra.mxu0 %v138
  %676 = vmatprep.subr.mxu0 %v143
  %677 = vmatpush1.msra.mxu0 %v142
  %678 = vmatprep.subr.mxu0 %v147
  %679 = vmatpush1.msra.mxu0 %v146
  %680 = vmatprep.subr.mxu0 %v151
  %681 = vmatpush1.msra.mxu0 %v150
  %682 = vmatprep.subr.mxu0 %v155
  %683 = vmatpush1.msra.mxu0 %v154
  %684 = vmatprep.subr.mxu0 %v159
  %685 = vmatpush1.msra.mxu0 %v158
  %686 = vmatprep.subr.mxu0 %v163
  %687 = vmatpush1.msra.mxu0 %v162
  %688 = vmatprep.subr.mxu0 %v167
  %689 = vmatpush1.msra.mxu0 %v166
  %690 = vmatprep.subr.mxu0 0.0
  %691 = vmatpush1.msra.mxu0 0.0
  %692 = vmatprep.subr.mxu0 0.0
  %693 = vmatpush1.msra.mxu0 0.0
  %694 = vmatprep.subr.mxu0 0.0
  %695 = vmatpush1.msra.mxu0 0.0
  %696 = vmatprep.subr.mxu0 0.0
  %697 = vmatpush1.msra.mxu0 0.0
  %698 = vmatprep.subr.mxu0 0.0
  %699 = vmatpush1.msra.mxu0 0.0
  %700 = vmatprep.subr.mxu0 0.0
  %701 = vmatpush1.msra.mxu0 0.0
  %702 = vmatprep.subr.mxu0 0.0
  %703 = vmatpush1.msra.mxu0 0.0
  %704 = vmatprep.subr.mxu0 0.0
  %705 = vmatpush1.msra.mxu0 0.0
  %706 = vmatprep.subr.mxu0 0.0
  %707 = vmatpush1.msra.mxu0 0.0
  %708 = vmatprep.subr.mxu0 0.0
  %709 = vmatpush1.msra.mxu0 0.0
  %710 = vmatprep.subr.mxu0 0.0
  %711 = vmatpush1.msra.mxu0 0.0
  %712 = vmatprep.subr.mxu0 0.0
  %713 = vmatpush1.msra.mxu0 0.0
  %714 = vmatprep.subr.mxu0 0.0
  %715 = vmatpush1.msra.mxu0 0.0
  %716 = vmatprep.subr.mxu0 0.0
  %717 = vmatpush1.msra.mxu0 0.0
  %718 = vmatprep.subr.mxu0 0.0
  %719 = vmatpush1.msra.mxu0 0.0
  %720 = vmatprep.subr.mxu0 0.0
  %721 = vmatpush1.msra.mxu0 0.0
  %722 = vmatprep.mubr.f32.mxu0 0.0
  %723 = vmatmul.mubr.f32.gmra.mrb[0].mxu0 %v585
  %v724 = vpop.f32.mrb[0].mxu0
  %v725 = vadd.f32 0.0, %v724
  %v726 = vpop.f32.mrb[0].mxu0
  %v727 = vadd.f32 0.0, %v726
  %728 = vdwg.mxu0
  %v729 = vadd.f32 %v263, %v654
  %v730 = vadd.f32 %v265, %v656
  %v731 = vadd.f32 %v376, %v725
  %v732 = vadd.f32 %v378, %v727
  %v733 = vxor.u32 %v729, 2147483648
  %v734 = vmul.f32 %v733, 1.442695
  %v735 = vpow.pop %v734
  %v736 = vadd.f32 %v735, 1.0
  %v737 = vrcp.pop %v736
  %v738 = vmul.f32 1.0, %v737
  %v739 = vxor.u32 %v730, 2147483648
  %v740 = vmul.f32 %v739, 1.442695
  %v741 = vpow.pop %v740
  %v742 = vadd.f32 %v741, 1.0
  %v743 = vrcp.pop %v742
  %v744 = vmul.f32 1.0, %v743
  %v745 = vtanh.pop %v731
  %v746 = vxor.u32 %v732, 2147483648
  %v747 = vmul.f32 %v746, 1.442695
  %v748 = vpow.pop %v747
  %v749 = vadd.f32 %v748, 1.0
  %v750 = vrcp.pop %v749
  %v751 = vmul.f32 1.0, %v750
  %v752 = vmul.f32 %v744, %v583
  %v753 = vmul.f32 %v738, %v745
  %v754 = vadd.f32 %v752, %v753
  %v755 = vtanh.pop %v754
  %v756 = vmul.f32 %v751, %v755
  %757 = vst [vmem:[#allocation2 + $0x8] sm:$0xff] %v756
  %758 = vmatprep.subr.mxu0 %v105
  %759 = vmatpush1.msra.mxu0 %v104
  %760 = vmatprep.subr.mxu0 %v109
  %761 = vmatpush1.msra.mxu0 %v108
  %762 = vmatprep.subr.mxu0 %v113
  %763 = vmatpush1.msra.mxu0 %v112
  %764 = vmatprep.subr.mxu0 %v117
  %765 = vmatpush1.msra.mxu0 %v116
  %766 = vmatprep.subr.mxu0 %v121
  %767 = vmatpush1.msra.mxu0 %v120
  %768 = vmatprep.subr.mxu0 %v125
  %769 = vmatpush1.msra.mxu0 %v124
  %770 = vmatprep.subr.mxu0 %v129
  %771 = vmatpush1.msra.mxu0 %v128
  %772 = vmatprep.subr.mxu0 %v133
  %773 = vmatpush1.msra.mxu0 %v132
  %774 = vmatprep.subr.mxu0 %v137
  %775 = vmatpush1.msra.mxu0 %v136
  %776 = vmatprep.subr.mxu0 %v141
  %777 = vmatpush1.msra.mxu0 %v140
  %778 = vmatprep.subr.mxu0 %v145
  %779 = vmatpush1.msra.mxu0 %v144
  %780 = vmatprep.subr.mxu0 %v149
  %781 = vmatpush1.msra.mxu0 %v148
  %782 = vmatprep.subr.mxu0 %v153
  %783 = vmatpush1.msra.mxu0 %v152
  %784 = vmatprep.subr.mxu0 %v157
  %785 = vmatpush1.msra.mxu0 %v156
  %786 = vmatprep.subr.mxu0 %v161
  %787 = vmatpush1.msra.mxu0 %v160
  %788 = vmatprep.subr.mxu0 %v165
  %789 = vmatpush1.msra.mxu0 %v164
  %790 = vmatprep.subr.mxu0 0.0
  %791 = vmatpush1.msra.mxu0 0.0
  %792 = vmatprep.subr.mxu0 0.0
  %793 = vmatpush1.msra.mxu0 0.0
  %794 = vmatprep.subr.mxu0 0.0
  %795 = vmatpush1.msra.mxu0 0.0
  %796 = vmatprep.subr.mxu0 0.0
  %797 = vmatpush1.msra.mxu0 0.0
  %798 = vmatprep.subr.mxu0 0.0
  %799 = vmatpush1.msra.mxu0 0.0
  %800 = vmatprep.subr.mxu0 0.0
  %801 = vmatpush1.msra.mxu0 0.0
  %802 = vmatprep.subr.mxu0 0.0
  %803 = vmatpush1.msra.mxu0 0.0
  %804 = vmatprep.subr.mxu0 0.0
  %805 = vmatpush1.msra.mxu0 0.0
  %806 = vmatprep.subr.mxu0 0.0
  %807 = vmatpush1.msra.mxu0 0.0
  %808 = vmatprep.subr.mxu0 0.0
  %809 = vmatpush1.msra.mxu0 0.0
  %810 = vmatprep.subr.mxu0 0.0
  %811 = vmatpush1.msra.mxu0 0.0
  %812 = vmatprep.subr.mxu0 0.0
  %813 = vmatpush1.msra.mxu0 0.0
  %814 = vmatprep.subr.mxu0 0.0
  %815 = vmatpush1.msra.mxu0 0.0
  %816 = vmatprep.subr.mxu0 0.0
  %817 = vmatpush1.msra.mxu0 0.0
  %818 = vmatprep.subr.mxu0 0.0
  %819 = vmatpush1.msra.mxu0 0.0
  %820 = vmatprep.subr.mxu0 0.0
  %821 = vmatpush1.msra.mxu0 0.0
  %822 = vmatprep.mubr.f32.mxu0 0.0
  %823 = vmatmul.mubr.f32.gmra.mrb[0].mxu0 %v756
  %v824 = vpop.f32.mrb[0].mxu0
  %v825 = vadd.f32 0.0, %v824
  %v826 = vpop.f32.mrb[0].mxu0
  %v827 = vadd.f32 0.0, %v826
  %828 = vdwg.mxu0
  %829 = vmatprep.subr.mxu0 %v107
  %830 = vmatpush1.msra.mxu0 %v106
  %831 = vmatprep.subr.mxu0 %v111
  %832 = vmatpush1.msra.mxu0 %v110
  %833 = vmatprep.subr.mxu0 %v115
  %834 = vmatpush1.msra.mxu0 %v114
  %835 = vmatprep.subr.mxu0 %v119
  %836 = vmatpush1.msra.mxu0 %v118
  %837 = vmatprep.subr.mxu0 %v123
  %838 = vmatpush1.msra.mxu0 %v122
  %839 = vmatprep.subr.mxu0 %v127
  %840 = vmatpush1.msra.mxu0 %v126
  %841 = vmatprep.subr.mxu0 %v131
  %842 = vmatpush1.msra.mxu0 %v130
  %843 = vmatprep.subr.mxu0 %v135
  %844 = vmatpush1.msra.mxu0 %v134
  %845 = vmatprep.subr.mxu0 %v139
  %846 = vmatpush1.msra.mxu0 %v138
  %847 = vmatprep.subr.mxu0 %v143
  %848 = vmatpush1.msra.mxu0 %v142
  %849 = vmatprep.subr.mxu0 %v147
  %850 = vmatpush1.msra.mxu0 %v146
  %851 = vmatprep.subr.mxu0 %v151
  %852 = vmatpush1.msra.mxu0 %v150
  %853 = vmatprep.subr.mxu0 %v155
  %854 = vmatpush1.msra.mxu0 %v154
  %855 = vmatprep.subr.mxu0 %v159
  %856 = vmatpush1.msra.mxu0 %v158
  %857 = vmatprep.subr.mxu0 %v163
  %858 = vmatpush1.msra.mxu0 %v162
  %859 = vmatprep.subr.mxu0 %v167
  %860 = vmatpush1.msra.mxu0 %v166
  %861 = vmatprep.subr.mxu0 0.0
  %862 = vmatpush1.msra.mxu0 0.0
  %863 = vmatprep.subr.mxu0 0.0
  %864 = vmatpush1.msra.mxu0 0.0
  %865 = vmatprep.subr.mxu0 0.0
  %866 = vmatpush1.msra.mxu0 0.0
  %867 = vmatprep.subr.mxu0 0.0
  %868 = vmatpush1.msra.mxu0 0.0
  %869 = vmatprep.subr.mxu0 0.0
  %870 = vmatpush1.msra.mxu0 0.0
  %871 = vmatprep.subr.mxu0 0.0
  %872 = vmatpush1.msra.mxu0 0.0
  %873 = vmatprep.subr.mxu0 0.0
  %874 = vmatpush1.msra.mxu0 0.0
  %875 = vmatprep.subr.mxu0 0.0
  %876 = vmatpush1.msra.mxu0 0.0
  %877 = vmatprep.subr.mxu0 0.0
  %878 = vmatpush1.msra.mxu0 0.0
  %879 = vmatprep.subr.mxu0 0.0
  %880 = vmatpush1.msra.mxu0 0.0
  %881 = vmatprep.subr.mxu0 0.0
  %882 = vmatpush1.msra.mxu0 0.0
  %883 = vmatprep.subr.mxu0 0.0
  %884 = vmatpush1.msra.mxu0 0.0
  %885 = vmatprep.subr.mxu0 0.0
  %886 = vmatpush1.msra.mxu0 0.0
  %887 = vmatprep.subr.mxu0 0.0
  %888 = vmatpush1.msra.mxu0 0.0
  %889 = vmatprep.subr.mxu0 0.0
  %890 = vmatpush1.msra.mxu0 0.0
  %891 = vmatprep.subr.mxu0 0.0
  %892 = vmatpush1.msra.mxu0 0.0
  %893 = vmatprep.mubr.f32.mxu0 0.0
  %894 = vmatmul.mubr.f32.gmra.mrb[0].mxu0 %v756
  %v895 = vpop.f32.mrb[0].mxu0
  %v896 = vadd.f32 0.0, %v895
  %v897 = vpop.f32.mrb[0].mxu0
  %v898 = vadd.f32 0.0, %v897
  %899 = vdwg.mxu0
  %v900 = vadd.f32 %v269, %v825
  %v901 = vadd.f32 %v271, %v827
  %v902 = vadd.f32 %v382, %v896
  %v903 = vadd.f32 %v384, %v898
  %v904 = vxor.u32 %v900, 2147483648
  %v905 = vmul.f32 %v904, 1.442695
  %v906 = vpow.pop %v905
  %v907 = vadd.f32 %v906, 1.0
  %v908 = vrcp.pop %v907
  %v909 = vmul.f32 1.0, %v908
  %v910 = vxor.u32 %v901, 2147483648
  %v911 = vmul.f32 %v910, 1.442695
  %v912 = vpow.pop %v911
  %v913 = vadd.f32 %v912, 1.0
  %v914 = vrcp.pop %v913
  %v915 = vmul.f32 1.0, %v914
  %v916 = vtanh.pop %v902
  %v917 = vxor.u32 %v903, 2147483648
  %v918 = vmul.f32 %v917, 1.442695
  %v919 = vpow.pop %v918
  %v920 = vadd.f32 %v919, 1.0
  %v921 = vrcp.pop %v920
  %v922 = vmul.f32 1.0, %v921
  %v923 = vmul.f32 %v915, %v754
  %v924 = vmul.f32 %v909, %v916
  %v925 = vadd.f32 %v923, %v924
  %v926 = vtanh.pop %v925
  %v927 = vmul.f32 %v922, %v926
  %928 = vst [vmem:[#allocation2 + $0x10] sm:$0xff] %v927
  %929 = vmatprep.subr.mxu0 %v105
  %930 = vmatpush1.msra.mxu0 %v104
  %931 = vmatprep.subr.mxu0 %v109
  %932 = vmatpush1.msra.mxu0 %v108
  %933 = vmatprep.subr.mxu0 %v113
  %934 = vmatpush1.msra.mxu0 %v112
  %935 = vmatprep.subr.mxu0 %v117
  %936 = vmatpush1.msra.mxu0 %v116
  %937 = vmatprep.subr.mxu0 %v121
  %938 = vmatpush1.msra.mxu0 %v120
  %939 = vmatprep.subr.mxu0 %v125
  %940 = vmatpush1.msra.mxu0 %v124
  %941 = vmatprep.subr.mxu0 %v129
  %942 = vmatpush1.msra.mxu0 %v128
  %943 = vmatprep.subr.mxu0 %v133
  %944 = vmatpush1.msra.mxu0 %v132
  %945 = vmatprep.subr.mxu0 %v137
  %946 = vmatpush1.msra.mxu0 %v136
  %947 = vmatprep.subr.mxu0 %v141
  %948 = vmatpush1.msra.mxu0 %v140
  %949 = vmatprep.subr.mxu0 %v145
  %950 = vmatpush1.msra.mxu0 %v144
  %951 = vmatprep.subr.mxu0 %v149
  %952 = vmatpush1.msra.mxu0 %v148
  %953 = vmatprep.subr.mxu0 %v153
  %954 = vmatpush1.msra.mxu0 %v152
  %955 = vmatprep.subr.mxu0 %v157
  %956 = vmatpush1.msra.mxu0 %v156
  %957 = vmatprep.subr.mxu0 %v161
  %958 = vmatpush1.msra.mxu0 %v160
  %959 = vmatprep.subr.mxu0 %v165
  %960 = vmatpush1.msra.mxu0 %v164
  %961 = vmatprep.subr.mxu0 0.0
  %962 = vmatpush1.msra.mxu0 0.0
  %963 = vmatprep.subr.mxu0 0.0
  %964 = vmatpush1.msra.mxu0 0.0
  %965 = vmatprep.subr.mxu0 0.0
  %966 = vmatpush1.msra.mxu0 0.0
  %967 = vmatprep.subr.mxu0 0.0
  %968 = vmatpush1.msra.mxu0 0.0
  %969 = vmatprep.subr.mxu0 0.0
  %970 = vmatpush1.msra.mxu0 0.0
  %971 = vmatprep.subr.mxu0 0.0
  %972 = vmatpush1.msra.mxu0 0.0
  %973 = vmatprep.subr.mxu0 0.0
  %974 = vmatpush1.msra.mxu0 0.0
  %975 = vmatprep.subr.mxu0 0.0
  %976 = vmatpush1.msra.mxu0 0.0
  %977 = vmatprep.subr.mxu0 0.0
  %978 = vmatpush1.msra.mxu0 0.0
  %979 = vmatprep.subr.mxu0 0.0
  %980 = vmatpush1.msra.mxu0 0.0
  %981 = vmatprep.subr.mxu0 0.0
  %982 = vmatpush1.msra.mxu0 0.0
  %983 = vmatprep.subr.mxu0 0.0
  %984 = vmatpush1.msra.mxu0 0.0
  %985 = vmatprep.subr.mxu0 0.0
  %986 = vmatpush1.msra.mxu0 0.0
  %987 = vmatprep.subr.mxu0 0.0
  %988 = vmatpush1.msra.mxu0 0.0
  %989 = vmatprep.subr.mxu0 0.0
  %990 = vmatpush1.msra.mxu0 0.0
  %991 = vmatprep.subr.mxu0 0.0
  %992 = vmatpush1.msra.mxu0 0.0
  %993 = vmatprep.mubr.f32.mxu0 0.0
  %994 = vmatmul.mubr.f32.gmra.mrb[0].mxu0 %v927
  %v995 = vpop.f32.mrb[0].mxu0
  %v996 = vadd.f32 0.0, %v995
  %v997 = vpop.f32.mrb[0].mxu0
  %v998 = vadd.f32 0.0, %v997
  %999 = vdwg.mxu0
  %1000 = vmatprep.subr.mxu0 %v107
  %1001 = vmatpush1.msra.mxu0 %v106
  %1002 = vmatprep.subr.mxu0 %v111
  %1003 = vmatpush1.msra.mxu0 %v110
  %1004 = vmatprep.subr.mxu0 %v115
  %1005 = vmatpush1.msra.mxu0 %v114
  %1006 = vmatprep.subr.mxu0 %v119
  %1007 = vmatpush1.msra.mxu0 %v118
  %1008 = vmatprep.subr.mxu0 %v123
  %1009 = vmatpush1.msra.mxu0 %v122
  %1010 = vmatprep.subr.mxu0 %v127
  %1011 = vmatpush1.msra.mxu0 %v126
  %1012 = vmatprep.subr.mxu0 %v131
  %1013 = vmatpush1.msra.mxu0 %v130
  %1014 = vmatprep.subr.mxu0 %v135
  %1015 = vmatpush1.msra.mxu0 %v134
  %1016 = vmatprep.subr.mxu0 %v139
  %1017 = vmatpush1.msra.mxu0 %v138
  %1018 = vmatprep.subr.mxu0 %v143
  %1019 = vmatpush1.msra.mxu0 %v142
  %1020 = vmatprep.subr.mxu0 %v147
  %1021 = vmatpush1.msra.mxu0 %v146
  %1022 = vmatprep.subr.mxu0 %v151
  %1023 = vmatpush1.msra.mxu0 %v150
  %1024 = vmatprep.subr.mxu0 %v155
  %1025 = vmatpush1.msra.mxu0 %v154
  %1026 = vmatprep.subr.mxu0 %v159
  %1027 = vmatpush1.msra.mxu0 %v158
  %1028 = vmatprep.subr.mxu0 %v163
  %1029 = vmatpush1.msra.mxu0 %v162
  %1030 = vmatprep.subr.mxu0 %v167
  %1031 = vmatpush1.msra.mxu0 %v166
  %1032 = vmatprep.subr.mxu0 0.0
  %1033 = vmatpush1.msra.mxu0 0.0
  %1034 = vmatprep.subr.mxu0 0.0
  %1035 = vmatpush1.msra.mxu0 0.0
  %1036 = vmatprep.subr.mxu0 0.0
  %1037 = vmatpush1.msra.mxu0 0.0
  %1038 = vmatprep.subr.mxu0 0.0
  %1039 = vmatpush1.msra.mxu0 0.0
  %1040 = vmatprep.subr.mxu0 0.0
  %1041 = vmatpush1.msra.mxu0 0.0
  %1042 = vmatprep.subr.mxu0 0.0
  %1043 = vmatpush1.msra.mxu0 0.0
  %1044 = vmatprep.subr.mxu0 0.0
  %1045 = vmatpush1.msra.mxu0 0.0
  %1046 = vmatprep.subr.mxu0 0.0
  %1047 = vmatpush1.msra.mxu0 0.0
  %1048 = vmatprep.subr.mxu0 0.0
  %1049 = vmatpush1.msra.mxu0 0.0
  %1050 = vmatprep.subr.mxu0 0.0
  %1051 = vmatpush1.msra.mxu0 0.0
  %1052 = vmatprep.subr.mxu0 0.0
  %1053 = vmatpush1.msra.mxu0 0.0
  %1054 = vmatprep.subr.mxu0 0.0
  %1055 = vmatpush1.msra.mxu0 0.0
  %1056 = vmatprep.subr.mxu0 0.0
  %1057 = vmatpush1.msra.mxu0 0.0
  %1058 = vmatprep.subr.mxu0 0.0
  %1059 = vmatpush1.msra.mxu0 0.0
  %1060 = vmatprep.subr.mxu0 0.0
  %1061 = vmatpush1.msra.mxu0 0.0
  %1062 = vmatprep.subr.mxu0 0.0
  %1063 = vmatpush1.msra.mxu0 0.0
  %1064 = vmatprep.mubr.f32.mxu0 0.0
  %1065 = vmatmul.mubr.f32.gmra.mrb[0].mxu0 %v927
  %v1066 = vpop.f32.mrb[0].mxu0
  %v1067 = vadd.f32 0.0, %v1066
  %v1068 = vpop.f32.mrb[0].mxu0
  %v1069 = vadd.f32 0.0, %v1068
  %1070 = vdwg.mxu0
  %v1071 = vadd.f32 %v275, %v996
  %v1072 = vadd.f32 %v277, %v998
  %v1073 = vadd.f32 %v388, %v1067
  %v1074 = vadd.f32 %v390, %v1069
  %v1075 = vxor.u32 %v1071, 2147483648
  %v1076 = vmul.f32 %v1075, 1.442695
  %v1077 = vpow.pop %v1076
  %v1078 = vadd.f32 %v1077, 1.0
  %v1079 = vrcp.pop %v1078
  %v1080 = vmul.f32 1.0, %v1079
  %v1081 = vxor.u32 %v1072, 2147483648
  %v1082 = vmul.f32 %v1081, 1.442695
  %v1083 = vpow.pop %v1082
  %v1084 = vadd.f32 %v1083, 1.0
  %v1085 = vrcp.pop %v1084
  %v1086 = vmul.f32 1.0, %v1085
  %v1087 = vtanh.pop %v1073
  %v1088 = vxor.u32 %v1074, 2147483648
  %v1089 = vmul.f32 %v1088, 1.442695
  %v1090 = vpow.pop %v1089
  %v1091 = vadd.f32 %v1090, 1.0
  %v1092 = vrcp.pop %v1091
  %v1093 = vmul.f32 1.0, %v1092
  %v1094 = vmul.f32 %v1086, %v925
  %v1095 = vmul.f32 %v1080, %v1087
  %v1096 = vadd.f32 %v1094, %v1095
  %v1097 = vtanh.pop %v1096
  %v1098 = vmul.f32 %v1093, %v1097
  %1099 = vst [vmem:[#allocation2 + $0x18] sm:$0xff] %v1098
  %1100 = vmatprep.subr.mxu0 %v105
  %1101 = vmatpush1.msra.mxu0 %v104
  %1102 = vmatprep.subr.mxu0 %v109
  %1103 = vmatpush1.msra.mxu0 %v108
  %1104 = vmatprep.subr.mxu0 %v113
  %1105 = vmatpush1.msra.mxu0 %v112
  %1106 = vmatprep.subr.mxu0 %v117
  %1107 = vmatpush1.msra.mxu0 %v116
  %1108 = vmatprep.subr.mxu0 %v121
  %1109 = vmatpush1.msra.mxu0 %v120
  %1110 = vmatprep.subr.mxu0 %v125
  %1111 = vmatpush1.msra.mxu0 %v124
  %1112 = vmatprep.subr.mxu0 %v129
  %1113 = vmatpush1.msra.mxu0 %v128
  %1114 = vmatprep.subr.mxu0 %v133
  %1115 = vmatpush1.msra.mxu0 %v132
  %1116 = vmatprep.subr.mxu0 %v137
  %1117 = vmatpush1.msra.mxu0 %v136
  %1118 = vmatprep.subr.mxu0 %v141
  %1119 = vmatpush1.msra.mxu0 %v140
  %1120 = vmatprep.subr.mxu0 %v145
  %1121 = vmatpush1.msra.mxu0 %v144
  %1122 = vmatprep.subr.mxu0 %v149
  %1123 = vmatpush1.msra.mxu0 %v148
  %1124 = vmatprep.subr.mxu0 %v153
  %1125 = vmatpush1.msra.mxu0 %v152
  %1126 = vmatprep.subr.mxu0 %v157
  %1127 = vmatpush1.msra.mxu0 %v156
  %1128 = vmatprep.subr.mxu0 %v161
  %1129 = vmatpush1.msra.mxu0 %v160
  %1130 = vmatprep.subr.mxu0 %v165
  %1131 = vmatpush1.msra.mxu0 %v164
  %1132 = vmatprep.subr.mxu0 0.0
  %1133 = vmatpush1.msra.mxu0 0.0
  %1134 = vmatprep.subr.mxu0 0.0
  %1135 = vmatpush1.msra.mxu0 0.0
  %1136 = vmatprep.subr.mxu0 0.0
  %1137 = vmatpush1.msra.mxu0 0.0
  %1138 = vmatprep.subr.mxu0 0.0
  %1139 = vmatpush1.msra.mxu0 0.0
  %1140 = vmatprep.subr.mxu0 0.0
  %1141 = vmatpush1.msra.mxu0 0.0
  %1142 = vmatprep.subr.mxu0 0.0
  %1143 = vmatpush1.msra.mxu0 0.0
  %1144 = vmatprep.subr.mxu0 0.0
  %1145 = vmatpush1.msra.mxu0 0.0
  %1146 = vmatprep.subr.mxu0 0.0
  %1147 = vmatpush1.msra.mxu0 0.0
  %1148 = vmatprep.subr.mxu0 0.0
  %1149 = vmatpush1.msra.mxu0 0.0
  %1150 = vmatprep.subr.mxu0 0.0
  %1151 = vmatpush1.msra.mxu0 0.0
  %1152 = vmatprep.subr.mxu0 0.0
  %1153 = vmatpush1.msra.mxu0 0.0
  %1154 = vmatprep.subr.mxu0 0.0
  %1155 = vmatpush1.msra.mxu0 0.0
  %1156 = vmatprep.subr.mxu0 0.0
  %1157 = vmatpush1.msra.mxu0 0.0
  %1158 = vmatprep.subr.mxu0 0.0
  %1159 = vmatpush1.msra.mxu0 0.0
  %1160 = vmatprep.subr.mxu0 0.0
  %1161 = vmatpush1.msra.mxu0 0.0
  %1162 = vmatprep.subr.mxu0 0.0
  %1163 = vmatpush1.msra.mxu0 0.0
  %1164 = vmatprep.mubr.f32.mxu0 0.0
  %1165 = vmatmul.mubr.f32.gmra.mrb[0].mxu0 %v1098
  %v1166 = vpop.f32.mrb[0].mxu0
  %v1167 = vadd.f32 0.0, %v1166
  %v1168 = vpop.f32.mrb[0].mxu0
  %v1169 = vadd.f32 0.0, %v1168
  %1170 = vdwg.mxu0
  %1171 = vmatprep.subr.mxu0 %v107
  %1172 = vmatpush1.msra.mxu0 %v106
  %1173 = vmatprep.subr.mxu0 %v111
  %1174 = vmatpush1.msra.mxu0 %v110
  %1175 = vmatprep.subr.mxu0 %v115
  %1176 = vmatpush1.msra.mxu0 %v114
  %1177 = vmatprep.subr.mxu0 %v119
  %1178 = vmatpush1.msra.mxu0 %v118
  %1179 = vmatprep.subr.mxu0 %v123
  %1180 = vmatpush1.msra.mxu0 %v122
  %1181 = vmatprep.subr.mxu0 %v127
  %1182 = vmatpush1.msra.mxu0 %v126
  %1183 = vmatprep.subr.mxu0 %v131
  %1184 = vmatpush1.msra.mxu0 %v130
  %1185 = vmatprep.subr.mxu0 %v135
  %1186 = vmatpush1.msra.mxu0 %v134
  %1187 = vmatprep.subr.mxu0 %v139
  %1188 = vmatpush1.msra.mxu0 %v138
  %1189 = vmatprep.subr.mxu0 %v143
  %1190 = vmatpush1.msra.mxu0 %v142
  %1191 = vmatprep.subr.mxu0 %v147
  %1192 = vmatpush1.msra.mxu0 %v146
  %1193 = vmatprep.subr.mxu0 %v151
  %1194 = vmatpush1.msra.mxu0 %v150
  %1195 = vmatprep.subr.mxu0 %v155
  %1196 = vmatpush1.msra.mxu0 %v154
  %1197 = vmatprep.subr.mxu0 %v159
  %1198 = vmatpush1.msra.mxu0 %v158
  %1199 = vmatprep.subr.mxu0 %v163
  %1200 = vmatpush1.msra.mxu0 %v162
  %1201 = vmatprep.subr.mxu0 %v167
  %1202 = vmatpush1.msra.mxu0 %v166
  %1203 = vmatprep.subr.mxu0 0.0
  %1204 = vmatpush1.msra.mxu0 0.0
  %1205 = vmatprep.subr.mxu0 0.0
  %1206 = vmatpush1.msra.mxu0 0.0
  %1207 = vmatprep.subr.mxu0 0.0
  %1208 = vmatpush1.msra.mxu0 0.0
  %1209 = vmatprep.subr.mxu0 0.0
  %1210 = vmatpush1.msra.mxu0 0.0
  %1211 = vmatprep.subr.mxu0 0.0
  %1212 = vmatpush1.msra.mxu0 0.0
  %1213 = vmatprep.subr.mxu0 0.0
  %1214 = vmatpush1.msra.mxu0 0.0
  %1215 = vmatprep.subr.mxu0 0.0
  %1216 = vmatpush1.msra.mxu0 0.0
  %1217 = vmatprep.subr.mxu0 0.0
  %1218 = vmatpush1.msra.mxu0 0.0
  %1219 = vmatprep.subr.mxu0 0.0
  %1220 = vmatpush1.msra.mxu0 0.0
  %1221 = vmatprep.subr.mxu0 0.0
  %1222 = vmatpush1.msra.mxu0 0.0
  %1223 = vmatprep.subr.mxu0 0.0
  %1224 = vmatpush1.msra.mxu0 0.0
  %1225 = vmatprep.subr.mxu0 0.0
  %1226 = vmatpush1.msra.mxu0 0.0
  %1227 = vmatprep.subr.mxu0 0.0
  %1228 = vmatpush1.msra.mxu0 0.0
  %1229 = vmatprep.subr.mxu0 0.0
  %1230 = vmatpush1.msra.mxu0 0.0
  %1231 = vmatprep.subr.mxu0 0.0
  %1232 = vmatpush1.msra.mxu0 0.0
  %1233 = vmatprep.subr.mxu0 0.0
  %1234 = vmatpush1.msra.mxu0 0.0
  %1235 = vmatprep.mubr.f32.mxu0 0.0
  %1236 = vmatmul.mubr.f32.gmra.mrb[0].mxu0 %v1098
  %v1237 = vpop.f32.mrb[0].mxu0
  %v1238 = vadd.f32 0.0, %v1237
  %v1239 = vpop.f32.mrb[0].mxu0
  %v1240 = vadd.f32 0.0, %v1239
  %1241 = vdwg.mxu0
  %v1242 = vadd.f32 %v281, %v1167
  %v1243 = vadd.f32 %v283, %v1169
  %v1244 = vadd.f32 %v394, %v1238
  %v1245 = vadd.f32 %v396, %v1240
  %v1246 = vxor.u32 %v1242, 2147483648
  %v1247 = vmul.f32 %v1246, 1.442695
  %v1248 = vpow.pop %v1247
  %v1249 = vadd.f32 %v1248, 1.0
  %v1250 = vrcp.pop %v1249
  %v1251 = vmul.f32 1.0, %v1250
  %v1252 = vxor.u32 %v1243, 2147483648
  %v1253 = vmul.f32 %v1252, 1.442695
  %v1254 = vpow.pop %v1253
  %v1255 = vadd.f32 %v1254, 1.0
  %v1256 = vrcp.pop %v1255
  %v1257 = vmul.f32 1.0, %v1256
  %v1258 = vtanh.pop %v1244
  %v1259 = vxor.u32 %v1245, 2147483648
  %v1260 = vmul.f32 %v1259, 1.442695
  %v1261 = vpow.pop %v1260
  %v1262 = vadd.f32 %v1261, 1.0
  %v1263 = vrcp.pop %v1262
  %v1264 = vmul.f32 1.0, %v1263
  %v1265 = vmul.f32 %v1257, %v1096
  %v1266 = vmul.f32 %v1251, %v1258
  %v1267 = vadd.f32 %v1265, %v1266
  %v1268 = vtanh.pop %v1267
  %v1269 = vmul.f32 %v1264, %v1268
  %1270 = vst [vmem:[#allocation2 + $0x20] sm:$0xff] %v1269
  %1271 = vmatprep.subr.mxu0 %v105
  %1272 = vmatpush1.msra.mxu0 %v104
  %1273 = vmatprep.subr.mxu0 %v109
  %1274 = vmatpush1.msra.mxu0 %v108
  %1275 = vmatprep.subr.mxu0 %v113
  %1276 = vmatpush1.msra.mxu0 %v112
  %1277 = vmatprep.subr.mxu0 %v117
  %1278 = vmatpush1.msra.mxu0 %v116
  %1279 = vmatprep.subr.mxu0 %v121
  %1280 = vmatpush1.msra.mxu0 %v120
  %1281 = vmatprep.subr.mxu0 %v125
  %1282 = vmatpush1.msra.mxu0 %v124
  %1283 = vmatprep.subr.mxu0 %v129
  %1284 = vmatpush1.msra.mxu0 %v128
  %1285 = vmatprep.subr.mxu0 %v133
  %1286 = vmatpush1.msra.mxu0 %v132
  %1287 = vmatprep.subr.mxu0 %v137
  %1288 = vmatpush1.msra.mxu0 %v136
  %1289 = vmatprep.subr.mxu0 %v141
  %1290 = vmatpush1.msra.mxu0 %v140
  %1291 = vmatprep.subr.mxu0 %v145
  %1292 = vmatpush1.msra.mxu0 %v144
  %1293 = vmatprep.subr.mxu0 %v149
  %1294 = vmatpush1.msra.mxu0 %v148
  %1295 = vmatprep.subr.mxu0 %v153
  %1296 = vmatpush1.msra.mxu0 %v152
  %1297 = vmatprep.subr.mxu0 %v157
  %1298 = vmatpush1.msra.mxu0 %v156
  %1299 = vmatprep.subr.mxu0 %v161
  %1300 = vmatpush1.msra.mxu0 %v160
  %1301 = vmatprep.subr.mxu0 %v165
  %1302 = vmatpush1.msra.mxu0 %v164
  %1303 = vmatprep.subr.mxu0 0.0
  %1304 = vmatpush1.msra.mxu0 0.0
  %1305 = vmatprep.subr.mxu0 0.0
  %1306 = vmatpush1.msra.mxu0 0.0
  %1307 = vmatprep.subr.mxu0 0.0
  %1308 = vmatpush1.msra.mxu0 0.0
  %1309 = vmatprep.subr.mxu0 0.0
  %1310 = vmatpush1.msra.mxu0 0.0
  %1311 = vmatprep.subr.mxu0 0.0
  %1312 = vmatpush1.msra.mxu0 0.0
  %1313 = vmatprep.subr.mxu0 0.0
  %1314 = vmatpush1.msra.mxu0 0.0
  %1315 = vmatprep.subr.mxu0 0.0
  %1316 = vmatpush1.msra.mxu0 0.0
  %1317 = vmatprep.subr.mxu0 0.0
  %1318 = vmatpush1.msra.mxu0 0.0
  %1319 = vmatprep.subr.mxu0 0.0
  %1320 = vmatpush1.msra.mxu0 0.0
  %1321 = vmatprep.subr.mxu0 0.0
  %1322 = vmatpush1.msra.mxu0 0.0
  %1323 = vmatprep.subr.mxu0 0.0
  %1324 = vmatpush1.msra.mxu0 0.0
  %1325 = vmatprep.subr.mxu0 0.0
  %1326 = vmatpush1.msra.mxu0 0.0
  %1327 = vmatprep.subr.mxu0 0.0
  %1328 = vmatpush1.msra.mxu0 0.0
  %1329 = vmatprep.subr.mxu0 0.0
  %1330 = vmatpush1.msra.mxu0 0.0
  %1331 = vmatprep.subr.mxu0 0.0
  %1332 = vmatpush1.msra.mxu0 0.0
  %1333 = vmatprep.subr.mxu0 0.0
  %1334 = vmatpush1.msra.mxu0 0.0
  %1335 = vmatprep.mubr.f32.mxu0 0.0
  %1336 = vmatmul.mubr.f32.gmra.mrb[0].mxu0 %v1269
  %v1337 = vpop.f32.mrb[0].mxu0
  %v1338 = vadd.f32 0.0, %v1337
  %v1339 = vpop.f32.mrb[0].mxu0
  %v1340 = vadd.f32 0.0, %v1339
  %1341 = vdwg.mxu0
  %1342 = vmatprep.subr.mxu0 %v107
  %1343 = vmatpush1.msra.mxu0 %v106
  %1344 = vmatprep.subr.mxu0 %v111
  %1345 = vmatpush1.msra.mxu0 %v110
  %1346 = vmatprep.subr.mxu0 %v115
  %1347 = vmatpush1.msra.mxu0 %v114
  %1348 = vmatprep.subr.mxu0 %v119
  %1349 = vmatpush1.msra.mxu0 %v118
  %1350 = vmatprep.subr.mxu0 %v123
  %1351 = vmatpush1.msra.mxu0 %v122
  %1352 = vmatprep.subr.mxu0 %v127
  %1353 = vmatpush1.msra.mxu0 %v126
  %1354 = vmatprep.subr.mxu0 %v131
  %1355 = vmatpush1.msra.mxu0 %v130
  %1356 = vmatprep.subr.mxu0 %v135
  %1357 = vmatpush1.msra.mxu0 %v134
  %1358 = vmatprep.subr.mxu0 %v139
  %1359 = vmatpush1.msra.mxu0 %v138
  %1360 = vmatprep.subr.mxu0 %v143
  %1361 = vmatpush1.msra.mxu0 %v142
  %1362 = vmatprep.subr.mxu0 %v147
  %1363 = vmatpush1.msra.mxu0 %v146
  %1364 = vmatprep.subr.mxu0 %v151
  %1365 = vmatpush1.msra.mxu0 %v150
  %1366 = vmatprep.subr.mxu0 %v155
  %1367 = vmatpush1.msra.mxu0 %v154
  %1368 = vmatprep.subr.mxu0 %v159
  %1369 = vmatpush1.msra.mxu0 %v158
  %1370 = vmatprep.subr.mxu0 %v163
  %1371 = vmatpush1.msra.mxu0 %v162
  %1372 = vmatprep.subr.mxu0 %v167
  %1373 = vmatpush1.msra.mxu0 %v166
  %1374 = vmatprep.subr.mxu0 0.0
  %1375 = vmatpush1.msra.mxu0 0.0
  %1376 = vmatprep.subr.mxu0 0.0
  %1377 = vmatpush1.msra.mxu0 0.0
  %1378 = vmatprep.subr.mxu0 0.0
  %1379 = vmatpush1.msra.mxu0 0.0
  %1380 = vmatprep.subr.mxu0 0.0
  %1381 = vmatpush1.msra.mxu0 0.0
  %1382 = vmatprep.subr.mxu0 0.0
  %1383 = vmatpush1.msra.mxu0 0.0
  %1384 = vmatprep.subr.mxu0 0.0
  %1385 = vmatpush1.msra.mxu0 0.0
  %1386 = vmatprep.subr.mxu0 0.0
  %1387 = vmatpush1.msra.mxu0 0.0
  %1388 = vmatprep.subr.mxu0 0.0
  %1389 = vmatpush1.msra.mxu0 0.0
  %1390 = vmatprep.subr.mxu0 0.0
  %1391 = vmatpush1.msra.mxu0 0.0
  %1392 = vmatprep.subr.mxu0 0.0
  %1393 = vmatpush1.msra.mxu0 0.0
  %1394 = vmatprep.subr.mxu0 0.0
  %1395 = vmatpush1.msra.mxu0 0.0
  %1396 = vmatprep.subr.mxu0 0.0
  %1397 = vmatpush1.msra.mxu0 0.0
  %1398 = vmatprep.subr.mxu0 0.0
  %1399 = vmatpush1.msra.mxu0 0.0
  %1400 = vmatprep.subr.mxu0 0.0
  %1401 = vmatpush1.msra.mxu0 0.0
  %1402 = vmatprep.subr.mxu0 0.0
  %1403 = vmatpush1.msra.mxu0 0.0
  %1404 = vmatprep.subr.mxu0 0.0
  %1405 = vmatpush1.msra.mxu0 0.0
  %1406 = vmatprep.mubr.f32.mxu0 0.0
  %1407 = vmatmul.mubr.f32.gmra.mrb[0].mxu0 %v1269
  %v1408 = vpop.f32.mrb[0].mxu0
  %v1409 = vadd.f32 0.0, %v1408
  %v1410 = vpop.f32.mrb[0].mxu0
  %v1411 = vadd.f32 0.0, %v1410
  %1412 = vdwg.mxu0
  %v1413 = vadd.f32 %v287, %v1338
  %v1414 = vadd.f32 %v289, %v1340
  %v1415 = vadd.f32 %v400, %v1409
  %v1416 = vadd.f32 %v402, %v1411
  %v1417 = vxor.u32 %v1413, 2147483648
  %v1418 = vmul.f32 %v1417, 1.442695
  %v1419 = vpow.pop %v1418
  %v1420 = vadd.f32 %v1419, 1.0
  %v1421 = vrcp.pop %v1420
  %v1422 = vmul.f32 1.0, %v1421
  %v1423 = vxor.u32 %v1414, 2147483648
  %v1424 = vmul.f32 %v1423, 1.442695
  %v1425 = vpow.pop %v1424
  %v1426 = vadd.f32 %v1425, 1.0
  %v1427 = vrcp.pop %v1426
  %v1428 = vmul.f32 1.0, %v1427
  %v1429 = vtanh.pop %v1415
  %v1430 = vxor.u32 %v1416, 2147483648
  %v1431 = vmul.f32 %v1430, 1.442695
  %v1432 = vpow.pop %v1431
  %v1433 = vadd.f32 %v1432, 1.0
  %v1434 = vrcp.pop %v1433
  %v1435 = vmul.f32 1.0, %v1434
  %v1436 = vmul.f32 %v1428, %v1267
  %v1437 = vmul.f32 %v1422, %v1429
  %v1438 = vadd.f32 %v1436, %v1437
  %v1439 = vtanh.pop %v1438
  %v1440 = vmul.f32 %v1435, %v1439
  %1441 = vst [vmem:[#allocation2 + $0x28] sm:$0xff] %v1440
  %1442 = vmatprep.subr.mxu0 %v105
  %1443 = vmatpush1.msra.mxu0 %v104
  %1444 = vmatprep.subr.mxu0 %v109
  %1445 = vmatpush1.msra.mxu0 %v108
  %1446 = vmatprep.subr.mxu0 %v113
  %1447 = vmatpush1.msra.mxu0 %v112
  %1448 = vmatprep.subr.mxu0 %v117
  %1449 = vmatpush1.msra.mxu0 %v116
  %1450 = vmatprep.subr.mxu0 %v121
  %1451 = vmatpush1.msra.mxu0 %v120
  %1452 = vmatprep.subr.mxu0 %v125
  %1453 = vmatpush1.msra.mxu0 %v124
  %1454 = vmatprep.subr.mxu0 %v129
  %1455 = vmatpush1.msra.mxu0 %v128
  %1456 = vmatprep.subr.mxu0 %v133
  %1457 = vmatpush1.msra.mxu0 %v132
  %1458 = vmatprep.subr.mxu0 %v137
  %1459 = vmatpush1.msra.mxu0 %v136
  %1460 = vmatprep.subr.mxu0 %v141
  %1461 = vmatpush1.msra.mxu0 %v140
  %1462 = vmatprep.subr.mxu0 %v145
  %1463 = vmatpush1.msra.mxu0 %v144
  %1464 = vmatprep.subr.mxu0 %v149
  %1465 = vmatpush1.msra.mxu0 %v148
  %1466 = vmatprep.subr.mxu0 %v153
  %1467 = vmatpush1.msra.mxu0 %v152
  %1468 = vmatprep.subr.mxu0 %v157
  %1469 = vmatpush1.msra.mxu0 %v156
  %1470 = vmatprep.subr.mxu0 %v161
  %1471 = vmatpush1.msra.mxu0 %v160
  %1472 = vmatprep.subr.mxu0 %v165
  %1473 = vmatpush1.msra.mxu0 %v164
  %1474 = vmatprep.subr.mxu0 0.0
  %1475 = vmatpush1.msra.mxu0 0.0
  %1476 = vmatprep.subr.mxu0 0.0
  %1477 = vmatpush1.msra.mxu0 0.0
  %1478 = vmatprep.subr.mxu0 0.0
  %1479 = vmatpush1.msra.mxu0 0.0
  %1480 = vmatprep.subr.mxu0 0.0
  %1481 = vmatpush1.msra.mxu0 0.0
  %1482 = vmatprep.subr.mxu0 0.0
  %1483 = vmatpush1.msra.mxu0 0.0
  %1484 = vmatprep.subr.mxu0 0.0
  %1485 = vmatpush1.msra.mxu0 0.0
  %1486 = vmatprep.subr.mxu0 0.0
  %1487 = vmatpush1.msra.mxu0 0.0
  %1488 = vmatprep.subr.mxu0 0.0
  %1489 = vmatpush1.msra.mxu0 0.0
  %1490 = vmatprep.subr.mxu0 0.0
  %1491 = vmatpush1.msra.mxu0 0.0
  %1492 = vmatprep.subr.mxu0 0.0
  %1493 = vmatpush1.msra.mxu0 0.0
  %1494 = vmatprep.subr.mxu0 0.0
  %1495 = vmatpush1.msra.mxu0 0.0
  %1496 = vmatprep.subr.mxu0 0.0
  %1497 = vmatpush1.msra.mxu0 0.0
  %1498 = vmatprep.subr.mxu0 0.0
  %1499 = vmatpush1.msra.mxu0 0.0
  %1500 = vmatprep.subr.mxu0 0.0
  %1501 = vmatpush1.msra.mxu0 0.0
  %1502 = vmatprep.subr.mxu0 0.0
  %1503 = vmatpush1.msra.mxu0 0.0
  %1504 = vmatprep.subr.mxu0 0.0
  %1505 = vmatpush1.msra.mxu0 0.0
  %1506 = vmatprep.mubr.f32.mxu0 0.0
  %1507 = vmatmul.mubr.f32.gmra.mrb[0].mxu0 %v1440
  %v1508 = vpop.f32.mrb[0].mxu0
  %v1509 = vadd.f32 0.0, %v1508
  %v1510 = vpop.f32.mrb[0].mxu0
  %v1511 = vadd.f32 0.0, %v1510
  %1512 = vdwg.mxu0
  %1513 = vmatprep.subr.mxu0 %v107
  %1514 = vmatpush1.msra.mxu0 %v106
  %1515 = vmatprep.subr.mxu0 %v111
  %1516 = vmatpush1.msra.mxu0 %v110
  %1517 = vmatprep.subr.mxu0 %v115
  %1518 = vmatpush1.msra.mxu0 %v114
  %1519 = vmatprep.subr.mxu0 %v119
  %1520 = vmatpush1.msra.mxu0 %v118
  %1521 = vmatprep.subr.mxu0 %v123
  %1522 = vmatpush1.msra.mxu0 %v122
  %1523 = vmatprep.subr.mxu0 %v127
  %1524 = vmatpush1.msra.mxu0 %v126
  %1525 = vmatprep.subr.mxu0 %v131
  %1526 = vmatpush1.msra.mxu0 %v130
  %1527 = vmatprep.subr.mxu0 %v135
  %1528 = vmatpush1.msra.mxu0 %v134
  %1529 = vmatprep.subr.mxu0 %v139
  %1530 = vmatpush1.msra.mxu0 %v138
  %1531 = vmatprep.subr.mxu0 %v143
  %1532 = vmatpush1.msra.mxu0 %v142
  %1533 = vmatprep.subr.mxu0 %v147
  %1534 = vmatpush1.msra.mxu0 %v146
  %1535 = vmatprep.subr.mxu0 %v151
  %1536 = vmatpush1.msra.mxu0 %v150
  %1537 = vmatprep.subr.mxu0 %v155
  %1538 = vmatpush1.msra.mxu0 %v154
  %1539 = vmatprep.subr.mxu0 %v159
  %1540 = vmatpush1.msra.mxu0 %v158
  %1541 = vmatprep.subr.mxu0 %v163
  %1542 = vmatpush1.msra.mxu0 %v162
  %1543 = vmatprep.subr.mxu0 %v167
  %1544 = vmatpush1.msra.mxu0 %v166
  %1545 = vmatprep.subr.mxu0 0.0
  %1546 = vmatpush1.msra.mxu0 0.0
  %1547 = vmatprep.subr.mxu0 0.0
  %1548 = vmatpush1.msra.mxu0 0.0
  %1549 = vmatprep.subr.mxu0 0.0
  %1550 = vmatpush1.msra.mxu0 0.0
  %1551 = vmatprep.subr.mxu0 0.0
  %1552 = vmatpush1.msra.mxu0 0.0
  %1553 = vmatprep.subr.mxu0 0.0
  %1554 = vmatpush1.msra.mxu0 0.0
  %1555 = vmatprep.subr.mxu0 0.0
  %1556 = vmatpush1.msra.mxu0 0.0
  %1557 = vmatprep.subr.mxu0 0.0
  %1558 = vmatpush1.msra.mxu0 0.0
  %1559 = vmatprep.subr.mxu0 0.0
  %1560 = vmatpush1.msra.mxu0 0.0
  %1561 = vmatprep.subr.mxu0 0.0
  %1562 = vmatpush1.msra.mxu0 0.0
  %1563 = vmatprep.subr.mxu0 0.0
  %1564 = vmatpush1.msra.mxu0 0.0
  %1565 = vmatprep.subr.mxu0 0.0
  %1566 = vmatpush1.msra.mxu0 0.0
  %1567 = vmatprep.subr.mxu0 0.0
  %1568 = vmatpush1.msra.mxu0 0.0
  %1569 = vmatprep.subr.mxu0 0.0
  %1570 = vmatpush1.msra.mxu0 0.0
  %1571 = vmatprep.subr.mxu0 0.0
  %1572 = vmatpush1.msra.mxu0 0.0
  %1573 = vmatprep.subr.mxu0 0.0
  %1574 = vmatpush1.msra.mxu0 0.0
  %1575 = vmatprep.subr.mxu0 0.0
  %1576 = vmatpush1.msra.mxu0 0.0
  %1577 = vmatprep.mubr.f32.mxu0 0.0
  %1578 = vmatmul.mubr.f32.gmra.mrb[0].mxu0 %v1440
  %v1579 = vpop.f32.mrb[0].mxu0
  %v1580 = vadd.f32 0.0, %v1579
  %v1581 = vpop.f32.mrb[0].mxu0
  %v1582 = vadd.f32 0.0, %v1581
  %1583 = vdwg.mxu0
  %v1584 = vadd.f32 %v293, %v1509
  %v1585 = vadd.f32 %v295, %v1511
  %v1586 = vadd.f32 %v406, %v1580
  %v1587 = vadd.f32 %v408, %v1582
  %v1588 = vxor.u32 %v1584, 2147483648
  %v1589 = vmul.f32 %v1588, 1.442695
  %v1590 = vpow.pop %v1589
  %v1591 = vadd.f32 %v1590, 1.0
  %v1592 = vrcp.pop %v1591
  %v1593 = vmul.f32 1.0, %v1592
  %v1594 = vxor.u32 %v1585, 2147483648
  %v1595 = vmul.f32 %v1594, 1.442695
  %v1596 = vpow.pop %v1595
  %v1597 = vadd.f32 %v1596, 1.0
  %v1598 = vrcp.pop %v1597
  %v1599 = vmul.f32 1.0, %v1598
  %v1600 = vtanh.pop %v1586
  %v1601 = vxor.u32 %v1587, 2147483648
  %v1602 = vmul.f32 %v1601, 1.442695
  %v1603 = vpow.pop %v1602
  %v1604 = vadd.f32 %v1603, 1.0
  %v1605 = vrcp.pop %v1604
  %v1606 = vmul.f32 1.0, %v1605
  %v1607 = vmul.f32 %v1599, %v1438
  %v1608 = vmul.f32 %v1593, %v1600
  %v1609 = vadd.f32 %v1607, %v1608
  %v1610 = vtanh.pop %v1609
  %v1611 = vmul.f32 %v1606, %v1610
  %1612 = vst [vmem:[#allocation2 + $0x30] sm:$0xff] %v1611
  %1613 = vmatprep.subr.mxu0 %v105
  %1614 = vmatpush1.msra.mxu0 %v104
  %1615 = vmatprep.subr.mxu0 %v109
  %1616 = vmatpush1.msra.mxu0 %v108
  %1617 = vmatprep.subr.mxu0 %v113
  %1618 = vmatpush1.msra.mxu0 %v112
  %1619 = vmatprep.subr.mxu0 %v117
  %1620 = vmatpush1.msra.mxu0 %v116
  %1621 = vmatprep.subr.mxu0 %v121
  %1622 = vmatpush1.msra.mxu0 %v120
  %1623 = vmatprep.subr.mxu0 %v125
  %1624 = vmatpush1.msra.mxu0 %v124
  %1625 = vmatprep.subr.mxu0 %v129
  %1626 = vmatpush1.msra.mxu0 %v128
  %1627 = vmatprep.subr.mxu0 %v133
  %1628 = vmatpush1.msra.mxu0 %v132
  %1629 = vmatprep.subr.mxu0 %v137
  %1630 = vmatpush1.msra.mxu0 %v136
  %1631 = vmatprep.subr.mxu0 %v141
  %1632 = vmatpush1.msra.mxu0 %v140
  %1633 = vmatprep.subr.mxu0 %v145
  %1634 = vmatpush1.msra.mxu0 %v144
  %1635 = vmatprep.subr.mxu0 %v149
  %1636 = vmatpush1.msra.mxu0 %v148
  %1637 = vmatprep.subr.mxu0 %v153
  %1638 = vmatpush1.msra.mxu0 %v152
  %1639 = vmatprep.subr.mxu0 %v157
  %1640 = vmatpush1.msra.mxu0 %v156
  %1641 = vmatprep.subr.mxu0 %v161
  %1642 = vmatpush1.msra.mxu0 %v160
  %1643 = vmatprep.subr.mxu0 %v165
  %1644 = vmatpush1.msra.mxu0 %v164
  %1645 = vmatprep.subr.mxu0 0.0
  %1646 = vmatpush1.msra.mxu0 0.0
  %1647 = vmatprep.subr.mxu0 0.0
  %1648 = vmatpush1.msra.mxu0 0.0
  %1649 = vmatprep.subr.mxu0 0.0
  %1650 = vmatpush1.msra.mxu0 0.0
  %1651 = vmatprep.subr.mxu0 0.0
  %1652 = vmatpush1.msra.mxu0 0.0
  %1653 = vmatprep.subr.mxu0 0.0
  %1654 = vmatpush1.msra.mxu0 0.0
  %1655 = vmatprep.subr.mxu0 0.0
  %1656 = vmatpush1.msra.mxu0 0.0
  %1657 = vmatprep.subr.mxu0 0.0
  %1658 = vmatpush1.msra.mxu0 0.0
  %1659 = vmatprep.subr.mxu0 0.0
  %1660 = vmatpush1.msra.mxu0 0.0
  %1661 = vmatprep.subr.mxu0 0.0
  %1662 = vmatpush1.msra.mxu0 0.0
  %1663 = vmatprep.subr.mxu0 0.0
  %1664 = vmatpush1.msra.mxu0 0.0
  %1665 = vmatprep.subr.mxu0 0.0
  %1666 = vmatpush1.msra.mxu0 0.0
  %1667 = vmatprep.subr.mxu0 0.0
  %1668 = vmatpush1.msra.mxu0 0.0
  %1669 = vmatprep.subr.mxu0 0.0
  %1670 = vmatpush1.msra.mxu0 0.0
  %1671 = vmatprep.subr.mxu0 0.0
  %1672 = vmatpush1.msra.mxu0 0.0
  %1673 = vmatprep.subr.mxu0 0.0
  %1674 = vmatpush1.msra.mxu0 0.0
  %1675 = vmatprep.subr.mxu0 0.0
  %1676 = vmatpush1.msra.mxu0 0.0
  %1677 = vmatprep.mubr.f32.mxu0 0.0
  %1678 = vmatmul.mubr.f32.gmra.mrb[0].mxu0 %v1611
  %v1679 = vpop.f32.mrb[0].mxu0
  %v1680 = vadd.f32 0.0, %v1679
  %v1681 = vpop.f32.mrb[0].mxu0
  %v1682 = vadd.f32 0.0, %v1681
  %1683 = vdwg.mxu0
  %1684 = vmatprep.subr.mxu0 %v107
  %1685 = vmatpush1.msra.mxu0 %v106
  %1686 = vmatprep.subr.mxu0 %v111
  %1687 = vmatpush1.msra.mxu0 %v110
  %1688 = vmatprep.subr.mxu0 %v115
  %1689 = vmatpush1.msra.mxu0 %v114
  %1690 = vmatprep.subr.mxu0 %v119
  %1691 = vmatpush1.msra.mxu0 %v118
  %1692 = vmatprep.subr.mxu0 %v123
  %1693 = vmatpush1.msra.mxu0 %v122
  %1694 = vmatprep.subr.mxu0 %v127
  %1695 = vmatpush1.msra.mxu0 %v126
  %1696 = vmatprep.subr.mxu0 %v131
  %1697 = vmatpush1.msra.mxu0 %v130
  %1698 = vmatprep.subr.mxu0 %v135
  %1699 = vmatpush1.msra.mxu0 %v134
  %1700 = vmatprep.subr.mxu0 %v139
  %1701 = vmatpush1.msra.mxu0 %v138
  %1702 = vmatprep.subr.mxu0 %v143
  %1703 = vmatpush1.msra.mxu0 %v142
  %1704 = vmatprep.subr.mxu0 %v147
  %1705 = vmatpush1.msra.mxu0 %v146
  %1706 = vmatprep.subr.mxu0 %v151
  %1707 = vmatpush1.msra.mxu0 %v150
  %1708 = vmatprep.subr.mxu0 %v155
  %1709 = vmatpush1.msra.mxu0 %v154
  %1710 = vmatprep.subr.mxu0 %v159
  %1711 = vmatpush1.msra.mxu0 %v158
  %1712 = vmatprep.subr.mxu0 %v163
  %1713 = vmatpush1.msra.mxu0 %v162
  %1714 = vmatprep.subr.mxu0 %v167
  %1715 = vmatpush1.msra.mxu0 %v166
  %1716 = vmatprep.subr.mxu0 0.0
  %1717 = vmatpush1.msra.mxu0 0.0
  %1718 = vmatprep.subr.mxu0 0.0
  %1719 = vmatpush1.msra.mxu0 0.0
  %1720 = vmatprep.subr.mxu0 0.0
  %1721 = vmatpush1.msra.mxu0 0.0
  %1722 = vmatprep.subr.mxu0 0.0
  %1723 = vmatpush1.msra.mxu0 0.0
  %1724 = vmatprep.subr.mxu0 0.0
  %1725 = vmatpush1.msra.mxu0 0.0
  %1726 = vmatprep.subr.mxu0 0.0
  %1727 = vmatpush1.msra.mxu0 0.0
  %1728 = vmatprep.subr.mxu0 0.0
  %1729 = vmatpush1.msra.mxu0 0.0
  %1730 = vmatprep.subr.mxu0 0.0
  %1731 = vmatpush1.msra.mxu0 0.0
  %1732 = vmatprep.subr.mxu0 0.0
  %1733 = vmatpush1.msra.mxu0 0.0
  %1734 = vmatprep.subr.mxu0 0.0
  %1735 = vmatpush1.msra.mxu0 0.0
  %1736 = vmatprep.subr.mxu0 0.0
  %1737 = vmatpush1.msra.mxu0 0.0
  %1738 = vmatprep.subr.mxu0 0.0
  %1739 = vmatpush1.msra.mxu0 0.0
  %1740 = vmatprep.subr.mxu0 0.0
  %1741 = vmatpush1.msra.mxu0 0.0
  %1742 = vmatprep.subr.mxu0 0.0
  %1743 = vmatpush1.msra.mxu0 0.0
  %1744 = vmatprep.subr.mxu0 0.0
  %1745 = vmatpush1.msra.mxu0 0.0
  %1746 = vmatprep.subr.mxu0 0.0
  %1747 = vmatpush1.msra.mxu0 0.0
  %1748 = vmatprep.mubr.f32.mxu0 0.0
  %1749 = vmatmul.mubr.f32.gmra.mrb[0].mxu0 %v1611
  %v1750 = vpop.f32.mrb[0].mxu0
  %v1751 = vadd.f32 0.0, %v1750
  %v1752 = vpop.f32.mrb[0].mxu0
  %v1753 = vadd.f32 0.0, %v1752
  %1754 = vdwg.mxu0
  %v1755 = vadd.f32 %v299, %v1680
  %v1756 = vadd.f32 %v301, %v1682
  %v1757 = vadd.f32 %v412, %v1751
  %v1758 = vadd.f32 %v414, %v1753
  %v1759 = vxor.u32 %v1755, 2147483648
  %v1760 = vmul.f32 %v1759, 1.442695
  %v1761 = vpow.pop %v1760
  %v1762 = vadd.f32 %v1761, 1.0
  %v1763 = vrcp.pop %v1762
  %v1764 = vmul.f32 1.0, %v1763
  %v1765 = vxor.u32 %v1756, 2147483648
  %v1766 = vmul.f32 %v1765, 1.442695
  %v1767 = vpow.pop %v1766
  %v1768 = vadd.f32 %v1767, 1.0
  %v1769 = vrcp.pop %v1768
  %v1770 = vmul.f32 1.0, %v1769
  %v1771 = vtanh.pop %v1757
  %v1772 = vxor.u32 %v1758, 2147483648
  %v1773 = vmul.f32 %v1772, 1.442695
  %v1774 = vpow.pop %v1773
  %v1775 = vadd.f32 %v1774, 1.0
  %v1776 = vrcp.pop %v1775
  %v1777 = vmul.f32 1.0, %v1776
  %v1778 = vmul.f32 %v1770, %v1609
  %v1779 = vmul.f32 %v1764, %v1771
  %v1780 = vadd.f32 %v1778, %v1779
  %v1781 = vtanh.pop %v1780
  %v1782 = vmul.f32 %v1777, %v1781
  %1783 = vst [vmem:[#allocation2 + $0x38] sm:$0xff] %v1782
  %v1784 = vld [vmem:[#allocation2] sm:$0xff]
  %v1785 = vld [vmem:[#allocation2 + $0x8] sm:$0xff]
  %v1786 = vld [vmem:[#allocation2 + $0x10] sm:$0xff]
  %v1787 = vld [vmem:[#allocation2 + $0x18] sm:$0xff]
  %v1788 = vld [vmem:[#allocation2 + $0x20] sm:$0xff]
  %v1789 = vld [vmem:[#allocation2 + $0x28] sm:$0xff]
  %v1790 = vld [vmem:[#allocation2 + $0x30] sm:$0xff]
  %v1791 = vld [vmem:[#allocation2 + $0x38] sm:$0xff]
  %v1792 = vld [vmem:[%s4] sm:$0xff]
  %v1793 = vld [vmem:[%s4 + $0x8] sm:$0xff]
  %v1794 = vld [vmem:[%s4 + $0x10] sm:$0xff]
  %v1795 = vld [vmem:[%s4 + $0x18] sm:$0xff]
  %v1796 = vld [vmem:[%s4 + $0x20] sm:$0xff]
  %v1797 = vld [vmem:[%s4 + $0x28] sm:$0xff]
  %v1798 = vld [vmem:[%s4 + $0x30] sm:$0xff]
  %v1799 = vld [vmem:[%s4 + $0x38] sm:$0xff]
  %v1800 = vld [vmem:[%s4 + $0x40] sm:$0xff]
  %v1801 = vld [vmem:[%s4 + $0x48] sm:$0xff]
  %v1802 = vld [vmem:[%s4 + $0x50] sm:$0xff]
  %v1803 = vld [vmem:[%s4 + $0x58] sm:$0xff]
  %v1804 = vld [vmem:[%s4 + $0x60] sm:$0xff]
  %v1805 = vld [vmem:[%s4 + $0x68] sm:$0xff]
  %v1806 = vld [vmem:[%s4 + $0x70] sm:$0xff]
  %v1807 = vld [vmem:[%s4 + $0x78] sm:$0xff]
  %v1808 = vld [vmem:[%s4 + $0x80] sm:$0xff]
  %v1809 = vld [vmem:[%s4 + $0x88] sm:$0xff]
  %v1810 = vld [vmem:[%s4 + $0x90] sm:$0xff]
  %v1811 = vld [vmem:[%s4 + $0x98] sm:$0xff]
  %v1812 = vld [vmem:[%s4 + $0xa0] sm:$0xff]
  %v1813 = vld [vmem:[%s4 + $0xa8] sm:$0xff]
  %v1814 = vld [vmem:[%s4 + $0xb0] sm:$0xff]
  %v1815 = vld [vmem:[%s4 + $0xb8] sm:$0xff]
  %v1816 = vld [vmem:[%s4 + $0xc0] sm:$0xff]
  %v1817 = vld [vmem:[%s4 + $0xc8] sm:$0xff]
  %v1818 = vld [vmem:[%s4 + $0xd0] sm:$0xff]
  %v1819 = vld [vmem:[%s4 + $0xd8] sm:$0xff]
  %v1820 = vld [vmem:[%s4 + $0xe0] sm:$0xff]
  %v1821 = vld [vmem:[%s4 + $0xe8] sm:$0xff]
  %v1822 = vld [vmem:[%s4 + $0xf0] sm:$0xff]
  %v1823 = vld [vmem:[%s4 + $0xf8] sm:$0xff]
  %v1824 = vld [vmem:[%s4 + $0x100] sm:$0xff]
  %v1825 = vld [vmem:[%s4 + $0x108] sm:$0xff]
  %v1826 = vld [vmem:[%s4 + $0x110] sm:$0xff]
  %v1827 = vld [vmem:[%s4 + $0x118] sm:$0xff]
  %v1828 = vld [vmem:[%s4 + $0x120] sm:$0xff]
  %v1829 = vld [vmem:[%s4 + $0x128] sm:$0xff]
  %v1830 = vld [vmem:[%s4 + $0x130] sm:$0xff]
  %v1831 = vld [vmem:[%s4 + $0x138] sm:$0xff]
  %v1832 = vld [vmem:[%s4 + $0x140] sm:$0xff]
  %v1833 = vld [vmem:[%s4 + $0x148] sm:$0xff]
  %v1834 = vld [vmem:[%s4 + $0x150] sm:$0xff]
  %v1835 = vld [vmem:[%s4 + $0x158] sm:$0xff]
  %v1836 = vld [vmem:[%s4 + $0x160] sm:$0xff]
  %v1837 = vld [vmem:[%s4 + $0x168] sm:$0xff]
  %v1838 = vld [vmem:[%s4 + $0x170] sm:$0xff]
  %v1839 = vld [vmem:[%s4 + $0x178] sm:$0xff]
  %v1840 = vld [vmem:[%s4 + $0x180] sm:$0xff]
  %v1841 = vld [vmem:[%s4 + $0x188] sm:$0xff]
  %v1842 = vld [vmem:[%s4 + $0x190] sm:$0xff]
  %v1843 = vld [vmem:[%s4 + $0x198] sm:$0xff]
  %v1844 = vld [vmem:[%s4 + $0x1a0] sm:$0xff]
  %v1845 = vld [vmem:[%s4 + $0x1a8] sm:$0xff]
  %v1846 = vld [vmem:[%s4 + $0x1b0] sm:$0xff]
  %v1847 = vld [vmem:[%s4 + $0x1b8] sm:$0xff]
  %v1848 = vld [vmem:[%s4 + $0x1c0] sm:$0xff]
  %v1849 = vld [vmem:[%s4 + $0x1c8] sm:$0xff]
  %v1850 = vld [vmem:[%s4 + $0x1d0] sm:$0xff]
  %v1851 = vld [vmem:[%s4 + $0x1d8] sm:$0xff]
  %v1852 = vld [vmem:[%s4 + $0x1e0] sm:$0xff]
  %v1853 = vld [vmem:[%s4 + $0x1e8] sm:$0xff]
  %v1854 = vld [vmem:[%s4 + $0x1f0] sm:$0xff]
  %v1855 = vld [vmem:[%s4 + $0x1f8] sm:$0xff]
  %v1856 = vld [vmem:[%s5] sm:$0xff]
  %v1857 = vld [vmem:[%s5 + $0x8] sm:$0xff]
  %v1858 = vld [vmem:[%s5 + $0x10] sm:$0xff]
  %v1859 = vld [vmem:[%s5 + $0x18] sm:$0xff]
  %v1860 = vld [vmem:[%s5 + $0x20] sm:$0xff]
  %v1861 = vld [vmem:[%s5 + $0x28] sm:$0xff]
  %v1862 = vld [vmem:[%s5 + $0x30] sm:$0xff]
  %v1863 = vld [vmem:[%s5 + $0x38] sm:$0xff]
  %v1864 = vld [vmem:[%s5 + $0x40] sm:$0xff]
  %v1865 = vld [vmem:[%s5 + $0x48] sm:$0xff]
  %v1866 = vld [vmem:[%s5 + $0x50] sm:$0xff]
  %v1867 = vld [vmem:[%s5 + $0x58] sm:$0xff]
  %v1868 = vld [vmem:[%s5 + $0x60] sm:$0xff]
  %v1869 = vld [vmem:[%s5 + $0x68] sm:$0xff]
  %v1870 = vld [vmem:[%s5 + $0x70] sm:$0xff]
  %v1871 = vld [vmem:[%s5 + $0x78] sm:$0xff]
  %v1872 = vld [vmem:[%s5 + $0x80] sm:$0xff]
  %v1873 = vld [vmem:[%s5 + $0x88] sm:$0xff]
  %v1874 = vld [vmem:[%s5 + $0x90] sm:$0xff]
  %v1875 = vld [vmem:[%s5 + $0x98] sm:$0xff]
  %v1876 = vld [vmem:[%s5 + $0xa0] sm:$0xff]
  %v1877 = vld [vmem:[%s5 + $0xa8] sm:$0xff]
  %v1878 = vld [vmem:[%s5 + $0xb0] sm:$0xff]
  %v1879 = vld [vmem:[%s5 + $0xb8] sm:$0xff]
  %v1880 = vld [vmem:[%s5 + $0xc0] sm:$0xff]
  %v1881 = vld [vmem:[%s5 + $0xc8] sm:$0xff]
  %v1882 = vld [vmem:[%s5 + $0xd0] sm:$0xff]
  %v1883 = vld [vmem:[%s5 + $0xd8] sm:$0xff]
  %v1884 = vld [vmem:[%s5 + $0xe0] sm:$0xff]
  %v1885 = vld [vmem:[%s5 + $0xe8] sm:$0xff]
  %v1886 = vld [vmem:[%s5 + $0xf0] sm:$0xff]
  %v1887 = vld [vmem:[%s5 + $0xf8] sm:$0xff]
  %v1888 = vld [vmem:[%s5 + $0x100] sm:$0xff]
  %v1889 = vld [vmem:[%s5 + $0x108] sm:$0xff]
  %v1890 = vld [vmem:[%s5 + $0x110] sm:$0xff]
  %v1891 = vld [vmem:[%s5 + $0x118] sm:$0xff]
  %v1892 = vld [vmem:[%s5 + $0x120] sm:$0xff]
  %v1893 = vld [vmem:[%s5 + $0x128] sm:$0xff]
  %v1894 = vld [vmem:[%s5 + $0x130] sm:$0xff]
  %v1895 = vld [vmem:[%s5 + $0x138] sm:$0xff]
  %v1896 = vld [vmem:[%s5 + $0x140] sm:$0xff]
  %v1897 = vld [vmem:[%s5 + $0x148] sm:$0xff]
  %v1898 = vld [vmem:[%s5 + $0x150] sm:$0xff]
  %v1899 = vld [vmem:[%s5 + $0x158] sm:$0xff]
  %v1900 = vld [vmem:[%s5 + $0x160] sm:$0xff]
  %v1901 = vld [vmem:[%s5 + $0x168] sm:$0xff]
  %v1902 = vld [vmem:[%s5 + $0x170] sm:$0xff]
  %v1903 = vld [vmem:[%s5 + $0x178] sm:$0xff]
  %v1904 = vld [vmem:[%s5 + $0x180] sm:$0xff]
  %v1905 = vld [vmem:[%s5 + $0x188] sm:$0xff]
  %v1906 = vld [vmem:[%s5 + $0x190] sm:$0xff]
  %v1907 = vld [vmem:[%s5 + $0x198] sm:$0xff]
  %v1908 = vld [vmem:[%s5 + $0x1a0] sm:$0xff]
  %v1909 = vld [vmem:[%s5 + $0x1a8] sm:$0xff]
  %v1910 = vld [vmem:[%s5 + $0x1b0] sm:$0xff]
  %v1911 = vld [vmem:[%s5 + $0x1b8] sm:$0xff]
  %v1912 = vld [vmem:[%s5 + $0x1c0] sm:$0xff]
  %v1913 = vld [vmem:[%s5 + $0x1c8] sm:$0xff]
  %v1914 = vld [vmem:[%s5 + $0x1d0] sm:$0xff]
  %v1915 = vld [vmem:[%s5 + $0x1d8] sm:$0xff]
  %v1916 = vld [vmem:[%s5 + $0x1e0] sm:$0xff]
  %v1917 = vld [vmem:[%s5 + $0x1e8] sm:$0xff]
  %v1918 = vld [vmem:[%s5 + $0x1f0] sm:$0xff]
  %v1919 = vld [vmem:[%s5 + $0x1f8] sm:$0xff]
  %v1920 = vld [vmem:[%s6] sm:$0xf]
  %v1922 = vlaneseq
  %v1923 = vshrl.u32 %v1922, 7
  %v1924 = vsub.s32 0, %v1923
  %v1925 = vrot.slane %v1920, %v1924
  %v1926 = vlaneseq
  %v1927 = vshrl.u32 %v1926, 7
  %v1928 = vsub.s32 1, %v1927
  %v1929 = vrot.slane %v1920, %v1928
  %v1930 = vlaneseq
  %v1931 = vshrl.u32 %v1930, 7
  %v1932 = vsub.s32 2, %v1931
  %v1933 = vrot.slane %v1920, %v1932
  %v1934 = vlaneseq
  %v1935 = vshrl.u32 %v1934, 7
  %v1936 = vsub.s32 3, %v1935
  %v1937 = vrot.slane %v1920, %v1936
  %1942 = vmatprep.subr.mxu0 %v1793
  %1943 = vmatpush1.msra.mxu0 %v1792
  %1944 = vmatprep.subr.mxu0 %v1797
  %1945 = vmatpush1.msra.mxu0 %v1796
  %1946 = vmatprep.subr.mxu0 %v1801
  %1947 = vmatpush1.msra.mxu0 %v1800
  %1948 = vmatprep.subr.mxu0 %v1805
  %1949 = vmatpush1.msra.mxu0 %v1804
  %1950 = vmatprep.subr.mxu0 %v1809
  %1951 = vmatpush1.msra.mxu0 %v1808
  %1952 = vmatprep.subr.mxu0 %v1813
  %1953 = vmatpush1.msra.mxu0 %v1812
  %1954 = vmatprep.subr.mxu0 %v1817
  %1955 = vmatpush1.msra.mxu0 %v1816
  %1956 = vmatprep.subr.mxu0 %v1821
  %1957 = vmatpush1.msra.mxu0 %v1820
  %1958 = vmatprep.subr.mxu0 %v1825
  %1959 = vmatpush1.msra.mxu0 %v1824
  %1960 = vmatprep.subr.mxu0 %v1829
  %1961 = vmatpush1.msra.mxu0 %v1828
  %1962 = vmatprep.subr.mxu0 %v1833
  %1963 = vmatpush1.msra.mxu0 %v1832
  %1964 = vmatprep.subr.mxu0 %v1837
  %1965 = vmatpush1.msra.mxu0 %v1836
  %1966 = vmatprep.subr.mxu0 %v1841
  %1967 = vmatpush1.msra.mxu0 %v1840
  %1968 = vmatprep.subr.mxu0 %v1845
  %1969 = vmatpush1.msra.mxu0 %v1844
  %1970 = vmatprep.subr.mxu0 %v1849
  %1971 = vmatpush1.msra.mxu0 %v1848
  %1972 = vmatprep.subr.mxu0 %v1853
  %1973 = vmatpush1.msra.mxu0 %v1852
  %1974 = vmatprep.subr.mxu0 0.0
  %1975 = vmatpush1.msra.mxu0 0.0
  %1976 = vmatprep.subr.mxu0 0.0
  %1977 = vmatpush1.msra.mxu0 0.0
  %1978 = vmatprep.subr.mxu0 0.0
  %1979 = vmatpush1.msra.mxu0 0.0
  %1980 = vmatprep.subr.mxu0 0.0
  %1981 = vmatpush1.msra.mxu0 0.0
  %1982 = vmatprep.subr.mxu0 0.0
  %1983 = vmatpush1.msra.mxu0 0.0
  %1984 = vmatprep.subr.mxu0 0.0
  %1985 = vmatpush1.msra.mxu0 0.0
  %1986 = vmatprep.subr.mxu0 0.0
  %1987 = vmatpush1.msra.mxu0 0.0
  %1988 = vmatprep.subr.mxu0 0.0
  %1989 = vmatpush1.msra.mxu0 0.0
  %1990 = vmatprep.subr.mxu0 0.0
  %1991 = vmatpush1.msra.mxu0 0.0
  %1992 = vmatprep.subr.mxu0 0.0
  %1993 = vmatpush1.msra.mxu0 0.0
  %1994 = vmatprep.subr.mxu0 0.0
  %1995 = vmatpush1.msra.mxu0 0.0
  %1996 = vmatprep.subr.mxu0 0.0
  %1997 = vmatpush1.msra.mxu0 0.0
  %1998 = vmatprep.subr.mxu0 0.0
  %1999 = vmatpush1.msra.mxu0 0.0
  %2000 = vmatprep.subr.mxu0 0.0
  %2001 = vmatpush1.msra.mxu0 0.0
  %2002 = vmatprep.subr.mxu0 0.0
  %2003 = vmatpush1.msra.mxu0 0.0
  %2004 = vmatprep.subr.mxu0 0.0
  %2005 = vmatpush1.msra.mxu0 0.0
  %2006 = vmatprep.mubr.f32.mxu0 0.0
  %2007 = vmatmul.mubr.f32.gmra.mrb[0].mxu0 %v1784
  %v2008 = vpop.f32.mrb[0].mxu0
  %v2009 = vadd.f32 %v1925, %v2008
  %v2010 = vpop.f32.mrb[0].mxu0
  %v2011 = vadd.f32 %v1929, %v2010
  %2012 = vmatprep.mubr.f32.mxu0 0.0
  %2013 = vmatmul.mubr.f32.gmra.mrb[0].mxu0 %v1785
  %v2014 = vpop.f32.mrb[0].mxu0
  %v2015 = vadd.f32 %v1925, %v2014
  %v2016 = vpop.f32.mrb[0].mxu0
  %v2017 = vadd.f32 %v1929, %v2016
  %2018 = vmatprep.mubr.f32.mxu0 0.0
  %2019 = vmatmul.mubr.f32.gmra.mrb[0].mxu0 %v1786
  %v2020 = vpop.f32.mrb[0].mxu0
  %v2021 = vadd.f32 %v1925, %v2020
  %v2022 = vpop.f32.mrb[0].mxu0
  %v2023 = vadd.f32 %v1929, %v2022
  %2024 = vmatprep.mubr.f32.mxu0 0.0
  %2025 = vmatmul.mubr.f32.gmra.mrb[0].mxu0 %v1787
  %v2026 = vpop.f32.mrb[0].mxu0
  %v2027 = vadd.f32 %v1925, %v2026
  %v2028 = vpop.f32.mrb[0].mxu0
  %v2029 = vadd.f32 %v1929, %v2028
  %2030 = vmatprep.mubr.f32.mxu0 0.0
  %2031 = vmatmul.mubr.f32.gmra.mrb[0].mxu0 %v1788
  %v2032 = vpop.f32.mrb[0].mxu0
  %v2033 = vadd.f32 %v1925, %v2032
  %v2034 = vpop.f32.mrb[0].mxu0
  %v2035 = vadd.f32 %v1929, %v2034
  %2036 = vmatprep.mubr.f32.mxu0 0.0
  %2037 = vmatmul.mubr.f32.gmra.mrb[0].mxu0 %v1789
  %v2038 = vpop.f32.mrb[0].mxu0
  %v2039 = vadd.f32 %v1925, %v2038
  %v2040 = vpop.f32.mrb[0].mxu0
  %v2041 = vadd.f32 %v1929, %v2040
  %2042 = vmatprep.mubr.f32.mxu0 0.0
  %2043 = vmatmul.mubr.f32.gmra.mrb[0].mxu0 %v1790
  %v2044 = vpop.f32.mrb[0].mxu0
  %v2045 = vadd.f32 %v1925, %v2044
  %v2046 = vpop.f32.mrb[0].mxu0
  %v2047 = vadd.f32 %v1929, %v2046
  %2048 = vmatprep.mubr.f32.mxu0 0.0
  %2049 = vmatmul.mubr.f32.gmra.mrb[0].mxu0 %v1791
  %v2050 = vpop.f32.mrb[0].mxu0
  %v2051 = vadd.f32 %v1925, %v2050
  %v2052 = vpop.f32.mrb[0].mxu0
  %v2053 = vadd.f32 %v1929, %v2052
  %2054 = vdwg.mxu0
  %2055 = vmatprep.subr.mxu0 %v1795
  %2056 = vmatpush1.msra.mxu0 %v1794
  %2057 = vmatprep.subr.mxu0 %v1799
  %2058 = vmatpush1.msra.mxu0 %v1798
  %2059 = vmatprep.subr.mxu0 %v1803
  %2060 = vmatpush1.msra.mxu0 %v1802
  %2061 = vmatprep.subr.mxu0 %v1807
  %2062 = vmatpush1.msra.mxu0 %v1806
  %2063 = vmatprep.subr.mxu0 %v1811
  %2064 = vmatpush1.msra.mxu0 %v1810
  %2065 = vmatprep.subr.mxu0 %v1815
  %2066 = vmatpush1.msra.mxu0 %v1814
  %2067 = vmatprep.subr.mxu0 %v1819
  %2068 = vmatpush1.msra.mxu0 %v1818
  %2069 = vmatprep.subr.mxu0 %v1823
  %2070 = vmatpush1.msra.mxu0 %v1822
  %2071 = vmatprep.subr.mxu0 %v1827
  %2072 = vmatpush1.msra.mxu0 %v1826
  %2073 = vmatprep.subr.mxu0 %v1831
  %2074 = vmatpush1.msra.mxu0 %v1830
  %2075 = vmatprep.subr.mxu0 %v1835
  %2076 = vmatpush1.msra.mxu0 %v1834
  %2077 = vmatprep.subr.mxu0 %v1839
  %2078 = vmatpush1.msra.mxu0 %v1838
  %2079 = vmatprep.subr.mxu0 %v1843
  %2080 = vmatpush1.msra.mxu0 %v1842
  %2081 = vmatprep.subr.mxu0 %v1847
  %2082 = vmatpush1.msra.mxu0 %v1846
  %2083 = vmatprep.subr.mxu0 %v1851
  %2084 = vmatpush1.msra.mxu0 %v1850
  %2085 = vmatprep.subr.mxu0 %v1855
  %2086 = vmatpush1.msra.mxu0 %v1854
  %2087 = vmatprep.subr.mxu0 0.0
  %2088 = vmatpush1.msra.mxu0 0.0
  %2089 = vmatprep.subr.mxu0 0.0
  %2090 = vmatpush1.msra.mxu0 0.0
  %2091 = vmatprep.subr.mxu0 0.0
  %2092 = vmatpush1.msra.mxu0 0.0
  %2093 = vmatprep.subr.mxu0 0.0
  %2094 = vmatpush1.msra.mxu0 0.0
  %2095 = vmatprep.subr.mxu0 0.0
  %2096 = vmatpush1.msra.mxu0 0.0
  %2097 = vmatprep.subr.mxu0 0.0
  %2098 = vmatpush1.msra.mxu0 0.0
  %2099 = vmatprep.subr.mxu0 0.0
  %2100 = vmatpush1.msra.mxu0 0.0
  %2101 = vmatprep.subr.mxu0 0.0
  %2102 = vmatpush1.msra.mxu0 0.0
  %2103 = vmatprep.subr.mxu0 0.0
  %2104 = vmatpush1.msra.mxu0 0.0
  %2105 = vmatprep.subr.mxu0 0.0
  %2106 = vmatpush1.msra.mxu0 0.0
  %2107 = vmatprep.subr.mxu0 0.0
  %2108 = vmatpush1.msra.mxu0 0.0
  %2109 = vmatprep.subr.mxu0 0.0
  %2110 = vmatpush1.msra.mxu0 0.0
  %2111 = vmatprep.subr.mxu0 0.0
  %2112 = vmatpush1.msra.mxu0 0.0
  %2113 = vmatprep.subr.mxu0 0.0
  %2114 = vmatpush1.msra.mxu0 0.0
  %2115 = vmatprep.subr.mxu0 0.0
  %2116 = vmatpush1.msra.mxu0 0.0
  %2117 = vmatprep.subr.mxu0 0.0
  %2118 = vmatpush1.msra.mxu0 0.0
  %2119 = vmatprep.mubr.f32.mxu0 0.0
  %2120 = vmatmul.mubr.f32.gmra.mrb[0].mxu0 %v1784
  %v2121 = vpop.f32.mrb[0].mxu0
  %v2122 = vadd.f32 %v1933, %v2121
  %v2123 = vpop.f32.mrb[0].mxu0
  %v2124 = vadd.f32 %v1937, %v2123
  %2125 = vmatprep.mubr.f32.mxu0 0.0
  %2126 = vmatmul.mubr.f32.gmra.mrb[0].mxu0 %v1785
  %v2127 = vpop.f32.mrb[0].mxu0
  %v2128 = vadd.f32 %v1933, %v2127
  %v2129 = vpop.f32.mrb[0].mxu0
  %v2130 = vadd.f32 %v1937, %v2129
  %2131 = vmatprep.mubr.f32.mxu0 0.0
  %2132 = vmatmul.mubr.f32.gmra.mrb[0].mxu0 %v1786
  %v2133 = vpop.f32.mrb[0].mxu0
  %v2134 = vadd.f32 %v1933, %v2133
  %v2135 = vpop.f32.mrb[0].mxu0
  %v2136 = vadd.f32 %v1937, %v2135
  %2137 = vmatprep.mubr.f32.mxu0 0.0
  %2138 = vmatmul.mubr.f32.gmra.mrb[0].mxu0 %v1787
  %v2139 = vpop.f32.mrb[0].mxu0
  %v2140 = vadd.f32 %v1933, %v2139
  %v2141 = vpop.f32.mrb[0].mxu0
  %v2142 = vadd.f32 %v1937, %v2141
  %2143 = vmatprep.mubr.f32.mxu0 0.0
  %2144 = vmatmul.mubr.f32.gmra.mrb[0].mxu0 %v1788
  %v2145 = vpop.f32.mrb[0].mxu0
  %v2146 = vadd.f32 %v1933, %v2145
  %v2147 = vpop.f32.mrb[0].mxu0
  %v2148 = vadd.f32 %v1937, %v2147
  %2149 = vmatprep.mubr.f32.mxu0 0.0
  %2150 = vmatmul.mubr.f32.gmra.mrb[0].mxu0 %v1789
  %v2151 = vpop.f32.mrb[0].mxu0
  %v2152 = vadd.f32 %v1933, %v2151
  %v2153 = vpop.f32.mrb[0].mxu0
  %v2154 = vadd.f32 %v1937, %v2153
  %2155 = vmatprep.mubr.f32.mxu0 0.0
  %2156 = vmatmul.mubr.f32.gmra.mrb[0].mxu0 %v1790
  %v2157 = vpop.f32.mrb[0].mxu0
  %v2158 = vadd.f32 %v1933, %v2157
  %v2159 = vpop.f32.mrb[0].mxu0
  %v2160 = vadd.f32 %v1937, %v2159
  %2161 = vmatprep.mubr.f32.mxu0 0.0
  %2162 = vmatmul.mubr.f32.gmra.mrb[0].mxu0 %v1791
  %v2163 = vpop.f32.mrb[0].mxu0
  %v2164 = vadd.f32 %v1933, %v2163
  %v2165 = vpop.f32.mrb[0].mxu0
  %v2166 = vadd.f32 %v1937, %v2165
  %2167 = vdwg.mxu0
  %2168 = vmatprep.subr.mxu0 %v1857
  %2169 = vmatpush1.msra.mxu0 %v1856
  %2170 = vmatprep.subr.mxu0 %v1861
  %2171 = vmatpush1.msra.mxu0 %v1860
  %2172 = vmatprep.subr.mxu0 %v1865
  %2173 = vmatpush1.msra.mxu0 %v1864
  %2174 = vmatprep.subr.mxu0 %v1869
  %2175 = vmatpush1.msra.mxu0 %v1868
  %2176 = vmatprep.subr.mxu0 %v1873
  %2177 = vmatpush1.msra.mxu0 %v1872
  %2178 = vmatprep.subr.mxu0 %v1877
  %2179 = vmatpush1.msra.mxu0 %v1876
  %2180 = vmatprep.subr.mxu0 %v1881
  %2181 = vmatpush1.msra.mxu0 %v1880
  %2182 = vmatprep.subr.mxu0 %v1885
  %2183 = vmatpush1.msra.mxu0 %v1884
  %2184 = vmatprep.subr.mxu0 %v1889
  %2185 = vmatpush1.msra.mxu0 %v1888
  %2186 = vmatprep.subr.mxu0 %v1893
  %2187 = vmatpush1.msra.mxu0 %v1892
  %2188 = vmatprep.subr.mxu0 %v1897
  %2189 = vmatpush1.msra.mxu0 %v1896
  %2190 = vmatprep.subr.mxu0 %v1901
  %2191 = vmatpush1.msra.mxu0 %v1900
  %2192 = vmatprep.subr.mxu0 %v1905
  %2193 = vmatpush1.msra.mxu0 %v1904
  %2194 = vmatprep.subr.mxu0 %v1909
  %2195 = vmatpush1.msra.mxu0 %v1908
  %2196 = vmatprep.subr.mxu0 %v1913
  %2197 = vmatpush1.msra.mxu0 %v1912
  %2198 = vmatprep.subr.mxu0 %v1917
  %2199 = vmatpush1.msra.mxu0 %v1916
  %2200 = vmatprep.subr.mxu0 0.0
  %2201 = vmatpush1.msra.mxu0 0.0
  %2202 = vmatprep.subr.mxu0 0.0
  %2203 = vmatpush1.msra.mxu0 0.0
  %2204 = vmatprep.subr.mxu0 0.0
  %2205 = vmatpush1.msra.mxu0 0.0
  %2206 = vmatprep.subr.mxu0 0.0
  %2207 = vmatpush1.msra.mxu0 0.0
  %2208 = vmatprep.subr.mxu0 0.0
  %2209 = vmatpush1.msra.mxu0 0.0
  %2210 = vmatprep.subr.mxu0 0.0
  %2211 = vmatpush1.msra.mxu0 0.0
  %2212 = vmatprep.subr.mxu0 0.0
  %2213 = vmatpush1.msra.mxu0 0.0
  %2214 = vmatprep.subr.mxu0 0.0
  %2215 = vmatpush1.msra.mxu0 0.0
  %2216 = vmatprep.subr.mxu0 0.0
  %2217 = vmatpush1.msra.mxu0 0.0
  %2218 = vmatprep.subr.mxu0 0.0
  %2219 = vmatpush1.msra.mxu0 0.0
  %2220 = vmatprep.subr.mxu0 0.0
  %2221 = vmatpush1.msra.mxu0 0.0
  %2222 = vmatprep.subr.mxu0 0.0
  %2223 = vmatpush1.msra.mxu0 0.0
  %2224 = vmatprep.subr.mxu0 0.0
  %2225 = vmatpush1.msra.mxu0 0.0
  %2226 = vmatprep.subr.mxu0 0.0
  %2227 = vmatpush1.msra.mxu0 0.0
  %2228 = vmatprep.subr.mxu0 0.0
  %2229 = vmatpush1.msra.mxu0 0.0
  %2230 = vmatprep.subr.mxu0 0.0
  %2231 = vmatpush1.msra.mxu0 0.0
  %2232 = vmatprep.mubr.f32.mxu0 0.0
  %2233 = vmatmul.mubr.f32.gmra.mrb[0].mxu0 0.0
  %v2234 = vpop.f32.mrb[0].mxu0
  %v2235 = vadd.f32 0.0, %v2234
  %v2236 = vpop.f32.mrb[0].mxu0
  %v2237 = vadd.f32 0.0, %v2236
  %2238 = vdwg.mxu0
  %2239 = vmatprep.subr.mxu0 %v1859
  %2240 = vmatpush1.msra.mxu0 %v1858
  %2241 = vmatprep.subr.mxu0 %v1863
  %2242 = vmatpush1.msra.mxu0 %v1862
  %2243 = vmatprep.subr.mxu0 %v1867
  %2244 = vmatpush1.msra.mxu0 %v1866
  %2245 = vmatprep.subr.mxu0 %v1871
  %2246 = vmatpush1.msra.mxu0 %v1870
  %2247 = vmatprep.subr.mxu0 %v1875
  %2248 = vmatpush1.msra.mxu0 %v1874
  %2249 = vmatprep.subr.mxu0 %v1879
  %2250 = vmatpush1.msra.mxu0 %v1878
  %2251 = vmatprep.subr.mxu0 %v1883
  %2252 = vmatpush1.msra.mxu0 %v1882
  %2253 = vmatprep.subr.mxu0 %v1887
  %2254 = vmatpush1.msra.mxu0 %v1886
  %2255 = vmatprep.subr.mxu0 %v1891
  %2256 = vmatpush1.msra.mxu0 %v1890
  %2257 = vmatprep.subr.mxu0 %v1895
  %2258 = vmatpush1.msra.mxu0 %v1894
  %2259 = vmatprep.subr.mxu0 %v1899
  %2260 = vmatpush1.msra.mxu0 %v1898
  %2261 = vmatprep.subr.mxu0 %v1903
  %2262 = vmatpush1.msra.mxu0 %v1902
  %2263 = vmatprep.subr.mxu0 %v1907
  %2264 = vmatpush1.msra.mxu0 %v1906
  %2265 = vmatprep.subr.mxu0 %v1911
  %2266 = vmatpush1.msra.mxu0 %v1910
  %2267 = vmatprep.subr.mxu0 %v1915
  %2268 = vmatpush1.msra.mxu0 %v1914
  %2269 = vmatprep.subr.mxu0 %v1919
  %2270 = vmatpush1.msra.mxu0 %v1918
  %2271 = vmatprep.subr.mxu0 0.0
  %2272 = vmatpush1.msra.mxu0 0.0
  %2273 = vmatprep.subr.mxu0 0.0
  %2274 = vmatpush1.msra.mxu0 0.0
  %2275 = vmatprep.subr.mxu0 0.0
  %2276 = vmatpush1.msra.mxu0 0.0
  %2277 = vmatprep.subr.mxu0 0.0
  %2278 = vmatpush1.msra.mxu0 0.0
  %2279 = vmatprep.subr.mxu0 0.0
  %2280 = vmatpush1.msra.mxu0 0.0
  %2281 = vmatprep.subr.mxu0 0.0
  %2282 = vmatpush1.msra.mxu0 0.0
  %2283 = vmatprep.subr.mxu0 0.0
  %2284 = vmatpush1.msra.mxu0 0.0
  %2285 = vmatprep.subr.mxu0 0.0
  %2286 = vmatpush1.msra.mxu0 0.0
  %2287 = vmatprep.subr.mxu0 0.0
  %2288 = vmatpush1.msra.mxu0 0.0
  %2289 = vmatprep.subr.mxu0 0.0
  %2290 = vmatpush1.msra.mxu0 0.0
  %2291 = vmatprep.subr.mxu0 0.0
  %2292 = vmatpush1.msra.mxu0 0.0
  %2293 = vmatprep.subr.mxu0 0.0
  %2294 = vmatpush1.msra.mxu0 0.0
  %2295 = vmatprep.subr.mxu0 0.0
  %2296 = vmatpush1.msra.mxu0 0.0
  %2297 = vmatprep.subr.mxu0 0.0
  %2298 = vmatpush1.msra.mxu0 0.0
  %2299 = vmatprep.subr.mxu0 0.0
  %2300 = vmatpush1.msra.mxu0 0.0
  %2301 = vmatprep.subr.mxu0 0.0
  %2302 = vmatpush1.msra.mxu0 0.0
  %2303 = vmatprep.mubr.f32.mxu0 0.0
  %2304 = vmatmul.mubr.f32.gmra.mrb[0].mxu0 0.0
  %v2305 = vpop.f32.mrb[0].mxu0
  %v2306 = vadd.f32 0.0, %v2305
  %v2307 = vpop.f32.mrb[0].mxu0
  %v2308 = vadd.f32 0.0, %v2307
  %2309 = vdwg.mxu0
  %v2310 = vadd.f32 %v2009, %v2235
  %v2311 = vadd.f32 %v2011, %v2237
  %v2312 = vadd.f32 %v2122, %v2306
  %v2313 = vadd.f32 %v2124, %v2308
  %v2314 = vxor.u32 %v2310, 2147483648
  %v2315 = vmul.f32 %v2314, 1.442695
  %v2316 = vpow.pop %v2315
  %v2317 = vadd.f32 %v2316, 1.0
  %v2318 = vrcp.pop %v2317
  %v2319 = vmul.f32 1.0, %v2318
  %v2320 = vxor.u32 %v2311, 2147483648
  %v2321 = vmul.f32 %v2320, 1.442695
  %v2322 = vpow.pop %v2321
  %v2323 = vadd.f32 %v2322, 1.0
  %v2324 = vrcp.pop %v2323
  %v2325 = vmul.f32 1.0, %v2324
  %v2326 = vtanh.pop %v2312
  %v2327 = vxor.u32 %v2313, 2147483648
  %v2328 = vmul.f32 %v2327, 1.442695
  %v2329 = vpow.pop %v2328
  %v2330 = vadd.f32 %v2329, 1.0
  %v2331 = vrcp.pop %v2330
  %v2332 = vmul.f32 1.0, %v2331
  %v2333 = vmul.f32 %v2325, 0.0
  %v2334 = vmul.f32 %v2319, %v2326
  %v2335 = vadd.f32 %v2333, %v2334
  %v2336 = vtanh.pop %v2335
  %v2337 = vmul.f32 %v2332, %v2336
  %2338 = vst [vmem:[#allocation2] sm:$0xff] %v2337
  %2339 = vmatprep.subr.mxu0 %v1857
  %2340 = vmatpush1.msra.mxu0 %v1856
  %2341 = vmatprep.subr.mxu0 %v1861
  %2342 = vmatpush1.msra.mxu0 %v1860
  %2343 = vmatprep.subr.mxu0 %v1865
  %2344 = vmatpush1.msra.mxu0 %v1864
  %2345 = vmatprep.subr.mxu0 %v1869
  %2346 = vmatpush1.msra.mxu0 %v1868
  %2347 = vmatprep.subr.mxu0 %v1873
  %2348 = vmatpush1.msra.mxu0 %v1872
  %2349 = vmatprep.subr.mxu0 %v1877
  %2350 = vmatpush1.msra.mxu0 %v1876
  %2351 = vmatprep.subr.mxu0 %v1881
  %2352 = vmatpush1.msra.mxu0 %v1880
  %2353 = vmatprep.subr.mxu0 %v1885
  %2354 = vmatpush1.msra.mxu0 %v1884
  %2355 = vmatprep.subr.mxu0 %v1889
  %2356 = vmatpush1.msra.mxu0 %v1888
  %2357 = vmatprep.subr.mxu0 %v1893
  %2358 = vmatpush1.msra.mxu0 %v1892
  %2359 = vmatprep.subr.mxu0 %v1897
  %2360 = vmatpush1.msra.mxu0 %v1896
  %2361 = vmatprep.subr.mxu0 %v1901
  %2362 = vmatpush1.msra.mxu0 %v1900
  %2363 = vmatprep.subr.mxu0 %v1905
  %2364 = vmatpush1.msra.mxu0 %v1904
  %2365 = vmatprep.subr.mxu0 %v1909
  %2366 = vmatpush1.msra.mxu0 %v1908
  %2367 = vmatprep.subr.mxu0 %v1913
  %2368 = vmatpush1.msra.mxu0 %v1912
  %2369 = vmatprep.subr.mxu0 %v1917
  %2370 = vmatpush1.msra.mxu0 %v1916
  %2371 = vmatprep.subr.mxu0 0.0
  %2372 = vmatpush1.msra.mxu0 0.0
  %2373 = vmatprep.subr.mxu0 0.0
  %2374 = vmatpush1.msra.mxu0 0.0
  %2375 = vmatprep.subr.mxu0 0.0
  %2376 = vmatpush1.msra.mxu0 0.0
  %2377 = vmatprep.subr.mxu0 0.0
  %2378 = vmatpush1.msra.mxu0 0.0
  %2379 = vmatprep.subr.mxu0 0.0
  %2380 = vmatpush1.msra.mxu0 0.0
  %2381 = vmatprep.subr.mxu0 0.0
  %2382 = vmatpush1.msra.mxu0 0.0
  %2383 = vmatprep.subr.mxu0 0.0
  %2384 = vmatpush1.msra.mxu0 0.0
  %2385 = vmatprep.subr.mxu0 0.0
  %2386 = vmatpush1.msra.mxu0 0.0
  %2387 = vmatprep.subr.mxu0 0.0
  %2388 = vmatpush1.msra.mxu0 0.0
  %2389 = vmatprep.subr.mxu0 0.0
  %2390 = vmatpush1.msra.mxu0 0.0
  %2391 = vmatprep.subr.mxu0 0.0
  %2392 = vmatpush1.msra.mxu0 0.0
  %2393 = vmatprep.subr.mxu0 0.0
  %2394 = vmatpush1.msra.mxu0 0.0
  %2395 = vmatprep.subr.mxu0 0.0
  %2396 = vmatpush1.msra.mxu0 0.0
  %2397 = vmatprep.subr.mxu0 0.0
  %2398 = vmatpush1.msra.mxu0 0.0
  %2399 = vmatprep.subr.mxu0 0.0
  %2400 = vmatpush1.msra.mxu0 0.0
  %2401 = vmatprep.subr.mxu0 0.0
  %2402 = vmatpush1.msra.mxu0 0.0
  %2403 = vmatprep.mubr.f32.mxu0 0.0
  %2404 = vmatmul.mubr.f32.gmra.mrb[0].mxu0 %v2337
  %v2405 = vpop.f32.mrb[0].mxu0
  %v2406 = vadd.f32 0.0, %v2405
  %v2407 = vpop.f32.mrb[0].mxu0
  %v2408 = vadd.f32 0.0, %v2407
  %2409 = vdwg.mxu0
  %2410 = vmatprep.subr.mxu0 %v1859
  %2411 = vmatpush1.msra.mxu0 %v1858
  %2412 = vmatprep.subr.mxu0 %v1863
  %2413 = vmatpush1.msra.mxu0 %v1862
  %2414 = vmatprep.subr.mxu0 %v1867
  %2415 = vmatpush1.msra.mxu0 %v1866
  %2416 = vmatprep.subr.mxu0 %v1871
  %2417 = vmatpush1.msra.mxu0 %v1870
  %2418 = vmatprep.subr.mxu0 %v1875
  %2419 = vmatpush1.msra.mxu0 %v1874
  %2420 = vmatprep.subr.mxu0 %v1879
  %2421 = vmatpush1.msra.mxu0 %v1878
  %2422 = vmatprep.subr.mxu0 %v1883
  %2423 = vmatpush1.msra.mxu0 %v1882
  %2424 = vmatprep.subr.mxu0 %v1887
  %2425 = vmatpush1.msra.mxu0 %v1886
  %2426 = vmatprep.subr.mxu0 %v1891
  %2427 = vmatpush1.msra.mxu0 %v1890
  %2428 = vmatprep.subr.mxu0 %v1895
  %2429 = vmatpush1.msra.mxu0 %v1894
  %2430 = vmatprep.subr.mxu0 %v1899
  %2431 = vmatpush1.msra.mxu0 %v1898
  %2432 = vmatprep.subr.mxu0 %v1903
  %2433 = vmatpush1.msra.mxu0 %v1902
  %2434 = vmatprep.subr.mxu0 %v1907
  %2435 = vmatpush1.msra.mxu0 %v1906
  %2436 = vmatprep.subr.mxu0 %v1911
  %2437 = vmatpush1.msra.mxu0 %v1910
  %2438 = vmatprep.subr.mxu0 %v1915
  %2439 = vmatpush1.msra.mxu0 %v1914
  %2440 = vmatprep.subr.mxu0 %v1919
  %2441 = vmatpush1.msra.mxu0 %v1918
  %2442 = vmatprep.subr.mxu0 0.0
  %2443 = vmatpush1.msra.mxu0 0.0
  %2444 = vmatprep.subr.mxu0 0.0
  %2445 = vmatpush1.msra.mxu0 0.0
  %2446 = vmatprep.subr.mxu0 0.0
  %2447 = vmatpush1.msra.mxu0 0.0
  %2448 = vmatprep.subr.mxu0 0.0
  %2449 = vmatpush1.msra.mxu0 0.0
  %2450 = vmatprep.subr.mxu0 0.0
  %2451 = vmatpush1.msra.mxu0 0.0
  %2452 = vmatprep.subr.mxu0 0.0
  %2453 = vmatpush1.msra.mxu0 0.0
  %2454 = vmatprep.subr.mxu0 0.0
  %2455 = vmatpush1.msra.mxu0 0.0
  %2456 = vmatprep.subr.mxu0 0.0
  %2457 = vmatpush1.msra.mxu0 0.0
  %2458 = vmatprep.subr.mxu0 0.0
  %2459 = vmatpush1.msra.mxu0 0.0
  %2460 = vmatprep.subr.mxu0 0.0
  %2461 = vmatpush1.msra.mxu0 0.0
  %2462 = vmatprep.subr.mxu0 0.0
  %2463 = vmatpush1.msra.mxu0 0.0
  %2464 = vmatprep.subr.mxu0 0.0
  %2465 = vmatpush1.msra.mxu0 0.0
  %2466 = vmatprep.subr.mxu0 0.0
  %2467 = vmatpush1.msra.mxu0 0.0
  %2468 = vmatprep.subr.mxu0 0.0
  %2469 = vmatpush1.msra.mxu0 0.0
  %2470 = vmatprep.subr.mxu0 0.0
  %2471 = vmatpush1.msra.mxu0 0.0
  %2472 = vmatprep.subr.mxu0 0.0
  %2473 = vmatpush1.msra.mxu0 0.0
  %2474 = vmatprep.mubr.f32.mxu0 0.0
  %2475 = vmatmul.mubr.f32.gmra.mrb[0].mxu0 %v2337
  %v2476 = vpop.f32.mrb[0].mxu0
  %v2477 = vadd.f32 0.0, %v2476
  %v2478 = vpop.f32.mrb[0].mxu0
  %v2479 = vadd.f32 0.0, %v2478
  %2480 = vdwg.mxu0
  %v2481 = vadd.f32 %v2015, %v2406
  %v2482 = vadd.f32 %v2017, %v2408
  %v2483 = vadd.f32 %v2128, %v2477
  %v2484 = vadd.f32 %v2130, %v2479
  %v2485 = vxor.u32 %v2481, 2147483648
  %v2486 = vmul.f32 %v2485, 1.442695
  %v2487 = vpow.pop %v2486
  %v2488 = vadd.f32 %v2487, 1.0
  %v2489 = vrcp.pop %v2488
  %v2490 = vmul.f32 1.0, %v2489
  %v2491 = vxor.u32 %v2482, 2147483648
  %v2492 = vmul.f32 %v2491, 1.442695
  %v2493 = vpow.pop %v2492
  %v2494 = vadd.f32 %v2493, 1.0
  %v2495 = vrcp.pop %v2494
  %v2496 = vmul.f32 1.0, %v2495
  %v2497 = vtanh.pop %v2483
  %v2498 = vxor.u32 %v2484, 2147483648
  %v2499 = vmul.f32 %v2498, 1.442695
  %v2500 = vpow.pop %v2499
  %v2501 = vadd.f32 %v2500, 1.0
  %v2502 = vrcp.pop %v2501
  %v2503 = vmul.f32 1.0, %v2502
  %v2504 = vmul.f32 %v2496, %v2335
  %v2505 = vmul.f32 %v2490, %v2497
  %v2506 = vadd.f32 %v2504, %v2505
  %v2507 = vtanh.pop %v2506
  %v2508 = vmul.f32 %v2503, %v2507
  %2509 = vst [vmem:[#allocation2 + $0x8] sm:$0xff] %v2508
  %2510 = vmatprep.subr.mxu0 %v1857
  %2511 = vmatpush1.msra.mxu0 %v1856
  %2512 = vmatprep.subr.mxu0 %v1861
  %2513 = vmatpush1.msra.mxu0 %v1860
  %2514 = vmatprep.subr.mxu0 %v1865
  %2515 = vmatpush1.msra.mxu0 %v1864
  %2516 = vmatprep.subr.mxu0 %v1869
  %2517 = vmatpush1.msra.mxu0 %v1868
  %2518 = vmatprep.subr.mxu0 %v1873
  %2519 = vmatpush1.msra.mxu0 %v1872
  %2520 = vmatprep.subr.mxu0 %v1877
  %2521 = vmatpush1.msra.mxu0 %v1876
  %2522 = vmatprep.subr.mxu0 %v1881
  %2523 = vmatpush1.msra.mxu0 %v1880
  %2524 = vmatprep.subr.mxu0 %v1885
  %2525 = vmatpush1.msra.mxu0 %v1884
  %2526 = vmatprep.subr.mxu0 %v1889
  %2527 = vmatpush1.msra.mxu0 %v1888
  %2528 = vmatprep.subr.mxu0 %v1893
  %2529 = vmatpush1.msra.mxu0 %v1892
  %2530 = vmatprep.subr.mxu0 %v1897
  %2531 = vmatpush1.msra.mxu0 %v1896
  %2532 = vmatprep.subr.mxu0 %v1901
  %2533 = vmatpush1.msra.mxu0 %v1900
  %2534 = vmatprep.subr.mxu0 %v1905
  %2535 = vmatpush1.msra.mxu0 %v1904
  %2536 = vmatprep.subr.mxu0 %v1909
  %2537 = vmatpush1.msra.mxu0 %v1908
  %2538 = vmatprep.subr.mxu0 %v1913
  %2539 = vmatpush1.msra.mxu0 %v1912
  %2540 = vmatprep.subr.mxu0 %v1917
  %2541 = vmatpush1.msra.mxu0 %v1916
  %2542 = vmatprep.subr.mxu0 0.0
  %2543 = vmatpush1.msra.mxu0 0.0
  %2544 = vmatprep.subr.mxu0 0.0
  %2545 = vmatpush1.msra.mxu0 0.0
  %2546 = vmatprep.subr.mxu0 0.0
  %2547 = vmatpush1.msra.mxu0 0.0
  %2548 = vmatprep.subr.mxu0 0.0
  %2549 = vmatpush1.msra.mxu0 0.0
  %2550 = vmatprep.subr.mxu0 0.0
  %2551 = vmatpush1.msra.mxu0 0.0
  %2552 = vmatprep.subr.mxu0 0.0
  %2553 = vmatpush1.msra.mxu0 0.0
  %2554 = vmatprep.subr.mxu0 0.0
  %2555 = vmatpush1.msra.mxu0 0.0
  %2556 = vmatprep.subr.mxu0 0.0
  %2557 = vmatpush1.msra.mxu0 0.0
  %2558 = vmatprep.subr.mxu0 0.0
  %2559 = vmatpush1.msra.mxu0 0.0
  %2560 = vmatprep.subr.mxu0 0.0
  %2561 = vmatpush1.msra.mxu0 0.0
  %2562 = vmatprep.subr.mxu0 0.0
  %2563 = vmatpush1.msra.mxu0 0.0
  %2564 = vmatprep.subr.mxu0 0.0
  %2565 = vmatpush1.msra.mxu0 0.0
  %2566 = vmatprep.subr.mxu0 0.0
  %2567 = vmatpush1.msra.mxu0 0.0
  %2568 = vmatprep.subr.mxu0 0.0
  %2569 = vmatpush1.msra.mxu0 0.0
  %2570 = vmatprep.subr.mxu0 0.0
  %2571 = vmatpush1.msra.mxu0 0.0
  %2572 = vmatprep.subr.mxu0 0.0
  %2573 = vmatpush1.msra.mxu0 0.0
  %2574 = vmatprep.mubr.f32.mxu0 0.0
  %2575 = vmatmul.mubr.f32.gmra.mrb[0].mxu0 %v2508
  %v2576 = vpop.f32.mrb[0].mxu0
  %v2577 = vadd.f32 0.0, %v2576
  %v2578 = vpop.f32.mrb[0].mxu0
  %v2579 = vadd.f32 0.0, %v2578
  %2580 = vdwg.mxu0
  %2581 = vmatprep.subr.mxu0 %v1859
  %2582 = vmatpush1.msra.mxu0 %v1858
  %2583 = vmatprep.subr.mxu0 %v1863
  %2584 = vmatpush1.msra.mxu0 %v1862
  %2585 = vmatprep.subr.mxu0 %v1867
  %2586 = vmatpush1.msra.mxu0 %v1866
  %2587 = vmatprep.subr.mxu0 %v1871
  %2588 = vmatpush1.msra.mxu0 %v1870
  %2589 = vmatprep.subr.mxu0 %v1875
  %2590 = vmatpush1.msra.mxu0 %v1874
  %2591 = vmatprep.subr.mxu0 %v1879
  %2592 = vmatpush1.msra.mxu0 %v1878
  %2593 = vmatprep.subr.mxu0 %v1883
  %2594 = vmatpush1.msra.mxu0 %v1882
  %2595 = vmatprep.subr.mxu0 %v1887
  %2596 = vmatpush1.msra.mxu0 %v1886
  %2597 = vmatprep.subr.mxu0 %v1891
  %2598 = vmatpush1.msra.mxu0 %v1890
  %2599 = vmatprep.subr.mxu0 %v1895
  %2600 = vmatpush1.msra.mxu0 %v1894
  %2601 = vmatprep.subr.mxu0 %v1899
  %2602 = vmatpush1.msra.mxu0 %v1898
  %2603 = vmatprep.subr.mxu0 %v1903
  %2604 = vmatpush1.msra.mxu0 %v1902
  %2605 = vmatprep.subr.mxu0 %v1907
  %2606 = vmatpush1.msra.mxu0 %v1906
  %2607 = vmatprep.subr.mxu0 %v1911
  %2608 = vmatpush1.msra.mxu0 %v1910
  %2609 = vmatprep.subr.mxu0 %v1915
  %2610 = vmatpush1.msra.mxu0 %v1914
  %2611 = vmatprep.subr.mxu0 %v1919
  %2612 = vmatpush1.msra.mxu0 %v1918
  %2613 = vmatprep.subr.mxu0 0.0
  %2614 = vmatpush1.msra.mxu0 0.0
  %2615 = vmatprep.subr.mxu0 0.0
  %2616 = vmatpush1.msra.mxu0 0.0
  %2617 = vmatprep.subr.mxu0 0.0
  %2618 = vmatpush1.msra.mxu0 0.0
  %2619 = vmatprep.subr.mxu0 0.0
  %2620 = vmatpush1.msra.mxu0 0.0
  %2621 = vmatprep.subr.mxu0 0.0
  %2622 = vmatpush1.msra.mxu0 0.0
  %2623 = vmatprep.subr.mxu0 0.0
  %2624 = vmatpush1.msra.mxu0 0.0
  %2625 = vmatprep.subr.mxu0 0.0
  %2626 = vmatpush1.msra.mxu0 0.0
  %2627 = vmatprep.subr.mxu0 0.0
  %2628 = vmatpush1.msra.mxu0 0.0
  %2629 = vmatprep.subr.mxu0 0.0
  %2630 = vmatpush1.msra.mxu0 0.0
  %2631 = vmatprep.subr.mxu0 0.0
  %2632 = vmatpush1.msra.mxu0 0.0
  %2633 = vmatprep.subr.mxu0 0.0
  %2634 = vmatpush1.msra.mxu0 0.0
  %2635 = vmatprep.subr.mxu0 0.0
  %2636 = vmatpush1.msra.mxu0 0.0
  %2637 = vmatprep.subr.mxu0 0.0
  %2638 = vmatpush1.msra.mxu0 0.0
  %2639 = vmatprep.subr.mxu0 0.0
  %2640 = vmatpush1.msra.mxu0 0.0
  %2641 = vmatprep.subr.mxu0 0.0
  %2642 = vmatpush1.msra.mxu0 0.0
  %2643 = vmatprep.subr.mxu0 0.0
  %2644 = vmatpush1.msra.mxu0 0.0
  %2645 = vmatprep.mubr.f32.mxu0 0.0
  %2646 = vmatmul.mubr.f32.gmra.mrb[0].mxu0 %v2508
  %v2647 = vpop.f32.mrb[0].mxu0
  %v2648 = vadd.f32 0.0, %v2647
  %v2649 = vpop.f32.mrb[0].mxu0
  %v2650 = vadd.f32 0.0, %v2649
  %2651 = vdwg.mxu0
  %v2652 = vadd.f32 %v2021, %v2577
  %v2653 = vadd.f32 %v2023, %v2579
  %v2654 = vadd.f32 %v2134, %v2648
  %v2655 = vadd.f32 %v2136, %v2650
  %v2656 = vxor.u32 %v2652, 2147483648
  %v2657 = vmul.f32 %v2656, 1.442695
  %v2658 = vpow.pop %v2657
  %v2659 = vadd.f32 %v2658, 1.0
  %v2660 = vrcp.pop %v2659
  %v2661 = vmul.f32 1.0, %v2660
  %v2662 = vxor.u32 %v2653, 2147483648
  %v2663 = vmul.f32 %v2662, 1.442695
  %v2664 = vpow.pop %v2663
  %v2665 = vadd.f32 %v2664, 1.0
  %v2666 = vrcp.pop %v2665
  %v2667 = vmul.f32 1.0, %v2666
  %v2668 = vtanh.pop %v2654
  %v2669 = vxor.u32 %v2655, 2147483648
  %v2670 = vmul.f32 %v2669, 1.442695
  %v2671 = vpow.pop %v2670
  %v2672 = vadd.f32 %v2671, 1.0
  %v2673 = vrcp.pop %v2672
  %v2674 = vmul.f32 1.0, %v2673
  %v2675 = vmul.f32 %v2667, %v2506
  %v2676 = vmul.f32 %v2661, %v2668
  %v2677 = vadd.f32 %v2675, %v2676
  %v2678 = vtanh.pop %v2677
  %v2679 = vmul.f32 %v2674, %v2678
  %2680 = vst [vmem:[#allocation2 + $0x10] sm:$0xff] %v2679
  %2681 = vmatprep.subr.mxu0 %v1857
  %2682 = vmatpush1.msra.mxu0 %v1856
  %2683 = vmatprep.subr.mxu0 %v1861
  %2684 = vmatpush1.msra.mxu0 %v1860
  %2685 = vmatprep.subr.mxu0 %v1865
  %2686 = vmatpush1.msra.mxu0 %v1864
  %2687 = vmatprep.subr.mxu0 %v1869
  %2688 = vmatpush1.msra.mxu0 %v1868
  %2689 = vmatprep.subr.mxu0 %v1873
  %2690 = vmatpush1.msra.mxu0 %v1872
  %2691 = vmatprep.subr.mxu0 %v1877
  %2692 = vmatpush1.msra.mxu0 %v1876
  %2693 = vmatprep.subr.mxu0 %v1881
  %2694 = vmatpush1.msra.mxu0 %v1880
  %2695 = vmatprep.subr.mxu0 %v1885
  %2696 = vmatpush1.msra.mxu0 %v1884
  %2697 = vmatprep.subr.mxu0 %v1889
  %2698 = vmatpush1.msra.mxu0 %v1888
  %2699 = vmatprep.subr.mxu0 %v1893
  %2700 = vmatpush1.msra.mxu0 %v1892
  %2701 = vmatprep.subr.mxu0 %v1897
  %2702 = vmatpush1.msra.mxu0 %v1896
  %2703 = vmatprep.subr.mxu0 %v1901
  %2704 = vmatpush1.msra.mxu0 %v1900
  %2705 = vmatprep.subr.mxu0 %v1905
  %2706 = vmatpush1.msra.mxu0 %v1904
  %2707 = vmatprep.subr.mxu0 %v1909
  %2708 = vmatpush1.msra.mxu0 %v1908
  %2709 = vmatprep.subr.mxu0 %v1913
  %2710 = vmatpush1.msra.mxu0 %v1912
  %2711 = vmatprep.subr.mxu0 %v1917
  %2712 = vmatpush1.msra.mxu0 %v1916
  %2713 = vmatprep.subr.mxu0 0.0
  %2714 = vmatpush1.msra.mxu0 0.0
  %2715 = vmatprep.subr.mxu0 0.0
  %2716 = vmatpush1.msra.mxu0 0.0
  %2717 = vmatprep.subr.mxu0 0.0
  %2718 = vmatpush1.msra.mxu0 0.0
  %2719 = vmatprep.subr.mxu0 0.0
  %2720 = vmatpush1.msra.mxu0 0.0
  %2721 = vmatprep.subr.mxu0 0.0
  %2722 = vmatpush1.msra.mxu0 0.0
  %2723 = vmatprep.subr.mxu0 0.0
  %2724 = vmatpush1.msra.mxu0 0.0
  %2725 = vmatprep.subr.mxu0 0.0
  %2726 = vmatpush1.msra.mxu0 0.0
  %2727 = vmatprep.subr.mxu0 0.0
  %2728 = vmatpush1.msra.mxu0 0.0
  %2729 = vmatprep.subr.mxu0 0.0
  %2730 = vmatpush1.msra.mxu0 0.0
  %2731 = vmatprep.subr.mxu0 0.0
  %2732 = vmatpush1.msra.mxu0 0.0
  %2733 = vmatprep.subr.mxu0 0.0
  %2734 = vmatpush1.msra.mxu0 0.0
  %2735 = vmatprep.subr.mxu0 0.0
  %2736 = vmatpush1.msra.mxu0 0.0
  %2737 = vmatprep.subr.mxu0 0.0
  %2738 = vmatpush1.msra.mxu0 0.0
  %2739 = vmatprep.subr.mxu0 0.0
  %2740 = vmatpush1.msra.mxu0 0.0
  %2741 = vmatprep.subr.mxu0 0.0
  %2742 = vmatpush1.msra.mxu0 0.0
  %2743 = vmatprep.subr.mxu0 0.0
  %2744 = vmatpush1.msra.mxu0 0.0
  %2745 = vmatprep.mubr.f32.mxu0 0.0
  %2746 = vmatmul.mubr.f32.gmra.mrb[0].mxu0 %v2679
  %v2747 = vpop.f32.mrb[0].mxu0
  %v2748 = vadd.f32 0.0, %v2747
  %v2749 = vpop.f32.mrb[0].mxu0
  %v2750 = vadd.f32 0.0, %v2749
  %2751 = vdwg.mxu0
  %2752 = vmatprep.subr.mxu0 %v1859
  %2753 = vmatpush1.msra.mxu0 %v1858
  %2754 = vmatprep.subr.mxu0 %v1863
  %2755 = vmatpush1.msra.mxu0 %v1862
  %2756 = vmatprep.subr.mxu0 %v1867
  %2757 = vmatpush1.msra.mxu0 %v1866
  %2758 = vmatprep.subr.mxu0 %v1871
  %2759 = vmatpush1.msra.mxu0 %v1870
  %2760 = vmatprep.subr.mxu0 %v1875
  %2761 = vmatpush1.msra.mxu0 %v1874
  %2762 = vmatprep.subr.mxu0 %v1879
  %2763 = vmatpush1.msra.mxu0 %v1878
  %2764 = vmatprep.subr.mxu0 %v1883
  %2765 = vmatpush1.msra.mxu0 %v1882
  %2766 = vmatprep.subr.mxu0 %v1887
  %2767 = vmatpush1.msra.mxu0 %v1886
  %2768 = vmatprep.subr.mxu0 %v1891
  %2769 = vmatpush1.msra.mxu0 %v1890
  %2770 = vmatprep.subr.mxu0 %v1895
  %2771 = vmatpush1.msra.mxu0 %v1894
  %2772 = vmatprep.subr.mxu0 %v1899
  %2773 = vmatpush1.msra.mxu0 %v1898
  %2774 = vmatprep.subr.mxu0 %v1903
  %2775 = vmatpush1.msra.mxu0 %v1902
  %2776 = vmatprep.subr.mxu0 %v1907
  %2777 = vmatpush1.msra.mxu0 %v1906
  %2778 = vmatprep.subr.mxu0 %v1911
  %2779 = vmatpush1.msra.mxu0 %v1910
  %2780 = vmatprep.subr.mxu0 %v1915
  %2781 = vmatpush1.msra.mxu0 %v1914
  %2782 = vmatprep.subr.mxu0 %v1919
  %2783 = vmatpush1.msra.mxu0 %v1918
  %2784 = vmatprep.subr.mxu0 0.0
  %2785 = vmatpush1.msra.mxu0 0.0
  %2786 = vmatprep.subr.mxu0 0.0
  %2787 = vmatpush1.msra.mxu0 0.0
  %2788 = vmatprep.subr.mxu0 0.0
  %2789 = vmatpush1.msra.mxu0 0.0
  %2790 = vmatprep.subr.mxu0 0.0
  %2791 = vmatpush1.msra.mxu0 0.0
  %2792 = vmatprep.subr.mxu0 0.0
  %2793 = vmatpush1.msra.mxu0 0.0
  %2794 = vmatprep.subr.mxu0 0.0
  %2795 = vmatpush1.msra.mxu0 0.0
  %2796 = vmatprep.subr.mxu0 0.0
  %2797 = vmatpush1.msra.mxu0 0.0
  %2798 = vmatprep.subr.mxu0 0.0
  %2799 = vmatpush1.msra.mxu0 0.0
  %2800 = vmatprep.subr.mxu0 0.0
  %2801 = vmatpush1.msra.mxu0 0.0
  %2802 = vmatprep.subr.mxu0 0.0
  %2803 = vmatpush1.msra.mxu0 0.0
  %2804 = vmatprep.subr.mxu0 0.0
  %2805 = vmatpush1.msra.mxu0 0.0
  %2806 = vmatprep.subr.mxu0 0.0
  %2807 = vmatpush1.msra.mxu0 0.0
  %2808 = vmatprep.subr.mxu0 0.0
  %2809 = vmatpush1.msra.mxu0 0.0
  %2810 = vmatprep.subr.mxu0 0.0
  %2811 = vmatpush1.msra.mxu0 0.0
  %2812 = vmatprep.subr.mxu0 0.0
  %2813 = vmatpush1.msra.mxu0 0.0
  %2814 = vmatprep.subr.mxu0 0.0
  %2815 = vmatpush1.msra.mxu0 0.0
  %2816 = vmatprep.mubr.f32.mxu0 0.0
  %2817 = vmatmul.mubr.f32.gmra.mrb[0].mxu0 %v2679
  %v2818 = vpop.f32.mrb[0].mxu0
  %v2819 = vadd.f32 0.0, %v2818
  %v2820 = vpop.f32.mrb[0].mxu0
  %v2821 = vadd.f32 0.0, %v2820
  %2822 = vdwg.mxu0
  %v2823 = vadd.f32 %v2027, %v2748
  %v2824 = vadd.f32 %v2029, %v2750
  %v2825 = vadd.f32 %v2140, %v2819
  %v2826 = vadd.f32 %v2142, %v2821
  %v2827 = vxor.u32 %v2823, 2147483648
  %v2828 = vmul.f32 %v2827, 1.442695
  %v2829 = vpow.pop %v2828
  %v2830 = vadd.f32 %v2829, 1.0
  %v2831 = vrcp.pop %v2830
  %v2832 = vmul.f32 1.0, %v2831
  %v2833 = vxor.u32 %v2824, 2147483648
  %v2834 = vmul.f32 %v2833, 1.442695
  %v2835 = vpow.pop %v2834
  %v2836 = vadd.f32 %v2835, 1.0
  %v2837 = vrcp.pop %v2836
  %v2838 = vmul.f32 1.0, %v2837
  %v2839 = vtanh.pop %v2825
  %v2840 = vxor.u32 %v2826, 2147483648
  %v2841 = vmul.f32 %v2840, 1.442695
  %v2842 = vpow.pop %v2841
  %v2843 = vadd.f32 %v2842, 1.0
  %v2844 = vrcp.pop %v2843
  %v2845 = vmul.f32 1.0, %v2844
  %v2846 = vmul.f32 %v2838, %v2677
  %v2847 = vmul.f32 %v2832, %v2839
  %v2848 = vadd.f32 %v2846, %v2847
  %v2849 = vtanh.pop %v2848
  %v2850 = vmul.f32 %v2845, %v2849
  %2851 = vst [vmem:[#allocation2 + $0x18] sm:$0xff] %v2850
  %2852 = vmatprep.subr.mxu0 %v1857
  %2853 = vmatpush1.msra.mxu0 %v1856
  %2854 = vmatprep.subr.mxu0 %v1861
  %2855 = vmatpush1.msra.mxu0 %v1860
  %2856 = vmatprep.subr.mxu0 %v1865
  %2857 = vmatpush1.msra.mxu0 %v1864
  %2858 = vmatprep.subr.mxu0 %v1869
  %2859 = vmatpush1.msra.mxu0 %v1868
  %2860 = vmatprep.subr.mxu0 %v1873
  %2861 = vmatpush1.msra.mxu0 %v1872
  %2862 = vmatprep.subr.mxu0 %v1877
  %2863 = vmatpush1.msra.mxu0 %v1876
  %2864 = vmatprep.subr.mxu0 %v1881
  %2865 = vmatpush1.msra.mxu0 %v1880
  %2866 = vmatprep.subr.mxu0 %v1885
  %2867 = vmatpush1.msra.mxu0 %v1884
  %2868 = vmatprep.subr.mxu0 %v1889
  %2869 = vmatpush1.msra.mxu0 %v1888
  %2870 = vmatprep.subr.mxu0 %v1893
  %2871 = vmatpush1.msra.mxu0 %v1892
  %2872 = vmatprep.subr.mxu0 %v1897
  %2873 = vmatpush1.msra.mxu0 %v1896
  %2874 = vmatprep.subr.mxu0 %v1901
  %2875 = vmatpush1.msra.mxu0 %v1900
  %2876 = vmatprep.subr.mxu0 %v1905
  %2877 = vmatpush1.msra.mxu0 %v1904
  %2878 = vmatprep.subr.mxu0 %v1909
  %2879 = vmatpush1.msra.mxu0 %v1908
  %2880 = vmatprep.subr.mxu0 %v1913
  %2881 = vmatpush1.msra.mxu0 %v1912
  %2882 = vmatprep.subr.mxu0 %v1917
  %2883 = vmatpush1.msra.mxu0 %v1916
  %2884 = vmatprep.subr.mxu0 0.0
  %2885 = vmatpush1.msra.mxu0 0.0
  %2886 = vmatprep.subr.mxu0 0.0
  %2887 = vmatpush1.msra.mxu0 0.0
  %2888 = vmatprep.subr.mxu0 0.0
  %2889 = vmatpush1.msra.mxu0 0.0
  %2890 = vmatprep.subr.mxu0 0.0
  %2891 = vmatpush1.msra.mxu0 0.0
  %2892 = vmatprep.subr.mxu0 0.0
  %2893 = vmatpush1.msra.mxu0 0.0
  %2894 = vmatprep.subr.mxu0 0.0
  %2895 = vmatpush1.msra.mxu0 0.0
  %2896 = vmatprep.subr.mxu0 0.0
  %2897 = vmatpush1.msra.mxu0 0.0
  %2898 = vmatprep.subr.mxu0 0.0
  %2899 = vmatpush1.msra.mxu0 0.0
  %2900 = vmatprep.subr.mxu0 0.0
  %2901 = vmatpush1.msra.mxu0 0.0
  %2902 = vmatprep.subr.mxu0 0.0
  %2903 = vmatpush1.msra.mxu0 0.0
  %2904 = vmatprep.subr.mxu0 0.0
  %2905 = vmatpush1.msra.mxu0 0.0
  %2906 = vmatprep.subr.mxu0 0.0
  %2907 = vmatpush1.msra.mxu0 0.0
  %2908 = vmatprep.subr.mxu0 0.0
  %2909 = vmatpush1.msra.mxu0 0.0
  %2910 = vmatprep.subr.mxu0 0.0
  %2911 = vmatpush1.msra.mxu0 0.0
  %2912 = vmatprep.subr.mxu0 0.0
  %2913 = vmatpush1.msra.mxu0 0.0
  %2914 = vmatprep.subr.mxu0 0.0
  %2915 = vmatpush1.msra.mxu0 0.0
  %2916 = vmatprep.mubr.f32.mxu0 0.0
  %2917 = vmatmul.mubr.f32.gmra.mrb[0].mxu0 %v2850
  %v2918 = vpop.f32.mrb[0].mxu0
  %v2919 = vadd.f32 0.0, %v2918
  %v2920 = vpop.f32.mrb[0].mxu0
  %v2921 = vadd.f32 0.0, %v2920
  %2922 = vdwg.mxu0
  %2923 = vmatprep.subr.mxu0 %v1859
  %2924 = vmatpush1.msra.mxu0 %v1858
  %2925 = vmatprep.subr.mxu0 %v1863
  %2926 = vmatpush1.msra.mxu0 %v1862
  %2927 = vmatprep.subr.mxu0 %v1867
  %2928 = vmatpush1.msra.mxu0 %v1866
  %2929 = vmatprep.subr.mxu0 %v1871
  %2930 = vmatpush1.msra.mxu0 %v1870
  %2931 = vmatprep.subr.mxu0 %v1875
  %2932 = vmatpush1.msra.mxu0 %v1874
  %2933 = vmatprep.subr.mxu0 %v1879
  %2934 = vmatpush1.msra.mxu0 %v1878
  %2935 = vmatprep.subr.mxu0 %v1883
  %2936 = vmatpush1.msra.mxu0 %v1882
  %2937 = vmatprep.subr.mxu0 %v1887
  %2938 = vmatpush1.msra.mxu0 %v1886
  %2939 = vmatprep.subr.mxu0 %v1891
  %2940 = vmatpush1.msra.mxu0 %v1890
  %2941 = vmatprep.subr.mxu0 %v1895
  %2942 = vmatpush1.msra.mxu0 %v1894
  %2943 = vmatprep.subr.mxu0 %v1899
  %2944 = vmatpush1.msra.mxu0 %v1898
  %2945 = vmatprep.subr.mxu0 %v1903
  %2946 = vmatpush1.msra.mxu0 %v1902
  %2947 = vmatprep.subr.mxu0 %v1907
  %2948 = vmatpush1.msra.mxu0 %v1906
  %2949 = vmatprep.subr.mxu0 %v1911
  %2950 = vmatpush1.msra.mxu0 %v1910
  %2951 = vmatprep.subr.mxu0 %v1915
  %2952 = vmatpush1.msra.mxu0 %v1914
  %2953 = vmatprep.subr.mxu0 %v1919
  %2954 = vmatpush1.msra.mxu0 %v1918
  %2955 = vmatprep.subr.mxu0 0.0
  %2956 = vmatpush1.msra.mxu0 0.0
  %2957 = vmatprep.subr.mxu0 0.0
  %2958 = vmatpush1.msra.mxu0 0.0
  %2959 = vmatprep.subr.mxu0 0.0
  %2960 = vmatpush1.msra.mxu0 0.0
  %2961 = vmatprep.subr.mxu0 0.0
  %2962 = vmatpush1.msra.mxu0 0.0
  %2963 = vmatprep.subr.mxu0 0.0
  %2964 = vmatpush1.msra.mxu0 0.0
  %2965 = vmatprep.subr.mxu0 0.0
  %2966 = vmatpush1.msra.mxu0 0.0
  %2967 = vmatprep.subr.mxu0 0.0
  %2968 = vmatpush1.msra.mxu0 0.0
  %2969 = vmatprep.subr.mxu0 0.0
  %2970 = vmatpush1.msra.mxu0 0.0
  %2971 = vmatprep.subr.mxu0 0.0
  %2972 = vmatpush1.msra.mxu0 0.0
  %2973 = vmatprep.subr.mxu0 0.0
  %2974 = vmatpush1.msra.mxu0 0.0
  %2975 = vmatprep.subr.mxu0 0.0
  %2976 = vmatpush1.msra.mxu0 0.0
  %2977 = vmatprep.subr.mxu0 0.0
  %2978 = vmatpush1.msra.mxu0 0.0
  %2979 = vmatprep.subr.mxu0 0.0
  %2980 = vmatpush1.msra.mxu0 0.0
  %2981 = vmatprep.subr.mxu0 0.0
  %2982 = vmatpush1.msra.mxu0 0.0
  %2983 = vmatprep.subr.mxu0 0.0
  %2984 = vmatpush1.msra.mxu0 0.0
  %2985 = vmatprep.subr.mxu0 0.0
  %2986 = vmatpush1.msra.mxu0 0.0
  %2987 = vmatprep.mubr.f32.mxu0 0.0
  %2988 = vmatmul.mubr.f32.gmra.mrb[0].mxu0 %v2850
  %v2989 = vpop.f32.mrb[0].mxu0
  %v2990 = vadd.f32 0.0, %v2989
  %v2991 = vpop.f32.mrb[0].mxu0
  %v2992 = vadd.f32 0.0, %v2991
  %2993 = vdwg.mxu0
  %v2994 = vadd.f32 %v2033, %v2919
  %v2995 = vadd.f32 %v2035, %v2921
  %v2996 = vadd.f32 %v2146, %v2990
  %v2997 = vadd.f32 %v2148, %v2992
  %v2998 = vxor.u32 %v2994, 2147483648
  %v2999 = vmul.f32 %v2998, 1.442695
  %v3000 = vpow.pop %v2999
  %v3001 = vadd.f32 %v3000, 1.0
  %v3002 = vrcp.pop %v3001
  %v3003 = vmul.f32 1.0, %v3002
  %v3004 = vxor.u32 %v2995, 2147483648
  %v3005 = vmul.f32 %v3004, 1.442695
  %v3006 = vpow.pop %v3005
  %v3007 = vadd.f32 %v3006, 1.0
  %v3008 = vrcp.pop %v3007
  %v3009 = vmul.f32 1.0, %v3008
  %v3010 = vtanh.pop %v2996
  %v3011 = vxor.u32 %v2997, 2147483648
  %v3012 = vmul.f32 %v3011, 1.442695
  %v3013 = vpow.pop %v3012
  %v3014 = vadd.f32 %v3013, 1.0
  %v3015 = vrcp.pop %v3014
  %v3016 = vmul.f32 1.0, %v3015
  %v3017 = vmul.f32 %v3009, %v2848
  %v3018 = vmul.f32 %v3003, %v3010
  %v3019 = vadd.f32 %v3017, %v3018
  %v3020 = vtanh.pop %v3019
  %v3021 = vmul.f32 %v3016, %v3020
  %3022 = vst [vmem:[#allocation2 + $0x20] sm:$0xff] %v3021
  %3023 = vmatprep.subr.mxu0 %v1857
  %3024 = vmatpush1.msra.mxu0 %v1856
  %3025 = vmatprep.subr.mxu0 %v1861
  %3026 = vmatpush1.msra.mxu0 %v1860
  %3027 = vmatprep.subr.mxu0 %v1865
  %3028 = vmatpush1.msra.mxu0 %v1864
  %3029 = vmatprep.subr.mxu0 %v1869
  %3030 = vmatpush1.msra.mxu0 %v1868
  %3031 = vmatprep.subr.mxu0 %v1873
  %3032 = vmatpush1.msra.mxu0 %v1872
  %3033 = vmatprep.subr.mxu0 %v1877
  %3034 = vmatpush1.msra.mxu0 %v1876
  %3035 = vmatprep.subr.mxu0 %v1881
  %3036 = vmatpush1.msra.mxu0 %v1880
  %3037 = vmatprep.subr.mxu0 %v1885
  %3038 = vmatpush1.msra.mxu0 %v1884
  %3039 = vmatprep.subr.mxu0 %v1889
  %3040 = vmatpush1.msra.mxu0 %v1888
  %3041 = vmatprep.subr.mxu0 %v1893
  %3042 = vmatpush1.msra.mxu0 %v1892
  %3043 = vmatprep.subr.mxu0 %v1897
  %3044 = vmatpush1.msra.mxu0 %v1896
  %3045 = vmatprep.subr.mxu0 %v1901
  %3046 = vmatpush1.msra.mxu0 %v1900
  %3047 = vmatprep.subr.mxu0 %v1905
  %3048 = vmatpush1.msra.mxu0 %v1904
  %3049 = vmatprep.subr.mxu0 %v1909
  %3050 = vmatpush1.msra.mxu0 %v1908
  %3051 = vmatprep.subr.mxu0 %v1913
  %3052 = vmatpush1.msra.mxu0 %v1912
  %3053 = vmatprep.subr.mxu0 %v1917
  %3054 = vmatpush1.msra.mxu0 %v1916
  %3055 = vmatprep.subr.mxu0 0.0
  %3056 = vmatpush1.msra.mxu0 0.0
  %3057 = vmatprep.subr.mxu0 0.0
  %3058 = vmatpush1.msra.mxu0 0.0
  %3059 = vmatprep.subr.mxu0 0.0
  %3060 = vmatpush1.msra.mxu0 0.0
  %3061 = vmatprep.subr.mxu0 0.0
  %3062 = vmatpush1.msra.mxu0 0.0
  %3063 = vmatprep.subr.mxu0 0.0
  %3064 = vmatpush1.msra.mxu0 0.0
  %3065 = vmatprep.subr.mxu0 0.0
  %3066 = vmatpush1.msra.mxu0 0.0
  %3067 = vmatprep.subr.mxu0 0.0
  %3068 = vmatpush1.msra.mxu0 0.0
  %3069 = vmatprep.subr.mxu0 0.0
  %3070 = vmatpush1.msra.mxu0 0.0
  %3071 = vmatprep.subr.mxu0 0.0
  %3072 = vmatpush1.msra.mxu0 0.0
  %3073 = vmatprep.subr.mxu0 0.0
  %3074 = vmatpush1.msra.mxu0 0.0
  %3075 = vmatprep.subr.mxu0 0.0
  %3076 = vmatpush1.msra.mxu0 0.0
  %3077 = vmatprep.subr.mxu0 0.0
  %3078 = vmatpush1.msra.mxu0 0.0
  %3079 = vmatprep.subr.mxu0 0.0
  %3080 = vmatpush1.msra.mxu0 0.0
  %3081 = vmatprep.subr.mxu0 0.0
  %3082 = vmatpush1.msra.mxu0 0.0
  %3083 = vmatprep.subr.mxu0 0.0
  %3084 = vmatpush1.msra.mxu0 0.0
  %3085 = vmatprep.subr.mxu0 0.0
  %3086 = vmatpush1.msra.mxu0 0.0
  %3087 = vmatprep.mubr.f32.mxu0 0.0
  %3088 = vmatmul.mubr.f32.gmra.mrb[0].mxu0 %v3021
  %v3089 = vpop.f32.mrb[0].mxu0
  %v3090 = vadd.f32 0.0, %v3089
  %v3091 = vpop.f32.mrb[0].mxu0
  %v3092 = vadd.f32 0.0, %v3091
  %3093 = vdwg.mxu0
  %3094 = vmatprep.subr.mxu0 %v1859
  %3095 = vmatpush1.msra.mxu0 %v1858
  %3096 = vmatprep.subr.mxu0 %v1863
  %3097 = vmatpush1.msra.mxu0 %v1862
  %3098 = vmatprep.subr.mxu0 %v1867
  %3099 = vmatpush1.msra.mxu0 %v1866
  %3100 = vmatprep.subr.mxu0 %v1871
  %3101 = vmatpush1.msra.mxu0 %v1870
  %3102 = vmatprep.subr.mxu0 %v1875
  %3103 = vmatpush1.msra.mxu0 %v1874
  %3104 = vmatprep.subr.mxu0 %v1879
  %3105 = vmatpush1.msra.mxu0 %v1878
  %3106 = vmatprep.subr.mxu0 %v1883
  %3107 = vmatpush1.msra.mxu0 %v1882
  %3108 = vmatprep.subr.mxu0 %v1887
  %3109 = vmatpush1.msra.mxu0 %v1886
  %3110 = vmatprep.subr.mxu0 %v1891
  %3111 = vmatpush1.msra.mxu0 %v1890
  %3112 = vmatprep.subr.mxu0 %v1895
  %3113 = vmatpush1.msra.mxu0 %v1894
  %3114 = vmatprep.subr.mxu0 %v1899
  %3115 = vmatpush1.msra.mxu0 %v1898
  %3116 = vmatprep.subr.mxu0 %v1903
  %3117 = vmatpush1.msra.mxu0 %v1902
  %3118 = vmatprep.subr.mxu0 %v1907
  %3119 = vmatpush1.msra.mxu0 %v1906
  %3120 = vmatprep.subr.mxu0 %v1911
  %3121 = vmatpush1.msra.mxu0 %v1910
  %3122 = vmatprep.subr.mxu0 %v1915
  %3123 = vmatpush1.msra.mxu0 %v1914
  %3124 = vmatprep.subr.mxu0 %v1919
  %3125 = vmatpush1.msra.mxu0 %v1918
  %3126 = vmatprep.subr.mxu0 0.0
  %3127 = vmatpush1.msra.mxu0 0.0
  %3128 = vmatprep.subr.mxu0 0.0
  %3129 = vmatpush1.msra.mxu0 0.0
  %3130 = vmatprep.subr.mxu0 0.0
  %3131 = vmatpush1.msra.mxu0 0.0
  %3132 = vmatprep.subr.mxu0 0.0
  %3133 = vmatpush1.msra.mxu0 0.0
  %3134 = vmatprep.subr.mxu0 0.0
  %3135 = vmatpush1.msra.mxu0 0.0
  %3136 = vmatprep.subr.mxu0 0.0
  %3137 = vmatpush1.msra.mxu0 0.0
  %3138 = vmatprep.subr.mxu0 0.0
  %3139 = vmatpush1.msra.mxu0 0.0
  %3140 = vmatprep.subr.mxu0 0.0
  %3141 = vmatpush1.msra.mxu0 0.0
  %3142 = vmatprep.subr.mxu0 0.0
  %3143 = vmatpush1.msra.mxu0 0.0
  %3144 = vmatprep.subr.mxu0 0.0
  %3145 = vmatpush1.msra.mxu0 0.0
  %3146 = vmatprep.subr.mxu0 0.0
  %3147 = vmatpush1.msra.mxu0 0.0
  %3148 = vmatprep.subr.mxu0 0.0
  %3149 = vmatpush1.msra.mxu0 0.0
  %3150 = vmatprep.subr.mxu0 0.0
  %3151 = vmatpush1.msra.mxu0 0.0
  %3152 = vmatprep.subr.mxu0 0.0
  %3153 = vmatpush1.msra.mxu0 0.0
  %3154 = vmatprep.subr.mxu0 0.0
  %3155 = vmatpush1.msra.mxu0 0.0
  %3156 = vmatprep.subr.mxu0 0.0
  %3157 = vmatpush1.msra.mxu0 0.0
  %3158 = vmatprep.mubr.f32.mxu0 0.0
  %3159 = vmatmul.mubr.f32.gmra.mrb[0].mxu0 %v3021
  %v3160 = vpop.f32.mrb[0].mxu0
  %v3161 = vadd.f32 0.0, %v3160
  %v3162 = vpop.f32.mrb[0].mxu0
  %v3163 = vadd.f32 0.0, %v3162
  %3164 = vdwg.mxu0
  %v3165 = vadd.f32 %v2039, %v3090
  %v3166 = vadd.f32 %v2041, %v3092
  %v3167 = vadd.f32 %v2152, %v3161
  %v3168 = vadd.f32 %v2154, %v3163
  %v3169 = vxor.u32 %v3165, 2147483648
  %v3170 = vmul.f32 %v3169, 1.442695
  %v3171 = vpow.pop %v3170
  %v3172 = vadd.f32 %v3171, 1.0
  %v3173 = vrcp.pop %v3172
  %v3174 = vmul.f32 1.0, %v3173
  %v3175 = vxor.u32 %v3166, 2147483648
  %v3176 = vmul.f32 %v3175, 1.442695
  %v3177 = vpow.pop %v3176
  %v3178 = vadd.f32 %v3177, 1.0
  %v3179 = vrcp.pop %v3178
  %v3180 = vmul.f32 1.0, %v3179
  %v3181 = vtanh.pop %v3167
  %v3182 = vxor.u32 %v3168, 2147483648
  %v3183 = vmul.f32 %v3182, 1.442695
  %v3184 = vpow.pop %v3183
  %v3185 = vadd.f32 %v3184, 1.0
  %v3186 = vrcp.pop %v3185
  %v3187 = vmul.f32 1.0, %v3186
  %v3188 = vmul.f32 %v3180, %v3019
  %v3189 = vmul.f32 %v3174, %v3181
  %v3190 = vadd.f32 %v3188, %v3189
  %v3191 = vtanh.pop %v3190
  %v3192 = vmul.f32 %v3187, %v3191
  %3193 = vst [vmem:[#allocation2 + $0x28] sm:$0xff] %v3192
  %3194 = vmatprep.subr.mxu0 %v1857
  %3195 = vmatpush1.msra.mxu0 %v1856
  %3196 = vmatprep.subr.mxu0 %v1861
  %3197 = vmatpush1.msra.mxu0 %v1860
  %3198 = vmatprep.subr.mxu0 %v1865
  %3199 = vmatpush1.msra.mxu0 %v1864
  %3200 = vmatprep.subr.mxu0 %v1869
  %3201 = vmatpush1.msra.mxu0 %v1868
  %3202 = vmatprep.subr.mxu0 %v1873
  %3203 = vmatpush1.msra.mxu0 %v1872
  %3204 = vmatprep.subr.mxu0 %v1877
  %3205 = vmatpush1.msra.mxu0 %v1876
  %3206 = vmatprep.subr.mxu0 %v1881
  %3207 = vmatpush1.msra.mxu0 %v1880
  %3208 = vmatprep.subr.mxu0 %v1885
  %3209 = vmatpush1.msra.mxu0 %v1884
  %3210 = vmatprep.subr.mxu0 %v1889
  %3211 = vmatpush1.msra.mxu0 %v1888
  %3212 = vmatprep.subr.mxu0 %v1893
  %3213 = vmatpush1.msra.mxu0 %v1892
  %3214 = vmatprep.subr.mxu0 %v1897
  %3215 = vmatpush1.msra.mxu0 %v1896
  %3216 = vmatprep.subr.mxu0 %v1901
  %3217 = vmatpush1.msra.mxu0 %v1900
  %3218 = vmatprep.subr.mxu0 %v1905
  %3219 = vmatpush1.msra.mxu0 %v1904
  %3220 = vmatprep.subr.mxu0 %v1909
  %3221 = vmatpush1.msra.mxu0 %v1908
  %3222 = vmatprep.subr.mxu0 %v1913
  %3223 = vmatpush1.msra.mxu0 %v1912
  %3224 = vmatprep.subr.mxu0 %v1917
  %3225 = vmatpush1.msra.mxu0 %v1916
  %3226 = vmatprep.subr.mxu0 0.0
  %3227 = vmatpush1.msra.mxu0 0.0
  %3228 = vmatprep.subr.mxu0 0.0
  %3229 = vmatpush1.msra.mxu0 0.0
  %3230 = vmatprep.subr.mxu0 0.0
  %3231 = vmatpush1.msra.mxu0 0.0
  %3232 = vmatprep.subr.mxu0 0.0
  %3233 = vmatpush1.msra.mxu0 0.0
  %3234 = vmatprep.subr.mxu0 0.0
  %3235 = vmatpush1.msra.mxu0 0.0
  %3236 = vmatprep.subr.mxu0 0.0
  %3237 = vmatpush1.msra.mxu0 0.0
  %3238 = vmatprep.subr.mxu0 0.0
  %3239 = vmatpush1.msra.mxu0 0.0
  %3240 = vmatprep.subr.mxu0 0.0
  %3241 = vmatpush1.msra.mxu0 0.0
  %3242 = vmatprep.subr.mxu0 0.0
  %3243 = vmatpush1.msra.mxu0 0.0
  %3244 = vmatprep.subr.mxu0 0.0
  %3245 = vmatpush1.msra.mxu0 0.0
  %3246 = vmatprep.subr.mxu0 0.0
  %3247 = vmatpush1.msra.mxu0 0.0
  %3248 = vmatprep.subr.mxu0 0.0
  %3249 = vmatpush1.msra.mxu0 0.0
  %3250 = vmatprep.subr.mxu0 0.0
  %3251 = vmatpush1.msra.mxu0 0.0
  %3252 = vmatprep.subr.mxu0 0.0
  %3253 = vmatpush1.msra.mxu0 0.0
  %3254 = vmatprep.subr.mxu0 0.0
  %3255 = vmatpush1.msra.mxu0 0.0
  %3256 = vmatprep.subr.mxu0 0.0
  %3257 = vmatpush1.msra.mxu0 0.0
  %3258 = vmatprep.mubr.f32.mxu0 0.0
  %3259 = vmatmul.mubr.f32.gmra.mrb[0].mxu0 %v3192
  %v3260 = vpop.f32.mrb[0].mxu0
  %v3261 = vadd.f32 0.0, %v3260
  %v3262 = vpop.f32.mrb[0].mxu0
  %v3263 = vadd.f32 0.0, %v3262
  %3264 = vdwg.mxu0
  %3265 = vmatprep.subr.mxu0 %v1859
  %3266 = vmatpush1.msra.mxu0 %v1858
  %3267 = vmatprep.subr.mxu0 %v1863
  %3268 = vmatpush1.msra.mxu0 %v1862
  %3269 = vmatprep.subr.mxu0 %v1867
  %3270 = vmatpush1.msra.mxu0 %v1866
  %3271 = vmatprep.subr.mxu0 %v1871
  %3272 = vmatpush1.msra.mxu0 %v1870
  %3273 = vmatprep.subr.mxu0 %v1875
  %3274 = vmatpush1.msra.mxu0 %v1874
  %3275 = vmatprep.subr.mxu0 %v1879
  %3276 = vmatpush1.msra.mxu0 %v1878
  %3277 = vmatprep.subr.mxu0 %v1883
  %3278 = vmatpush1.msra.mxu0 %v1882
  %3279 = vmatprep.subr.mxu0 %v1887
  %3280 = vmatpush1.msra.mxu0 %v1886
  %3281 = vmatprep.subr.mxu0 %v1891
  %3282 = vmatpush1.msra.mxu0 %v1890
  %3283 = vmatprep.subr.mxu0 %v1895
  %3284 = vmatpush1.msra.mxu0 %v1894
  %3285 = vmatprep.subr.mxu0 %v1899
  %3286 = vmatpush1.msra.mxu0 %v1898
  %3287 = vmatprep.subr.mxu0 %v1903
  %3288 = vmatpush1.msra.mxu0 %v1902
  %3289 = vmatprep.subr.mxu0 %v1907
  %3290 = vmatpush1.msra.mxu0 %v1906
  %3291 = vmatprep.subr.mxu0 %v1911
  %3292 = vmatpush1.msra.mxu0 %v1910
  %3293 = vmatprep.subr.mxu0 %v1915
  %3294 = vmatpush1.msra.mxu0 %v1914
  %3295 = vmatprep.subr.mxu0 %v1919
  %3296 = vmatpush1.msra.mxu0 %v1918
  %3297 = vmatprep.subr.mxu0 0.0
  %3298 = vmatpush1.msra.mxu0 0.0
  %3299 = vmatprep.subr.mxu0 0.0
  %3300 = vmatpush1.msra.mxu0 0.0
  %3301 = vmatprep.subr.mxu0 0.0
  %3302 = vmatpush1.msra.mxu0 0.0
  %3303 = vmatprep.subr.mxu0 0.0
  %3304 = vmatpush1.msra.mxu0 0.0
  %3305 = vmatprep.subr.mxu0 0.0
  %3306 = vmatpush1.msra.mxu0 0.0
  %3307 = vmatprep.subr.mxu0 0.0
  %3308 = vmatpush1.msra.mxu0 0.0
  %3309 = vmatprep.subr.mxu0 0.0
  %3310 = vmatpush1.msra.mxu0 0.0
  %3311 = vmatprep.subr.mxu0 0.0
  %3312 = vmatpush1.msra.mxu0 0.0
  %3313 = vmatprep.subr.mxu0 0.0
  %3314 = vmatpush1.msra.mxu0 0.0
  %3315 = vmatprep.subr.mxu0 0.0
  %3316 = vmatpush1.msra.mxu0 0.0
  %3317 = vmatprep.subr.mxu0 0.0
  %3318 = vmatpush1.msra.mxu0 0.0
  %3319 = vmatprep.subr.mxu0 0.0
  %3320 = vmatpush1.msra.mxu0 0.0
  %3321 = vmatprep.subr.mxu0 0.0
  %3322 = vmatpush1.msra.mxu0 0.0
  %3323 = vmatprep.subr.mxu0 0.0
  %3324 = vmatpush1.msra.mxu0 0.0
  %3325 = vmatprep.subr.mxu0 0.0
  %3326 = vmatpush1.msra.mxu0 0.0
  %3327 = vmatprep.subr.mxu0 0.0
  %3328 = vmatpush1.msra.mxu0 0.0
  %3329 = vmatprep.mubr.f32.mxu0 0.0
  %3330 = vmatmul.mubr.f32.gmra.mrb[0].mxu0 %v3192
  %v3331 = vpop.f32.mrb[0].mxu0
  %v3332 = vadd.f32 0.0, %v3331
  %v3333 = vpop.f32.mrb[0].mxu0
  %v3334 = vadd.f32 0.0, %v3333
  %3335 = vdwg.mxu0
  %v3336 = vadd.f32 %v2045, %v3261
  %v3337 = vadd.f32 %v2047, %v3263
  %v3338 = vadd.f32 %v2158, %v3332
  %v3339 = vadd.f32 %v2160, %v3334
  %v3340 = vxor.u32 %v3336, 2147483648
  %v3341 = vmul.f32 %v3340, 1.442695
  %v3342 = vpow.pop %v3341
  %v3343 = vadd.f32 %v3342, 1.0
  %v3344 = vrcp.pop %v3343
  %v3345 = vmul.f32 1.0, %v3344
  %v3346 = vxor.u32 %v3337, 2147483648
  %v3347 = vmul.f32 %v3346, 1.442695
  %v3348 = vpow.pop %v3347
  %v3349 = vadd.f32 %v3348, 1.0
  %v3350 = vrcp.pop %v3349
  %v3351 = vmul.f32 1.0, %v3350
  %v3352 = vtanh.pop %v3338
  %v3353 = vxor.u32 %v3339, 2147483648
  %v3354 = vmul.f32 %v3353, 1.442695
  %v3355 = vpow.pop %v3354
  %v3356 = vadd.f32 %v3355, 1.0
  %v3357 = vrcp.pop %v3356
  %v3358 = vmul.f32 1.0, %v3357
  %v3359 = vmul.f32 %v3351, %v3190
  %v3360 = vmul.f32 %v3345, %v3352
  %v3361 = vadd.f32 %v3359, %v3360
  %v3362 = vtanh.pop %v3361
  %v3363 = vmul.f32 %v3358, %v3362
  %3364 = vst [vmem:[#allocation2 + $0x30] sm:$0xff] %v3363
  %3365 = vmatprep.subr.mxu0 %v1857
  %3366 = vmatpush1.msra.mxu0 %v1856
  %3367 = vmatprep.subr.mxu0 %v1861
  %3368 = vmatpush1.msra.mxu0 %v1860
  %3369 = vmatprep.subr.mxu0 %v1865
  %3370 = vmatpush1.msra.mxu0 %v1864
  %3371 = vmatprep.subr.mxu0 %v1869
  %3372 = vmatpush1.msra.mxu0 %v1868
  %3373 = vmatprep.subr.mxu0 %v1873
  %3374 = vmatpush1.msra.mxu0 %v1872
  %3375 = vmatprep.subr.mxu0 %v1877
  %3376 = vmatpush1.msra.mxu0 %v1876
  %3377 = vmatprep.subr.mxu0 %v1881
  %3378 = vmatpush1.msra.mxu0 %v1880
  %3379 = vmatprep.subr.mxu0 %v1885
  %3380 = vmatpush1.msra.mxu0 %v1884
  %3381 = vmatprep.subr.mxu0 %v1889
  %3382 = vmatpush1.msra.mxu0 %v1888
  %3383 = vmatprep.subr.mxu0 %v1893
  %3384 = vmatpush1.msra.mxu0 %v1892
  %3385 = vmatprep.subr.mxu0 %v1897
  %3386 = vmatpush1.msra.mxu0 %v1896
  %3387 = vmatprep.subr.mxu0 %v1901
  %3388 = vmatpush1.msra.mxu0 %v1900
  %3389 = vmatprep.subr.mxu0 %v1905
  %3390 = vmatpush1.msra.mxu0 %v1904
  %3391 = vmatprep.subr.mxu0 %v1909
  %3392 = vmatpush1.msra.mxu0 %v1908
  %3393 = vmatprep.subr.mxu0 %v1913
  %3394 = vmatpush1.msra.mxu0 %v1912
  %3395 = vmatprep.subr.mxu0 %v1917
  %3396 = vmatpush1.msra.mxu0 %v1916
  %3397 = vmatprep.subr.mxu0 0.0
  %3398 = vmatpush1.msra.mxu0 0.0
  %3399 = vmatprep.subr.mxu0 0.0
  %3400 = vmatpush1.msra.mxu0 0.0
  %3401 = vmatprep.subr.mxu0 0.0
  %3402 = vmatpush1.msra.mxu0 0.0
  %3403 = vmatprep.subr.mxu0 0.0
  %3404 = vmatpush1.msra.mxu0 0.0
  %3405 = vmatprep.subr.mxu0 0.0
  %3406 = vmatpush1.msra.mxu0 0.0
  %3407 = vmatprep.subr.mxu0 0.0
  %3408 = vmatpush1.msra.mxu0 0.0
  %3409 = vmatprep.subr.mxu0 0.0
  %3410 = vmatpush1.msra.mxu0 0.0
  %3411 = vmatprep.subr.mxu0 0.0
  %3412 = vmatpush1.msra.mxu0 0.0
  %3413 = vmatprep.subr.mxu0 0.0
  %3414 = vmatpush1.msra.mxu0 0.0
  %3415 = vmatprep.subr.mxu0 0.0
  %3416 = vmatpush1.msra.mxu0 0.0
  %3417 = vmatprep.subr.mxu0 0.0
  %3418 = vmatpush1.msra.mxu0 0.0
  %3419 = vmatprep.subr.mxu0 0.0
  %3420 = vmatpush1.msra.mxu0 0.0
  %3421 = vmatprep.subr.mxu0 0.0
  %3422 = vmatpush1.msra.mxu0 0.0
  %3423 = vmatprep.subr.mxu0 0.0
  %3424 = vmatpush1.msra.mxu0 0.0
  %3425 = vmatprep.subr.mxu0 0.0
  %3426 = vmatpush1.msra.mxu0 0.0
  %3427 = vmatprep.subr.mxu0 0.0
  %3428 = vmatpush1.msra.mxu0 0.0
  %3429 = vmatprep.mubr.f32.mxu0 0.0
  %3430 = vmatmul.mubr.f32.gmra.mrb[0].mxu0 %v3363
  %v3431 = vpop.f32.mrb[0].mxu0
  %v3432 = vadd.f32 0.0, %v3431
  %v3433 = vpop.f32.mrb[0].mxu0
  %v3434 = vadd.f32 0.0, %v3433
  %3435 = vdwg.mxu0
  %3436 = vmatprep.subr.mxu0 %v1859
  %3437 = vmatpush1.msra.mxu0 %v1858
  %3438 = vmatprep.subr.mxu0 %v1863
  %3439 = vmatpush1.msra.mxu0 %v1862
  %3440 = vmatprep.subr.mxu0 %v1867
  %3441 = vmatpush1.msra.mxu0 %v1866
  %3442 = vmatprep.subr.mxu0 %v1871
  %3443 = vmatpush1.msra.mxu0 %v1870
  %3444 = vmatprep.subr.mxu0 %v1875
  %3445 = vmatpush1.msra.mxu0 %v1874
  %3446 = vmatprep.subr.mxu0 %v1879
  %3447 = vmatpush1.msra.mxu0 %v1878
  %3448 = vmatprep.subr.mxu0 %v1883
  %3449 = vmatpush1.msra.mxu0 %v1882
  %3450 = vmatprep.subr.mxu0 %v1887
  %3451 = vmatpush1.msra.mxu0 %v1886
  %3452 = vmatprep.subr.mxu0 %v1891
  %3453 = vmatpush1.msra.mxu0 %v1890
  %3454 = vmatprep.subr.mxu0 %v1895
  %3455 = vmatpush1.msra.mxu0 %v1894
  %3456 = vmatprep.subr.mxu0 %v1899
  %3457 = vmatpush1.msra.mxu0 %v1898
  %3458 = vmatprep.subr.mxu0 %v1903
  %3459 = vmatpush1.msra.mxu0 %v1902
  %3460 = vmatprep.subr.mxu0 %v1907
  %3461 = vmatpush1.msra.mxu0 %v1906
  %3462 = vmatprep.subr.mxu0 %v1911
  %3463 = vmatpush1.msra.mxu0 %v1910
  %3464 = vmatprep.subr.mxu0 %v1915
  %3465 = vmatpush1.msra.mxu0 %v1914
  %3466 = vmatprep.subr.mxu0 %v1919
  %3467 = vmatpush1.msra.mxu0 %v1918
  %3468 = vmatprep.subr.mxu0 0.0
  %3469 = vmatpush1.msra.mxu0 0.0
  %3470 = vmatprep.subr.mxu0 0.0
  %3471 = vmatpush1.msra.mxu0 0.0
  %3472 = vmatprep.subr.mxu0 0.0
  %3473 = vmatpush1.msra.mxu0 0.0
  %3474 = vmatprep.subr.mxu0 0.0
  %3475 = vmatpush1.msra.mxu0 0.0
  %3476 = vmatprep.subr.mxu0 0.0
  %3477 = vmatpush1.msra.mxu0 0.0
  %3478 = vmatprep.subr.mxu0 0.0
  %3479 = vmatpush1.msra.mxu0 0.0
  %3480 = vmatprep.subr.mxu0 0.0
  %3481 = vmatpush1.msra.mxu0 0.0
  %3482 = vmatprep.subr.mxu0 0.0
  %3483 = vmatpush1.msra.mxu0 0.0
  %3484 = vmatprep.subr.mxu0 0.0
  %3485 = vmatpush1.msra.mxu0 0.0
  %3486 = vmatprep.subr.mxu0 0.0
  %3487 = vmatpush1.msra.mxu0 0.0
  %3488 = vmatprep.subr.mxu0 0.0
  %3489 = vmatpush1.msra.mxu0 0.0
  %3490 = vmatprep.subr.mxu0 0.0
  %3491 = vmatpush1.msra.mxu0 0.0
  %3492 = vmatprep.subr.mxu0 0.0
  %3493 = vmatpush1.msra.mxu0 0.0
  %3494 = vmatprep.subr.mxu0 0.0
  %3495 = vmatpush1.msra.mxu0 0.0
  %3496 = vmatprep.subr.mxu0 0.0
  %3497 = vmatpush1.msra.mxu0 0.0
  %3498 = vmatprep.subr.mxu0 0.0
  %3499 = vmatpush1.msra.mxu0 0.0
  %3500 = vmatprep.mubr.f32.mxu0 0.0
  %3501 = vmatmul.mubr.f32.gmra.mrb[0].mxu0 %v3363
  %v3502 = vpop.f32.mrb[0].mxu0
  %v3503 = vadd.f32 0.0, %v3502
  %v3504 = vpop.f32.mrb[0].mxu0
  %v3505 = vadd.f32 0.0, %v3504
  %3506 = vdwg.mxu0
  %v3507 = vadd.f32 %v2051, %v3432
  %v3508 = vadd.f32 %v2053, %v3434
  %v3509 = vadd.f32 %v2164, %v3503
  %v3510 = vadd.f32 %v2166, %v3505
  %v3511 = vxor.u32 %v3507, 2147483648
  %v3512 = vmul.f32 %v3511, 1.442695
  %v3513 = vpow.pop %v3512
  %v3514 = vadd.f32 %v3513, 1.0
  %v3515 = vrcp.pop %v3514
  %v3516 = vmul.f32 1.0, %v3515
  %v3517 = vxor.u32 %v3508, 2147483648
  %v3518 = vmul.f32 %v3517, 1.442695
  %v3519 = vpow.pop %v3518
  %v3520 = vadd.f32 %v3519, 1.0
  %v3521 = vrcp.pop %v3520
  %v3522 = vmul.f32 1.0, %v3521
  %v3523 = vtanh.pop %v3509
  %v3524 = vxor.u32 %v3510, 2147483648
  %v3525 = vmul.f32 %v3524, 1.442695
  %v3526 = vpow.pop %v3525
  %v3527 = vadd.f32 %v3526, 1.0
  %v3528 = vrcp.pop %v3527
  %v3529 = vmul.f32 1.0, %v3528
  %v3530 = vmul.f32 %v3522, %v3361
  %v3531 = vmul.f32 %v3516, %v3523
  %v3532 = vadd.f32 %v3530, %v3531
  %v3533 = vtanh.pop %v3532
  %v3534 = vmul.f32 %v3529, %v3533
  %3535 = vst [vmem:[#allocation2 + $0x38] sm:$0xff] %v3534
  %v3536 = vld [vmem:[#allocation2] sm:$0xff]
  %v3537 = vld [vmem:[#allocation2 + $0x8] sm:$0xff]
  %v3538 = vld [vmem:[#allocation2 + $0x10] sm:$0xff]
  %v3539 = vld [vmem:[#allocation2 + $0x18] sm:$0xff]
  %v3540 = vld [vmem:[#allocation2 + $0x20] sm:$0xff]
  %v3541 = vld [vmem:[#allocation2 + $0x28] sm:$0xff]
  %v3542 = vld [vmem:[#allocation2 + $0x30] sm:$0xff]
  %v3543 = vld [vmem:[#allocation2 + $0x38] sm:$0xff]
  %v3544 = vld [vmem:[%s7] sm:$0xff]
  %v3545 = vld [vmem:[%s7 + $0x8] sm:$0xff]
  %v3546 = vld [vmem:[%s7 + $0x10] sm:$0xff]
  %v3547 = vld [vmem:[%s7 + $0x18] sm:$0xff]
  %v3548 = vld [vmem:[%s7 + $0x20] sm:$0xff]
  %v3549 = vld [vmem:[%s7 + $0x28] sm:$0xff]
  %v3550 = vld [vmem:[%s7 + $0x30] sm:$0xff]
  %v3551 = vld [vmem:[%s7 + $0x38] sm:$0xff]
  %v3552 = vld [vmem:[%s7 + $0x40] sm:$0xff]
  %v3553 = vld [vmem:[%s7 + $0x48] sm:$0xff]
  %v3554 = vld [vmem:[%s7 + $0x50] sm:$0xff]
  %v3555 = vld [vmem:[%s7 + $0x58] sm:$0xff]
  %v3556 = vld [vmem:[%s7 + $0x60] sm:$0xff]
  %v3557 = vld [vmem:[%s7 + $0x68] sm:$0xff]
  %v3558 = vld [vmem:[%s7 + $0x70] sm:$0xff]
  %v3559 = vld [vmem:[%s7 + $0x78] sm:$0xff]
  %v3560 = vld [vmem:[%s8] sm:$0x1]
  %v3562 = vlaneseq
  %v3563 = vshrl.u32 %v3562, 7
  %v3564 = vsub.s32 0, %v3563
  %v3565 = vrot.slane %v3560, %v3564
  %3567 = vmatprep.subr.mxu0 0.0
  %3568 = vmatpush1.msra.mxu0 %v3544
  %3569 = vmatprep.subr.mxu0 0.0
  %3570 = vmatpush1.msra.mxu0 %v3545
  %3571 = vmatprep.subr.mxu0 0.0
  %3572 = vmatpush1.msra.mxu0 %v3546
  %3573 = vmatprep.subr.mxu0 0.0
  %3574 = vmatpush1.msra.mxu0 %v3547
  %3575 = vmatprep.subr.mxu0 0.0
  %3576 = vmatpush1.msra.mxu0 %v3548
  %3577 = vmatprep.subr.mxu0 0.0
  %3578 = vmatpush1.msra.mxu0 %v3549
  %3579 = vmatprep.subr.mxu0 0.0
  %3580 = vmatpush1.msra.mxu0 %v3550
  %3581 = vmatprep.subr.mxu0 0.0
  %3582 = vmatpush1.msra.mxu0 %v3551
  %3583 = vmatprep.subr.mxu0 0.0
  %3584 = vmatpush1.msra.mxu0 %v3552
  %3585 = vmatprep.subr.mxu0 0.0
  %3586 = vmatpush1.msra.mxu0 %v3553
  %3587 = vmatprep.subr.mxu0 0.0
  %3588 = vmatpush1.msra.mxu0 %v3554
  %3589 = vmatprep.subr.mxu0 0.0
  %3590 = vmatpush1.msra.mxu0 %v3555
  %3591 = vmatprep.subr.mxu0 0.0
  %3592 = vmatpush1.msra.mxu0 %v3556
  %3593 = vmatprep.subr.mxu0 0.0
  %3594 = vmatpush1.msra.mxu0 %v3557
  %3595 = vmatprep.subr.mxu0 0.0
  %3596 = vmatpush1.msra.mxu0 %v3558
  %3597 = vmatprep.subr.mxu0 0.0
  %3598 = vmatpush1.msra.mxu0 %v3559
  %3599 = vmatprep.subr.mxu0 0.0
  %3600 = vmatpush1.msra.mxu0 0.0
  %3601 = vmatprep.subr.mxu0 0.0
  %3602 = vmatpush1.msra.mxu0 0.0
  %3603 = vmatprep.subr.mxu0 0.0
  %3604 = vmatpush1.msra.mxu0 0.0
  %3605 = vmatprep.subr.mxu0 0.0
  %3606 = vmatpush1.msra.mxu0 0.0
  %3607 = vmatprep.subr.mxu0 0.0
  %3608 = vmatpush1.msra.mxu0 0.0
  %3609 = vmatprep.subr.mxu0 0.0
  %3610 = vmatpush1.msra.mxu0 0.0
  %3611 = vmatprep.subr.mxu0 0.0
  %3612 = vmatpush1.msra.mxu0 0.0
  %3613 = vmatprep.subr.mxu0 0.0
  %3614 = vmatpush1.msra.mxu0 0.0
  %3615 = vmatprep.subr.mxu0 0.0
  %3616 = vmatpush1.msra.mxu0 0.0
  %3617 = vmatprep.subr.mxu0 0.0
  %3618 = vmatpush1.msra.mxu0 0.0
  %3619 = vmatprep.subr.mxu0 0.0
  %3620 = vmatpush1.msra.mxu0 0.0
  %3621 = vmatprep.subr.mxu0 0.0
  %3622 = vmatpush1.msra.mxu0 0.0
  %3623 = vmatprep.subr.mxu0 0.0
  %3624 = vmatpush1.msra.mxu0 0.0
  %3625 = vmatprep.subr.mxu0 0.0
  %3626 = vmatpush1.msra.mxu0 0.0
  %3627 = vmatprep.subr.mxu0 0.0
  %3628 = vmatpush1.msra.mxu0 0.0
  %3629 = vmatprep.subr.mxu0 0.0
  %3630 = vmatpush1.msra.mxu0 0.0
  %3631 = vmatprep.mubr.f32.mxu0 0.0
  %3632 = vmatmul.mubr.f32.gmra.mrb[0].mxu0 %v3536
  %v3633 = vpop.f32.mrb[0].mxu0
  %v3634 = vadd.f32 %v3565, %v3633
  %v3635 = vpop.f32.mrb[0].mxu0
  %3636 = vmatprep.mubr.f32.mxu0 0.0
  %3637 = vmatmul.mubr.f32.gmra.mrb[0].mxu0 %v3537
  %v3638 = vpop.f32.mrb[0].mxu0
  %v3639 = vadd.f32 %v3565, %v3638
  %v3640 = vpop.f32.mrb[0].mxu0
  %3641 = vmatprep.mubr.f32.mxu0 0.0
  %3642 = vmatmul.mubr.f32.gmra.mrb[0].mxu0 %v3538
  %v3643 = vpop.f32.mrb[0].mxu0
  %v3644 = vadd.f32 %v3565, %v3643
  %v3645 = vpop.f32.mrb[0].mxu0
  %3646 = vmatprep.mubr.f32.mxu0 0.0
  %3647 = vmatmul.mubr.f32.gmra.mrb[0].mxu0 %v3539
  %v3648 = vpop.f32.mrb[0].mxu0
  %v3649 = vadd.f32 %v3565, %v3648
  %v3650 = vpop.f32.mrb[0].mxu0
  %3651 = vmatprep.mubr.f32.mxu0 0.0
  %3652 = vmatmul.mubr.f32.gmra.mrb[0].mxu0 %v3540
  %v3653 = vpop.f32.mrb[0].mxu0
  %v3654 = vadd.f32 %v3565, %v3653
  %v3655 = vpop.f32.mrb[0].mxu0
  %3656 = vmatprep.mubr.f32.mxu0 0.0
  %3657 = vmatmul.mubr.f32.gmra.mrb[0].mxu0 %v3541
  %v3658 = vpop.f32.mrb[0].mxu0
  %v3659 = vadd.f32 %v3565, %v3658
  %v3660 = vpop.f32.mrb[0].mxu0
  %3661 = vmatprep.mubr.f32.mxu0 0.0
  %3662 = vmatmul.mubr.f32.gmra.mrb[0].mxu0 %v3542
  %v3663 = vpop.f32.mrb[0].mxu0
  %v3664 = vadd.f32 %v3565, %v3663
  %v3665 = vpop.f32.mrb[0].mxu0
  %3666 = vmatprep.mubr.f32.mxu0 0.0
  %3667 = vmatmul.mubr.f32.gmra.mrb[0].mxu0 %v3543
  %v3668 = vpop.f32.mrb[0].mxu0
  %v3669 = vadd.f32 %v3565, %v3668
  %v3670 = vpop.f32.mrb[0].mxu0
  %3671 = vdwg.mxu0
  %vm3672 = vcmask 39936
  %3673 = vst.msk [vmem:[%s9] sm:$0xff] %vm3672, %v3634
  %3674 = vst.msk [vmem:[%s9 + $0x8] sm:$0xff] %vm3672, %v3639
  %3675 = vst.msk [vmem:[%s9 + $0x10] sm:$0xff] %vm3672, %v3644
  %3676 = vst.msk [vmem:[%s9 + $0x18] sm:$0xff] %vm3672, %v3649
  %3677 = vst.msk [vmem:[%s9 + $0x20] sm:$0xff] %vm3672, %v3654
  %3678 = vst.msk [vmem:[%s9 + $0x28] sm:$0xff] %vm3672, %v3659
  %3679 = vst.msk [vmem:[%s9 + $0x30] sm:$0xff] %vm3672, %v3664
  %3680 = vst.msk [vmem:[%s9 + $0x38] sm:$0xff] %vm3672, %v3669
  // Predicated region
  $region38: #{lstm_w_classifier_forward.1} parent=0 // pred_check
    _
  $region39: #{lstm_w_classifier_forward.1} parent=0 // pred_check_branch
    %3682 = sbr.rel (0) target = $region41
  $region40: #{lstm_w_classifier_forward.1} parent=0 // pred_region
    _
  $region41: #{lstm_w_classifier_forward.1} parent=0 // pred_fallthru
    _
  // Predicated region
  $region42: #{lstm_w_classifier_forward.1} parent=0 // pred_check
    _
  $region43: #{lstm_w_classifier_forward.1} parent=0 // pred_check_branch
    %3684 = sbr.rel (0) target = $region45
  $region44: #{lstm_w_classifier_forward.1} parent=0 // pred_region
    _
  $region45: #{lstm_w_classifier_forward.1} parent=0 // pred_fallthru
    _

</llo_original>
